<compile_context>
chip_gen: v7x
topology: tpu7x:2x2x1
jax: 0.10.0
libtpu: 0.0.40
codegen_flags: <defaults>
</compile_context>

<pallas_src>
import jax
import jax.numpy as jnp
import numpy as np
from jax.experimental import pallas as pl
from jax.experimental.pallas import tpu as pltpu

LANE = 128            # each per-branch gate block is padded to a full 128-lane vreg
STOP_BIAS = 30.0      # sigmoid(x + 30) == 1.0 exactly in f32 -> frozen GRU step


# ----------------------------------------------------------------------------
# Fused kernel: input projections + merged (text+audio) GRU recurrence + fc.
# ----------------------------------------------------------------------------
def mdre_fused_kernel(len_ref, xt_ref, xa_ref,
                      wi_t_ref, wi_a_ref, bias_ref,
                      wh_ref, bhn_ref, wfc_ref, bfc_ref,
                      out_ref, gi_ref):
    """All arrays are whole-array VMEM blocks (no grid).

    len_ref : (B, 1)  int32   sequence lengths (shared by both branches)
    xt_ref  : (T, B, E)       text embeddings, time-major
    xa_ref  : (T, B, Da)      audio features, time-major
    wi_*    : (E|Da, G)       input->gates weights, G = 3*Hc, Hc = 2*LANE,
                              gate layout [r_t r_a | z_t z_a | n_t n_a]
    bias_ref: (1, G)          b_ih (all gates) + b_hh (r,z) pre-folded
    wh_ref  : (Hc, G)         block-diagonal hidden->gates weights (both branches)
    bhn_ref : (1, Hc)         b_hh of the n gate (must stay inside r*(...))
    wfc_ref : (Hc, O), bfc_ref: (1, O)   fused concat-fc
    out_ref : (B, O)
    gi_ref  : (T, B, G)       VMEM scratch for precomputed gate inputs
    """
    T, B, E = xt_ref.shape
    Da = xa_ref.shape[-1]
    G = gi_ref.shape[-1]
    Hc = G // 3

    # ---------------- prologue: hoisted input projections (both branches) ----
    # One flattened (T*B, .) matmul per branch, written straight into the
    # time-major scratch; the recurrence below only indexes the time axis.
    xt = xt_ref[...].reshape(T * B, E)
    xa = xa_ref[...].reshape(T * B, Da)
    gi = (jnp.dot(xt, wi_t_ref[...], preferred_element_type=jnp.float32)
          + jnp.dot(xa, wi_a_ref[...], preferred_element_type=jnp.float32)
          + bias_ref[...])
    gi_ref[...] = gi.reshape(T, B, G)

    # ---------------- length masking, hoisted out of the loop ----------------
    # Packed-sequence "last hidden" semantics: for t >= length force z == 1 so
    # h_new == h.  sigmoid(x + 30) rounds to exactly 1.0 in f32 (any lowering),
    # so frozen steps are exact and the loop body carries no mask work at all.
    t_iota = jax.lax.broadcasted_iota(jnp.int32, (T, B, 1), 0)
    stop = (t_iota >= len_ref[...]).astype(jnp.float32) * STOP_BIAS   # (T, B, 1)
    gi_ref[:, :, Hc:2 * Hc] = gi_ref[:, :, Hc:2 * Hc] + stop

    # ---------------- merged recurrence: text + audio in one serial chain ----
    wh = wh_ref[...]          # (Hc, G) block-diagonal
    bhn = bhn_ref[...]        # (1, Hc)

    # TODO(synk): hold the stationary (Hc, G) RHS in the MXU across the unrolled
    #             loop via pltpu.matmul_push_rhs / matmul_acc_lhs / matmul_pop
    #             instead of re-pushing it each step; left to Mosaic here.
    def step(t, h):
        gi_t = gi_ref[t]                                              # (B, G)
        gh = jnp.dot(h, wh, preferred_element_type=jnp.float32)       # (B, G)
        r = jax.nn.sigmoid(gi_t[:, 0:Hc] + gh[:, 0:Hc])
        z = jax.nn.sigmoid(gi_t[:, Hc:2 * Hc] + gh[:, Hc:2 * Hc])
        n = jnp.tanh(gi_t[:, 2 * Hc:] + r * (gh[:, 2 * Hc:] + bhn))
        return (1.0 - z) * n + z * h

    h = jax.lax.fori_loop(0, T, step, jnp.zeros((B, Hc), jnp.float32),
                          unroll=True)

    # ---------------- FUSION_TEHNIQUE == 'concat'  ->  one fc matmul ---------
    out_ref[...] = (jnp.dot(h, wfc_ref[...], preferred_element_type=jnp.float32)
                    + bfc_ref[...])


# ----------------------------------------------------------------------------
# Forward wrapper: only the embedding gather + tiny transposes stay in XLA.
# ----------------------------------------------------------------------------
def encoder_mdre_forward(params, text_inputs, audio_inputs, lengths):
    """text_inputs: (B, T) int32 ids; audio_inputs: (B, T, D_audio) f32;
    lengths: (B,) int32.  Returns logits (B, output_size) f32."""
    p = params
    B, T = text_inputs.shape
    # Embedding lookup (gather) stays in XLA; gathering on the transposed ids
    # produces the embeddings directly time-major (no float transpose pass).
    emb_tbe = jnp.take(p["embed"], text_inputs.T.astype(jnp.int32), axis=0)
    aud_tbd = jnp.transpose(audio_inputs.astype(jnp.float32), (1, 0, 2))
    G = p["wh"].shape[1]
    O = p["wfc"].shape[1]

    # Single no-grid call; everything fits VMEM at these shapes.
    # TODO(synk): before scaling B/T/H add a time-axis grid ("arbitrary") or
    #             pltpu.emit_pipeline over T and set vmem_limit_bytes explicitly
    #             (v7x's 64 MiB VMEM is hit first by the (T, B, G) scratch).
    return pl.pallas_call(
        mdre_fused_kernel,
        out_shape=jax.ShapeDtypeStruct((B, O), jnp.float32),
        scratch_shapes=[pltpu.VMEM((T, B, G), jnp.float32)],
    )(lengths.reshape(B, 1).astype(jnp.int32),
      emb_tbe, aud_tbd,
      p["wi_text"], p["wi_audio"], p["bias"],
      p["wh"], p["bhn"], p["wfc"], p["bfc"])


# ----------------------------------------------------------------------------
# Raw per-gate parameter construction and packing into the fused layout.
# ----------------------------------------------------------------------------
def make_gru_params(key, d_in, hidden):
    k = jax.random.split(key, 4)
    scale = 0.1
    wi = scale * jax.random.normal(k[0], (3, d_in, hidden), jnp.float32)
    wh = scale * jax.random.normal(k[1], (3, hidden, hidden), jnp.float32)
    bi = scale * jax.random.normal(k[2], (3, hidden), jnp.float32)
    bh = scale * jax.random.normal(k[3], (3, hidden), jnp.float32)
    return wi, wh, bi, bh


def pack_mdre_params(embed, gru_text_raw, gru_audio_raw, fc_w, fc_b, hp=LANE):
    """Pack both branches into the merged, lane-padded layout.

    Gate layout (G = 3*Hc lanes, Hc = 2*hp): [ r_text r_audio | z_t z_a | n_t n_a ],
    each per-branch block padded to a full 128-lane group.  W_hh is block-diagonal
    so the two recurrences stay mathematically independent inside one matmul.
    """
    wi_t, wh_t, bi_t, bh_t = gru_text_raw
    wi_a, wh_a, bi_a, bh_a = gru_audio_raw
    E, Ht = wi_t.shape[1], wi_t.shape[2]
    Da, Ha = wi_a.shape[1], wi_a.shape[2]
    Hc, G = 2 * hp, 6 * hp
    O = fc_w.shape[1]

    wi_text = jnp.zeros((E, G), jnp.float32)
    wi_audio = jnp.zeros((Da, G), jnp.float32)
    wh = jnp.zeros((Hc, G), jnp.float32)
    bias = jnp.zeros((1, G), jnp.float32)
    for g in range(3):
        ct = g * Hc           # text lane block inside gate g
        ca = g * Hc + hp      # audio lane block inside gate g
        wi_text = wi_text.at[:, ct:ct + Ht].set(wi_t[g])
        wi_audio = wi_audio.at[:, ca:ca + Ha].set(wi_a[g])
        wh = wh.at[:Ht, ct:ct + Ht].set(wh_t[g])
        wh = wh.at[hp:hp + Ha, ca:ca + Ha].set(wh_a[g])
        # Fold b_ih (all gates) + b_hh (r, z) into the input bias; b_hh of the
        # n gate must stay inside r * (W_hn h + b_hn).
        bias = bias.at[0, ct:ct + Ht].set(bi_t[g] + (bh_t[g] if g < 2 else 0.0))
        bias = bias.at[0, ca:ca + Ha].set(bi_a[g] + (bh_a[g] if g < 2 else 0.0))
    bhn = (jnp.zeros((1, Hc), jnp.float32)
           .at[0, :Ht].set(bh_t[2]).at[0, hp:hp + Ha].set(bh_a[2]))
    wfc = (jnp.zeros((Hc, O), jnp.float32)
           .at[:Ht].set(fc_w[:Ht]).at[hp:hp + Ha].set(fc_w[Ht:Ht + Ha]))
    return {
        "embed": embed.astype(jnp.float32),
        "wi_text": wi_text, "wi_audio": wi_audio, "bias": bias,
        "wh": wh, "bhn": bhn, "wfc": wfc,
        "bfc": fc_b.reshape(1, O).astype(jnp.float32),
    }


# ----------------------------------------------------------------------------
# Pure-JAX reference (raw, unpadded parameters) for correctness checking.
# ----------------------------------------------------------------------------
def gru_reference(x_tbd, lengths, wi, wh, bi, bh):
    T, B, _ = x_tbd.shape
    H = wh.shape[-1]
    hp = jax.lax.Precision.HIGHEST

    def step(h, inp):
        x_t, t = inp
        r = jax.nn.sigmoid(jnp.dot(x_t, wi[0], precision=hp) + bi[0]
                           + jnp.dot(h, wh[0], precision=hp) + bh[0])
        z = jax.nn.sigmoid(jnp.dot(x_t, wi[1], precision=hp) + bi[1]
                           + jnp.dot(h, wh[1], precision=hp) + bh[1])
        n = jnp.tanh(jnp.dot(x_t, wi[2], precision=hp) + bi[2]
                     + r * (jnp.dot(h, wh[2], precision=hp) + bh[2]))
        h_new = (1.0 - z) * n + z * h
        mask = lengths[:, None] > t
        return jnp.where(mask, h_new, h), None

    h0 = jnp.zeros((B, H), jnp.float32)
    h_last, _ = jax.lax.scan(step, h0, (x_tbd, jnp.arange(T, dtype=jnp.int32)))
    return h_last


def reference_forward(embed, gru_text, gru_audio, fc_w, fc_b,
                      text_inputs, audio_inputs, lengths):
    emb = jnp.take(embed, text_inputs, axis=0).astype(jnp.float32)
    h_text = gru_reference(jnp.transpose(emb, (1, 0, 2)), lengths, *gru_text)
    h_audio = gru_reference(jnp.transpose(audio_inputs.astype(jnp.float32),
                                          (1, 0, 2)), lengths, *gru_audio)
    comb = jnp.concatenate([h_text, h_audio], axis=1)
    return jnp.dot(comb, fc_w, precision=jax.lax.Precision.HIGHEST) + fc_b


if __name__ == "__main__":
    # Small, module-consistent shapes.
    B = 8                      # batch
    T = 8                      # sequence length (shared by text / audio)
    dic_size = 50              # vocab
    embed_dim = 32             # use_glove=False -> synthetic embedding table
    encoder_size_audio = 16    # audio feature dim per frame
    hidden_dim_text = 32
    hidden_dim_audio = 32
    output_size = 4

    key = jax.random.PRNGKey(0)
    (k_emb, k_gt, k_ga, k_fc, k_fb, k_txt, k_aud, k_len) = jax.random.split(key, 8)

    embed = 0.1 * jax.random.normal(k_emb, (dic_size, embed_dim), jnp.float32)
    gru_text_raw = make_gru_params(k_gt, embed_dim, hidden_dim_text)
    gru_audio_raw = make_gru_params(k_ga, encoder_size_audio, hidden_dim_audio)
    fc_w = 0.1 * jax.random.normal(
        k_fc, (hidden_dim_text + hidden_dim_audio, output_size), jnp.float32)
    fc_b = 0.1 * jax.random.normal(k_fb, (output_size,), jnp.float32)

    params = pack_mdre_params(embed, gru_text_raw, gru_audio_raw, fc_w, fc_b)

    text_inputs = jax.random.randint(k_txt, (B, T), 0, dic_size, dtype=jnp.int32)
    audio_inputs = jax.random.normal(k_aud, (B, T, encoder_size_audio), jnp.float32)
    lengths = jax.random.randint(k_len, (B,), 1, T + 1, dtype=jnp.int32)

    logits = jax.block_until_ready(
        jax.jit(encoder_mdre_forward)(params, text_inputs, audio_inputs, lengths))

    ref = jax.block_until_ready(
        reference_forward(embed, gru_text_raw, gru_audio_raw, fc_w, fc_b,
                          text_inputs, audio_inputs, lengths))

    # Tolerance leaves headroom for MXU multi-pass f32 rounding vs the
    # highest-precision XLA reference; structural errors would be >> 1e-2.
    np.testing.assert_allclose(np.asarray(logits), np.asarray(ref),
                               rtol=5e-3, atol=5e-3)
    assert logits.shape == (B, output_size)
    print("KERNEL_OK")
</pallas_src>

<mosaic_0001>
module attributes {stable_mosaic.version = 11 : i64} {
  func.func @mdre_fused_kernel(%arg0: memref<8x1xi32, #tpu.memory_space<vmem>>, %arg1: memref<8x8x32xf32, #tpu.memory_space<vmem>>, %arg2: memref<8x8x16xf32, #tpu.memory_space<vmem>>, %arg3: memref<32x768xf32, #tpu.memory_space<vmem>>, %arg4: memref<16x768xf32, #tpu.memory_space<vmem>>, %arg5: memref<1x768xf32, #tpu.memory_space<vmem>>, %arg6: memref<256x768xf32, #tpu.memory_space<vmem>>, %arg7: memref<1x256xf32, #tpu.memory_space<vmem>>, %arg8: memref<256x4xf32, #tpu.memory_space<vmem>>, %arg9: memref<1x4xf32, #tpu.memory_space<vmem>>, %arg10: memref<8x4xf32, #tpu.memory_space<vmem>>, %arg11: memref<8x8x768xf32, #tpu.memory_space<vmem>>) attributes {dimension_semantics = [], scalar_prefetch = 0 : i64, scratch_operands = 1 : i64, tpu.core_type = #tpu.core_type<tc>} {
    %c0 = arith.constant 0 : index
    %c0_0 = arith.constant 0 : index
    %c0_1 = arith.constant 0 : index
    %0 = vector.load %arg1[%c0, %c0_0, %c0_1] : memref<8x8x32xf32, #tpu.memory_space<vmem>>, vector<8x8x32xf32>
    %1 = vector.shape_cast %0 : vector<8x8x32xf32> to vector<64x32xf32>
    %c0_2 = arith.constant 0 : index
    %c0_3 = arith.constant 0 : index
    %c0_4 = arith.constant 0 : index
    %2 = vector.load %arg2[%c0_2, %c0_3, %c0_4] : memref<8x8x16xf32, #tpu.memory_space<vmem>>, vector<8x8x16xf32>
    %3 = vector.shape_cast %2 : vector<8x8x16xf32> to vector<64x16xf32>
    %c0_5 = arith.constant 0 : index
    %c0_6 = arith.constant 0 : index
    %4 = vector.load %arg3[%c0_5, %c0_6] : memref<32x768xf32, #tpu.memory_space<vmem>>, vector<32x768xf32>
    %cst = arith.constant dense<0.000000e+00> : vector<64x768xf32>
    %5 = tpu.matmul %1, %4, %cst {dimension_numbers = #tpu.dot_dimension_numbers<[1], [0], [0], [1], [0, 0, 1, 1], [], []>} : vector<64x32xf32>, vector<32x768xf32>, vector<64x768xf32> -> vector<64x768xf32>
    %c0_7 = arith.constant 0 : index
    %c0_8 = arith.constant 0 : index
    %6 = vector.load %arg4[%c0_7, %c0_8] : memref<16x768xf32, #tpu.memory_space<vmem>>, vector<16x768xf32>
    %cst_9 = arith.constant dense<0.000000e+00> : vector<64x768xf32>
    %7 = tpu.matmul %3, %6, %cst_9 {dimension_numbers = #tpu.dot_dimension_numbers<[1], [0], [0], [1], [0, 0, 1, 1], [], []>} : vector<64x16xf32>, vector<16x768xf32>, vector<64x768xf32> -> vector<64x768xf32>
    %8 = arith.addf %5, %7 : vector<64x768xf32>
    %c0_10 = arith.constant 0 : index
    %c0_11 = arith.constant 0 : index
    %9 = vector.load %arg5[%c0_10, %c0_11] : memref<1x768xf32, #tpu.memory_space<vmem>>, vector<1x768xf32>
    %10 = vector.broadcast %9 : vector<1x768xf32> to vector<64x768xf32>
    %11 = arith.addf %8, %10 : vector<64x768xf32>
    %12 = vector.shape_cast %11 : vector<64x768xf32> to vector<8x8x768xf32>
    %c0_12 = arith.constant 0 : index
    %c0_13 = arith.constant 0 : index
    %c0_14 = arith.constant 0 : index
    %13 = vector.load %arg11[%c0_12, %c0_13, %c0_14] : memref<8x8x768xf32, #tpu.memory_space<vmem>>, vector<8x8x768xf32>
    tpu.vector_store %arg11[%c0_12, %c0_13, %c0_14], %12 {strides = array<i32>} : memref<8x8x768xf32, #tpu.memory_space<vmem>>, vector<8x8x768xf32>,
    %14 = tpu.iota {dimensions = array<i32: 0>} : vector<8x8x1xi32>
    %c0_15 = arith.constant 0 : index
    %c0_16 = arith.constant 0 : index
    %15 = vector.load %arg0[%c0_15, %c0_16] : memref<8x1xi32, #tpu.memory_space<vmem>>, vector<8x1xi32>
    %16 = vector.shape_cast %15 : vector<8x1xi32> to vector<1x8x1xi32>
    %17 = vector.broadcast %16 : vector<1x8x1xi32> to vector<8x8x1xi32>
    %18 = arith.cmpi sge, %14, %17 : vector<8x8x1xi32>
    %19 = arith.extui %18 : vector<8x8x1xi1> to vector<8x8x1xi32>
    %20 = arith.sitofp %19 : vector<8x8x1xi32> to vector<8x8x1xf32>
    %cst_17 = arith.constant 3.000000e+01 : f32
    %21 = vector.broadcast %cst_17 : f32 to vector<8x8x1xf32>
    %22 = arith.mulf %20, %21 : vector<8x8x1xf32>
    %c0_18 = arith.constant 0 : index
    %c0_19 = arith.constant 0 : index
    %c256 = arith.constant 256 : index
    %23 = vector.load %arg11[%c0_18, %c0_19, %c256] : memref<8x8x768xf32, #tpu.memory_space<vmem>>, vector<8x8x256xf32>
    %24 = vector.broadcast %22 : vector<8x8x1xf32> to vector<8x8x256xf32>
    %25 = arith.addf %23, %24 : vector<8x8x256xf32>
    %c0_20 = arith.constant 0 : index
    %c0_21 = arith.constant 0 : index
    %c256_22 = arith.constant 256 : index
    %26 = vector.load %arg11[%c0_20, %c0_21, %c256_22] : memref<8x8x768xf32, #tpu.memory_space<vmem>>, vector<8x8x256xf32>
    tpu.vector_store %arg11[%c0_20, %c0_21, %c256_22], %25 {strides = array<i32>} : memref<8x8x768xf32, #tpu.memory_space<vmem>>, vector<8x8x256xf32>,
    %c0_23 = arith.constant 0 : index
    %c0_24 = arith.constant 0 : index
    %27 = vector.load %arg6[%c0_23, %c0_24] : memref<256x768xf32, #tpu.memory_space<vmem>>, vector<256x768xf32>
    %c0_25 = arith.constant 0 : index
    %c0_26 = arith.constant 0 : index
    %28 = vector.load %arg7[%c0_25, %c0_26] : memref<1x256xf32, #tpu.memory_space<vmem>>, vector<1x256xf32>
    %cst_27 = arith.constant 0.000000e+00 : f32
    %29 = vector.broadcast %cst_27 : f32 to vector<8x256xf32>
    %c0_i32 = arith.constant 0 : i32
    %30 = arith.index_cast %c0_i32 : i32 to index
    %c0_28 = arith.constant 0 : index
    %c0_29 = arith.constant 0 : index
    %31 = vector.load %arg11[%30, %c0_28, %c0_29] : memref<8x8x768xf32, #tpu.memory_space<vmem>>, vector<1x8x768xf32>
    %32 = vector.shape_cast %31 : vector<1x8x768xf32> to vector<8x768xf32>
    %cst_30 = arith.constant dense<0.000000e+00> : vector<8x768xf32>
    %33 = tpu.matmul %29, %27, %cst_30 {dimension_numbers = #tpu.dot_dimension_numbers<[1], [0], [0], [1], [0, 0, 1, 1], [], []>} : vector<8x256xf32>, vector<256x768xf32>, vector<8x768xf32> -> vector<8x768xf32>
    %34 = vector.extract_strided_slice %32 {offsets = [0, 0], sizes = [8, 256], strides = [1, 1]} : vector<8x768xf32> to vector<8x256xf32>
    %35 = vector.extract_strided_slice %33 {offsets = [0, 0], sizes = [8, 256], strides = [1, 1]} : vector<8x768xf32> to vector<8x256xf32>
    %36 = arith.addf %34, %35 : vector<8x256xf32>
    %37 = arith.negf %36 : vector<8x256xf32>
    %38 = math.exp %37 : vector<8x256xf32>
    %cst_31 = arith.constant 1.000000e+00 : f32
    %39 = vector.broadcast %cst_31 : f32 to vector<8x256xf32>
    %40 = arith.addf %39, %38 : vector<8x256xf32>
    %41 = arith.divf %39, %40 : vector<8x256xf32>
    %42 = vector.extract_strided_slice %32 {offsets = [0, 256], sizes = [8, 256], strides = [1, 1]} : vector<8x768xf32> to vector<8x256xf32>
    %43 = vector.extract_strided_slice %33 {offsets = [0, 256], sizes = [8, 256], strides = [1, 1]} : vector<8x768xf32> to vector<8x256xf32>
    %44 = arith.addf %42, %43 : vector<8x256xf32>
    %45 = arith.negf %44 : vector<8x256xf32>
    %46 = math.exp %45 : vector<8x256xf32>
    %cst_32 = arith.constant 1.000000e+00 : f32
    %47 = vector.broadcast %cst_32 : f32 to vector<8x256xf32>
    %48 = arith.addf %47, %46 : vector<8x256xf32>
    %49 = arith.divf %47, %48 : vector<8x256xf32>
    %50 = vector.extract_strided_slice %32 {offsets = [0, 512], sizes = [8, 256], strides = [1, 1]} : vector<8x768xf32> to vector<8x256xf32>
    %51 = vector.extract_strided_slice %33 {offsets = [0, 512], sizes = [8, 256], strides = [1, 1]} : vector<8x768xf32> to vector<8x256xf32>
    %52 = vector.broadcast %28 : vector<1x256xf32> to vector<8x256xf32>
    %53 = arith.addf %51, %52 : vector<8x256xf32>
    %54 = arith.mulf %41, %53 : vector<8x256xf32>
    %55 = arith.addf %50, %54 : vector<8x256xf32>
    %56 = math.tanh %55 : vector<8x256xf32>
    %cst_33 = arith.constant 1.000000e+00 : f32
    %57 = vector.broadcast %cst_33 : f32 to vector<8x256xf32>
    %58 = arith.subf %57, %49 : vector<8x256xf32>
    %59 = arith.mulf %58, %56 : vector<8x256xf32>
    %60 = arith.mulf %49, %29 : vector<8x256xf32>
    %61 = arith.addf %59, %60 : vector<8x256xf32>
    %c1_i32 = arith.constant 1 : i32
    %62 = arith.index_cast %c1_i32 : i32 to index
    %c0_34 = arith.constant 0 : index
    %c0_35 = arith.constant 0 : index
    %63 = vector.load %arg11[%62, %c0_34, %c0_35] : memref<8x8x768xf32, #tpu.memory_space<vmem>>, vector<1x8x768xf32>
    %64 = vector.shape_cast %63 : vector<1x8x768xf32> to vector<8x768xf32>
    %cst_36 = arith.constant dense<0.000000e+00> : vector<8x768xf32>
    %65 = tpu.matmul %61, %27, %cst_36 {dimension_numbers = #tpu.dot_dimension_numbers<[1], [0], [0], [1], [0, 0, 1, 1], [], []>} : vector<8x256xf32>, vector<256x768xf32>, vector<8x768xf32> -> vector<8x768xf32>
    %66 = vector.extract_strided_slice %64 {offsets = [0, 0], sizes = [8, 256], strides = [1, 1]} : vector<8x768xf32> to vector<8x256xf32>
    %67 = vector.extract_strided_slice %65 {offsets = [0, 0], sizes = [8, 256], strides = [1, 1]} : vector<8x768xf32> to vector<8x256xf32>
    %68 = arith.addf %66, %67 : vector<8x256xf32>
    %69 = arith.negf %68 : vector<8x256xf32>
    %70 = math.exp %69 : vector<8x256xf32>
    %cst_37 = arith.constant 1.000000e+00 : f32
    %71 = vector.broadcast %cst_37 : f32 to vector<8x256xf32>
    %72 = arith.addf %71, %70 : vector<8x256xf32>
    %73 = arith.divf %71, %72 : vector<8x256xf32>
    %74 = vector.extract_strided_slice %64 {offsets = [0, 256], sizes = [8, 256], strides = [1, 1]} : vector<8x768xf32> to vector<8x256xf32>
    %75 = vector.extract_strided_slice %65 {offsets = [0, 256], sizes = [8, 256], strides = [1, 1]} : vector<8x768xf32> to vector<8x256xf32>
    %76 = arith.addf %74, %75 : vector<8x256xf32>
    %77 = arith.negf %76 : vector<8x256xf32>
    %78 = math.exp %77 : vector<8x256xf32>
    %cst_38 = arith.constant 1.000000e+00 : f32
    %79 = vector.broadcast %cst_38 : f32 to vector<8x256xf32>
    %80 = arith.addf %79, %78 : vector<8x256xf32>
    %81 = arith.divf %79, %80 : vector<8x256xf32>
    %82 = vector.extract_strided_slice %64 {offsets = [0, 512], sizes = [8, 256], strides = [1, 1]} : vector<8x768xf32> to vector<8x256xf32>
    %83 = vector.extract_strided_slice %65 {offsets = [0, 512], sizes = [8, 256], strides = [1, 1]} : vector<8x768xf32> to vector<8x256xf32>
    %84 = vector.broadcast %28 : vector<1x256xf32> to vector<8x256xf32>
    %85 = arith.addf %83, %84 : vector<8x256xf32>
    %86 = arith.mulf %73, %85 : vector<8x256xf32>
    %87 = arith.addf %82, %86 : vector<8x256xf32>
    %88 = math.tanh %87 : vector<8x256xf32>
    %cst_39 = arith.constant 1.000000e+00 : f32
    %89 = vector.broadcast %cst_39 : f32 to vector<8x256xf32>
    %90 = arith.subf %89, %81 : vector<8x256xf32>
    %91 = arith.mulf %90, %88 : vector<8x256xf32>
    %92 = arith.mulf %81, %61 : vector<8x256xf32>
    %93 = arith.addf %91, %92 : vector<8x256xf32>
    %c2_i32 = arith.constant 2 : i32
    %94 = arith.index_cast %c2_i32 : i32 to index
    %c0_40 = arith.constant 0 : index
    %c0_41 = arith.constant 0 : index
    %95 = vector.load %arg11[%94, %c0_40, %c0_41] : memref<8x8x768xf32, #tpu.memory_space<vmem>>, vector<1x8x768xf32>
    %96 = vector.shape_cast %95 : vector<1x8x768xf32> to vector<8x768xf32>
    %cst_42 = arith.constant dense<0.000000e+00> : vector<8x768xf32>
    %97 = tpu.matmul %93, %27, %cst_42 {dimension_numbers = #tpu.dot_dimension_numbers<[1], [0], [0], [1], [0, 0, 1, 1], [], []>} : vector<8x256xf32>, vector<256x768xf32>, vector<8x768xf32> -> vector<8x768xf32>
    %98 = vector.extract_strided_slice %96 {offsets = [0, 0], sizes = [8, 256], strides = [1, 1]} : vector<8x768xf32> to vector<8x256xf32>
    %99 = vector.extract_strided_slice %97 {offsets = [0, 0], sizes = [8, 256], strides = [1, 1]} : vector<8x768xf32> to vector<8x256xf32>
    %100 = arith.addf %98, %99 : vector<8x256xf32>
    %101 = arith.negf %100 : vector<8x256xf32>
    %102 = math.exp %101 : vector<8x256xf32>
    %cst_43 = arith.constant 1.000000e+00 : f32
    %103 = vector.broadcast %cst_43 : f32 to vector<8x256xf32>
    %104 = arith.addf %103, %102 : vector<8x256xf32>
    %105 = arith.divf %103, %104 : vector<8x256xf32>
    %106 = vector.extract_strided_slice %96 {offsets = [0, 256], sizes = [8, 256], strides = [1, 1]} : vector<8x768xf32> to vector<8x256xf32>
    %107 = vector.extract_strided_slice %97 {offsets = [0, 256], sizes = [8, 256], strides = [1, 1]} : vector<8x768xf32> to vector<8x256xf32>
    %108 = arith.addf %106, %107 : vector<8x256xf32>
    %109 = arith.negf %108 : vector<8x256xf32>
    %110 = math.exp %109 : vector<8x256xf32>
    %cst_44 = arith.constant 1.000000e+00 : f32
    %111 = vector.broadcast %cst_44 : f32 to vector<8x256xf32>
    %112 = arith.addf %111, %110 : vector<8x256xf32>
    %113 = arith.divf %111, %112 : vector<8x256xf32>
    %114 = vector.extract_strided_slice %96 {offsets = [0, 512], sizes = [8, 256], strides = [1, 1]} : vector<8x768xf32> to vector<8x256xf32>
    %115 = vector.extract_strided_slice %97 {offsets = [0, 512], sizes = [8, 256], strides = [1, 1]} : vector<8x768xf32> to vector<8x256xf32>
    %116 = vector.broadcast %28 : vector<1x256xf32> to vector<8x256xf32>
    %117 = arith.addf %115, %116 : vector<8x256xf32>
    %118 = arith.mulf %105, %117 : vector<8x256xf32>
    %119 = arith.addf %114, %118 : vector<8x256xf32>
    %120 = math.tanh %119 : vector<8x256xf32>
    %cst_45 = arith.constant 1.000000e+00 : f32
    %121 = vector.broadcast %cst_45 : f32 to vector<8x256xf32>
    %122 = arith.subf %121, %113 : vector<8x256xf32>
    %123 = arith.mulf %122, %120 : vector<8x256xf32>
    %124 = arith.mulf %113, %93 : vector<8x256xf32>
    %125 = arith.addf %123, %124 : vector<8x256xf32>
    %c3_i32 = arith.constant 3 : i32
    %126 = arith.index_cast %c3_i32 : i32 to index
    %c0_46 = arith.constant 0 : index
    %c0_47 = arith.constant 0 : index
    %127 = vector.load %arg11[%126, %c0_46, %c0_47] : memref<8x8x768xf32, #tpu.memory_space<vmem>>, vector<1x8x768xf32>
    %128 = vector.shape_cast %127 : vector<1x8x768xf32> to vector<8x768xf32>
    %cst_48 = arith.constant dense<0.000000e+00> : vector<8x768xf32>
    %129 = tpu.matmul %125, %27, %cst_48 {dimension_numbers = #tpu.dot_dimension_numbers<[1], [0], [0], [1], [0, 0, 1, 1], [], []>} : vector<8x256xf32>, vector<256x768xf32>, vector<8x768xf32> -> vector<8x768xf32>
    %130 = vector.extract_strided_slice %128 {offsets = [0, 0], sizes = [8, 256], strides = [1, 1]} : vector<8x768xf32> to vector<8x256xf32>
    %131 = vector.extract_strided_slice %129 {offsets = [0, 0], sizes = [8, 256], strides = [1, 1]} : vector<8x768xf32> to vector<8x256xf32>
    %132 = arith.addf %130, %131 : vector<8x256xf32>
    %133 = arith.negf %132 : vector<8x256xf32>
    %134 = math.exp %133 : vector<8x256xf32>
    %cst_49 = arith.constant 1.000000e+00 : f32
    %135 = vector.broadcast %cst_49 : f32 to vector<8x256xf32>
    %136 = arith.addf %135, %134 : vector<8x256xf32>
    %137 = arith.divf %135, %136 : vector<8x256xf32>
    %138 = vector.extract_strided_slice %128 {offsets = [0, 256], sizes = [8, 256], strides = [1, 1]} : vector<8x768xf32> to vector<8x256xf32>
    %139 = vector.extract_strided_slice %129 {offsets = [0, 256], sizes = [8, 256], strides = [1, 1]} : vector<8x768xf32> to vector<8x256xf32>
    %140 = arith.addf %138, %139 : vector<8x256xf32>
    %141 = arith.negf %140 : vector<8x256xf32>
    %142 = math.exp %141 : vector<8x256xf32>
    %cst_50 = arith.constant 1.000000e+00 : f32
    %143 = vector.broadcast %cst_50 : f32 to vector<8x256xf32>
    %144 = arith.addf %143, %142 : vector<8x256xf32>
    %145 = arith.divf %143, %144 : vector<8x256xf32>
    %146 = vector.extract_strided_slice %128 {offsets = [0, 512], sizes = [8, 256], strides = [1, 1]} : vector<8x768xf32> to vector<8x256xf32>
    %147 = vector.extract_strided_slice %129 {offsets = [0, 512], sizes = [8, 256], strides = [1, 1]} : vector<8x768xf32> to vector<8x256xf32>
    %148 = vector.broadcast %28 : vector<1x256xf32> to vector<8x256xf32>
    %149 = arith.addf %147, %148 : vector<8x256xf32>
    %150 = arith.mulf %137, %149 : vector<8x256xf32>
    %151 = arith.addf %146, %150 : vector<8x256xf32>
    %152 = math.tanh %151 : vector<8x256xf32>
    %cst_51 = arith.constant 1.000000e+00 : f32
    %153 = vector.broadcast %cst_51 : f32 to vector<8x256xf32>
    %154 = arith.subf %153, %145 : vector<8x256xf32>
    %155 = arith.mulf %154, %152 : vector<8x256xf32>
    %156 = arith.mulf %145, %125 : vector<8x256xf32>
    %157 = arith.addf %155, %156 : vector<8x256xf32>
    %c4_i32 = arith.constant 4 : i32
    %158 = arith.index_cast %c4_i32 : i32 to index
    %c0_52 = arith.constant 0 : index
    %c0_53 = arith.constant 0 : index
    %159 = vector.load %arg11[%158, %c0_52, %c0_53] : memref<8x8x768xf32, #tpu.memory_space<vmem>>, vector<1x8x768xf32>
    %160 = vector.shape_cast %159 : vector<1x8x768xf32> to vector<8x768xf32>
    %cst_54 = arith.constant dense<0.000000e+00> : vector<8x768xf32>
    %161 = tpu.matmul %157, %27, %cst_54 {dimension_numbers = #tpu.dot_dimension_numbers<[1], [0], [0], [1], [0, 0, 1, 1], [], []>} : vector<8x256xf32>, vector<256x768xf32>, vector<8x768xf32> -> vector<8x768xf32>
    %162 = vector.extract_strided_slice %160 {offsets = [0, 0], sizes = [8, 256], strides = [1, 1]} : vector<8x768xf32> to vector<8x256xf32>
    %163 = vector.extract_strided_slice %161 {offsets = [0, 0], sizes = [8, 256], strides = [1, 1]} : vector<8x768xf32> to vector<8x256xf32>
    %164 = arith.addf %162, %163 : vector<8x256xf32>
    %165 = arith.negf %164 : vector<8x256xf32>
    %166 = math.exp %165 : vector<8x256xf32>
    %cst_55 = arith.constant 1.000000e+00 : f32
    %167 = vector.broadcast %cst_55 : f32 to vector<8x256xf32>
    %168 = arith.addf %167, %166 : vector<8x256xf32>
    %169 = arith.divf %167, %168 : vector<8x256xf32>
    %170 = vector.extract_strided_slice %160 {offsets = [0, 256], sizes = [8, 256], strides = [1, 1]} : vector<8x768xf32> to vector<8x256xf32>
    %171 = vector.extract_strided_slice %161 {offsets = [0, 256], sizes = [8, 256], strides = [1, 1]} : vector<8x768xf32> to vector<8x256xf32>
    %172 = arith.addf %170, %171 : vector<8x256xf32>
    %173 = arith.negf %172 : vector<8x256xf32>
    %174 = math.exp %173 : vector<8x256xf32>
    %cst_56 = arith.constant 1.000000e+00 : f32
    %175 = vector.broadcast %cst_56 : f32 to vector<8x256xf32>
    %176 = arith.addf %175, %174 : vector<8x256xf32>
    %177 = arith.divf %175, %176 : vector<8x256xf32>
    %178 = vector.extract_strided_slice %160 {offsets = [0, 512], sizes = [8, 256], strides = [1, 1]} : vector<8x768xf32> to vector<8x256xf32>
    %179 = vector.extract_strided_slice %161 {offsets = [0, 512], sizes = [8, 256], strides = [1, 1]} : vector<8x768xf32> to vector<8x256xf32>
    %180 = vector.broadcast %28 : vector<1x256xf32> to vector<8x256xf32>
    %181 = arith.addf %179, %180 : vector<8x256xf32>
    %182 = arith.mulf %169, %181 : vector<8x256xf32>
    %183 = arith.addf %178, %182 : vector<8x256xf32>
    %184 = math.tanh %183 : vector<8x256xf32>
    %cst_57 = arith.constant 1.000000e+00 : f32
    %185 = vector.broadcast %cst_57 : f32 to vector<8x256xf32>
    %186 = arith.subf %185, %177 : vector<8x256xf32>
    %187 = arith.mulf %186, %184 : vector<8x256xf32>
    %188 = arith.mulf %177, %157 : vector<8x256xf32>
    %189 = arith.addf %187, %188 : vector<8x256xf32>
    %c5_i32 = arith.constant 5 : i32
    %190 = arith.index_cast %c5_i32 : i32 to index
    %c0_58 = arith.constant 0 : index
    %c0_59 = arith.constant 0 : index
    %191 = vector.load %arg11[%190, %c0_58, %c0_59] : memref<8x8x768xf32, #tpu.memory_space<vmem>>, vector<1x8x768xf32>
    %192 = vector.shape_cast %191 : vector<1x8x768xf32> to vector<8x768xf32>
    %cst_60 = arith.constant dense<0.000000e+00> : vector<8x768xf32>
    %193 = tpu.matmul %189, %27, %cst_60 {dimension_numbers = #tpu.dot_dimension_numbers<[1], [0], [0], [1], [0, 0, 1, 1], [], []>} : vector<8x256xf32>, vector<256x768xf32>, vector<8x768xf32> -> vector<8x768xf32>
    %194 = vector.extract_strided_slice %192 {offsets = [0, 0], sizes = [8, 256], strides = [1, 1]} : vector<8x768xf32> to vector<8x256xf32>
    %195 = vector.extract_strided_slice %193 {offsets = [0, 0], sizes = [8, 256], strides = [1, 1]} : vector<8x768xf32> to vector<8x256xf32>
    %196 = arith.addf %194, %195 : vector<8x256xf32>
    %197 = arith.negf %196 : vector<8x256xf32>
    %198 = math.exp %197 : vector<8x256xf32>
    %cst_61 = arith.constant 1.000000e+00 : f32
    %199 = vector.broadcast %cst_61 : f32 to vector<8x256xf32>
    %200 = arith.addf %199, %198 : vector<8x256xf32>
    %201 = arith.divf %199, %200 : vector<8x256xf32>
    %202 = vector.extract_strided_slice %192 {offsets = [0, 256], sizes = [8, 256], strides = [1, 1]} : vector<8x768xf32> to vector<8x256xf32>
    %203 = vector.extract_strided_slice %193 {offsets = [0, 256], sizes = [8, 256], strides = [1, 1]} : vector<8x768xf32> to vector<8x256xf32>
    %204 = arith.addf %202, %203 : vector<8x256xf32>
    %205 = arith.negf %204 : vector<8x256xf32>
    %206 = math.exp %205 : vector<8x256xf32>
    %cst_62 = arith.constant 1.000000e+00 : f32
    %207 = vector.broadcast %cst_62 : f32 to vector<8x256xf32>
    %208 = arith.addf %207, %206 : vector<8x256xf32>
    %209 = arith.divf %207, %208 : vector<8x256xf32>
    %210 = vector.extract_strided_slice %192 {offsets = [0, 512], sizes = [8, 256], strides = [1, 1]} : vector<8x768xf32> to vector<8x256xf32>
    %211 = vector.extract_strided_slice %193 {offsets = [0, 512], sizes = [8, 256], strides = [1, 1]} : vector<8x768xf32> to vector<8x256xf32>
    %212 = vector.broadcast %28 : vector<1x256xf32> to vector<8x256xf32>
    %213 = arith.addf %211, %212 : vector<8x256xf32>
    %214 = arith.mulf %201, %213 : vector<8x256xf32>
    %215 = arith.addf %210, %214 : vector<8x256xf32>
    %216 = math.tanh %215 : vector<8x256xf32>
    %cst_63 = arith.constant 1.000000e+00 : f32
    %217 = vector.broadcast %cst_63 : f32 to vector<8x256xf32>
    %218 = arith.subf %217, %209 : vector<8x256xf32>
    %219 = arith.mulf %218, %216 : vector<8x256xf32>
    %220 = arith.mulf %209, %189 : vector<8x256xf32>
    %221 = arith.addf %219, %220 : vector<8x256xf32>
    %c6_i32 = arith.constant 6 : i32
    %222 = arith.index_cast %c6_i32 : i32 to index
    %c0_64 = arith.constant 0 : index
    %c0_65 = arith.constant 0 : index
    %223 = vector.load %arg11[%222, %c0_64, %c0_65] : memref<8x8x768xf32, #tpu.memory_space<vmem>>, vector<1x8x768xf32>
    %224 = vector.shape_cast %223 : vector<1x8x768xf32> to vector<8x768xf32>
    %cst_66 = arith.constant dense<0.000000e+00> : vector<8x768xf32>
    %225 = tpu.matmul %221, %27, %cst_66 {dimension_numbers = #tpu.dot_dimension_numbers<[1], [0], [0], [1], [0, 0, 1, 1], [], []>} : vector<8x256xf32>, vector<256x768xf32>, vector<8x768xf32> -> vector<8x768xf32>
    %226 = vector.extract_strided_slice %224 {offsets = [0, 0], sizes = [8, 256], strides = [1, 1]} : vector<8x768xf32> to vector<8x256xf32>
    %227 = vector.extract_strided_slice %225 {offsets = [0, 0], sizes = [8, 256], strides = [1, 1]} : vector<8x768xf32> to vector<8x256xf32>
    %228 = arith.addf %226, %227 : vector<8x256xf32>
    %229 = arith.negf %228 : vector<8x256xf32>
    %230 = math.exp %229 : vector<8x256xf32>
    %cst_67 = arith.constant 1.000000e+00 : f32
    %231 = vector.broadcast %cst_67 : f32 to vector<8x256xf32>
    %232 = arith.addf %231, %230 : vector<8x256xf32>
    %233 = arith.divf %231, %232 : vector<8x256xf32>
    %234 = vector.extract_strided_slice %224 {offsets = [0, 256], sizes = [8, 256], strides = [1, 1]} : vector<8x768xf32> to vector<8x256xf32>
    %235 = vector.extract_strided_slice %225 {offsets = [0, 256], sizes = [8, 256], strides = [1, 1]} : vector<8x768xf32> to vector<8x256xf32>
    %236 = arith.addf %234, %235 : vector<8x256xf32>
    %237 = arith.negf %236 : vector<8x256xf32>
    %238 = math.exp %237 : vector<8x256xf32>
    %cst_68 = arith.constant 1.000000e+00 : f32
    %239 = vector.broadcast %cst_68 : f32 to vector<8x256xf32>
    %240 = arith.addf %239, %238 : vector<8x256xf32>
    %241 = arith.divf %239, %240 : vector<8x256xf32>
    %242 = vector.extract_strided_slice %224 {offsets = [0, 512], sizes = [8, 256], strides = [1, 1]} : vector<8x768xf32> to vector<8x256xf32>
    %243 = vector.extract_strided_slice %225 {offsets = [0, 512], sizes = [8, 256], strides = [1, 1]} : vector<8x768xf32> to vector<8x256xf32>
    %244 = vector.broadcast %28 : vector<1x256xf32> to vector<8x256xf32>
    %245 = arith.addf %243, %244 : vector<8x256xf32>
    %246 = arith.mulf %233, %245 : vector<8x256xf32>
    %247 = arith.addf %242, %246 : vector<8x256xf32>
    %248 = math.tanh %247 : vector<8x256xf32>
    %cst_69 = arith.constant 1.000000e+00 : f32
    %249 = vector.broadcast %cst_69 : f32 to vector<8x256xf32>
    %250 = arith.subf %249, %241 : vector<8x256xf32>
    %251 = arith.mulf %250, %248 : vector<8x256xf32>
    %252 = arith.mulf %241, %221 : vector<8x256xf32>
    %253 = arith.addf %251, %252 : vector<8x256xf32>
    %c7_i32 = arith.constant 7 : i32
    %254 = arith.index_cast %c7_i32 : i32 to index
    %c0_70 = arith.constant 0 : index
    %c0_71 = arith.constant 0 : index
    %255 = vector.load %arg11[%254, %c0_70, %c0_71] : memref<8x8x768xf32, #tpu.memory_space<vmem>>, vector<1x8x768xf32>
    %256 = vector.shape_cast %255 : vector<1x8x768xf32> to vector<8x768xf32>
    %cst_72 = arith.constant dense<0.000000e+00> : vector<8x768xf32>
    %257 = tpu.matmul %253, %27, %cst_72 {dimension_numbers = #tpu.dot_dimension_numbers<[1], [0], [0], [1], [0, 0, 1, 1], [], []>} : vector<8x256xf32>, vector<256x768xf32>, vector<8x768xf32> -> vector<8x768xf32>
    %258 = vector.extract_strided_slice %256 {offsets = [0, 0], sizes = [8, 256], strides = [1, 1]} : vector<8x768xf32> to vector<8x256xf32>
    %259 = vector.extract_strided_slice %257 {offsets = [0, 0], sizes = [8, 256], strides = [1, 1]} : vector<8x768xf32> to vector<8x256xf32>
    %260 = arith.addf %258, %259 : vector<8x256xf32>
    %261 = arith.negf %260 : vector<8x256xf32>
    %262 = math.exp %261 : vector<8x256xf32>
    %cst_73 = arith.constant 1.000000e+00 : f32
    %263 = vector.broadcast %cst_73 : f32 to vector<8x256xf32>
    %264 = arith.addf %263, %262 : vector<8x256xf32>
    %265 = arith.divf %263, %264 : vector<8x256xf32>
    %266 = vector.extract_strided_slice %256 {offsets = [0, 256], sizes = [8, 256], strides = [1, 1]} : vector<8x768xf32> to vector<8x256xf32>
    %267 = vector.extract_strided_slice %257 {offsets = [0, 256], sizes = [8, 256], strides = [1, 1]} : vector<8x768xf32> to vector<8x256xf32>
    %268 = arith.addf %266, %267 : vector<8x256xf32>
    %269 = arith.negf %268 : vector<8x256xf32>
    %270 = math.exp %269 : vector<8x256xf32>
    %cst_74 = arith.constant 1.000000e+00 : f32
    %271 = vector.broadcast %cst_74 : f32 to vector<8x256xf32>
    %272 = arith.addf %271, %270 : vector<8x256xf32>
    %273 = arith.divf %271, %272 : vector<8x256xf32>
    %274 = vector.extract_strided_slice %256 {offsets = [0, 512], sizes = [8, 256], strides = [1, 1]} : vector<8x768xf32> to vector<8x256xf32>
    %275 = vector.extract_strided_slice %257 {offsets = [0, 512], sizes = [8, 256], strides = [1, 1]} : vector<8x768xf32> to vector<8x256xf32>
    %276 = vector.broadcast %28 : vector<1x256xf32> to vector<8x256xf32>
    %277 = arith.addf %275, %276 : vector<8x256xf32>
    %278 = arith.mulf %265, %277 : vector<8x256xf32>
    %279 = arith.addf %274, %278 : vector<8x256xf32>
    %280 = math.tanh %279 : vector<8x256xf32>
    %cst_75 = arith.constant 1.000000e+00 : f32
    %281 = vector.broadcast %cst_75 : f32 to vector<8x256xf32>
    %282 = arith.subf %281, %273 : vector<8x256xf32>
    %283 = arith.mulf %282, %280 : vector<8x256xf32>
    %284 = arith.mulf %273, %253 : vector<8x256xf32>
    %285 = arith.addf %283, %284 : vector<8x256xf32>
    %c8_i32 = arith.constant 8 : i32
    %c0_76 = arith.constant 0 : index
    %c0_77 = arith.constant 0 : index
    %286 = vector.load %arg8[%c0_76, %c0_77] : memref<256x4xf32, #tpu.memory_space<vmem>>, vector<256x4xf32>
    %cst_78 = arith.constant dense<0.000000e+00> : vector<8x4xf32>
    %287 = tpu.matmul %285, %286, %cst_78 {dimension_numbers = #tpu.dot_dimension_numbers<[1], [0], [0], [1], [0, 0, 1, 1], [], []>} : vector<8x256xf32>, vector<256x4xf32>, vector<8x4xf32> -> vector<8x4xf32>
    %c0_79 = arith.constant 0 : index
    %c0_80 = arith.constant 0 : index
    %288 = vector.load %arg9[%c0_79, %c0_80] : memref<1x4xf32, #tpu.memory_space<vmem>>, vector<1x4xf32>
    %289 = vector.broadcast %288 : vector<1x4xf32> to vector<8x4xf32>
    %290 = arith.addf %287, %289 : vector<8x4xf32>
    %c0_81 = arith.constant 0 : index
    %c0_82 = arith.constant 0 : index
    %291 = vector.load %arg10[%c0_81, %c0_82] : memref<8x4xf32, #tpu.memory_space<vmem>>, vector<8x4xf32>
    tpu.vector_store %arg10[%c0_81, %c0_82], %290 {strides = array<i32>} : memref<8x4xf32, #tpu.memory_space<vmem>>, vector<8x4xf32>,
    return
  }
}

</mosaic_0001>

<llo_original>
// kernel: encoder_mdre_forward.1
$region0: #{encoder_mdre_forward.1}
  #allocation0 [shape = 'u32[]', space=smem, size = 0x4, offset = 0x4, fixed_abs, tag = 'smem constant byte address 0x4 - core index']
  #allocation1 [shape = 'u32[144,128]{1,0:T(1,128)}', space=vmem, size = 0x12000, scoped, tag = 'internal scratch']
  #allocation2 [shape = 'f32[8,8,768]{2,1,0:T(8,128)}', space=vmem, size = 0x30000, scoped, tag = 'scratch operand']
  %s0 = inlined_call_operand.vmem [shape: s32[8,1], index: 0, kind: input, shape index: {}]
  %s1 = inlined_call_operand.vmem [shape: f32[8,8,32], index: 1, kind: input, shape index: {}]
  %s2 = inlined_call_operand.vmem [shape: f32[8,8,16], index: 2, kind: input, shape index: {}]
  %s3 = inlined_call_operand.vmem [shape: f32[32,768], index: 3, kind: input, shape index: {}]
  %s4 = inlined_call_operand.vmem [shape: f32[16,768], index: 4, kind: input, shape index: {}]
  %s5 = inlined_call_operand.vmem [shape: f32[1,768], index: 5, kind: input, shape index: {}]
  %s6 = inlined_call_operand.hbm [shape: f32[256,768], index: 6, kind: input, shape index: {}]
  %s7 = inlined_call_operand.vmem [shape: f32[1,256], index: 7, kind: input, shape index: {}]
  %s8 = inlined_call_operand.vmem [shape: f32[256,4], index: 8, kind: input, shape index: {}]
  %s9 = inlined_call_operand.vmem [shape: f32[1,4], index: 9, kind: input, shape index: {}]
  %s10 = inlined_call_operand.vmem [shape: f32[8,4], index: 10, kind: output, shape index: {}]
  %s11 = sld [smem:[#allocation0]]
  $region54: #{encoder_mdre_forward.1} parent=0
    _
  %s13 = ssub.s32 1, %s11
  %s14 = scalar_select 0, %s13, %s11
  $region1: #{encoder_mdre_forward.1} parent=0
    #allocation3 [shape = 'u8[786432]{0}', space=vmem, size = 0xc0000, scoped, tag = 'input window, operand 6, single buffered']
    #allocation4 [shape = 's32[1]{0}', space=sflag, size = 0x4, scoped, tag = 'scoped memory for encoder_mdre_forward.1']
    %15 = vsyncpa [#allocation4], 0
    // Predicated region
    $region2: #{encoder_mdre_forward.1} parent=1 // pred_check
      _
    $region3: #{encoder_mdre_forward.1} parent=1 // pred_check_branch
      %17 = sbr.rel (0) target = $region5
    $region4: #{encoder_mdre_forward.1} parent=1 // pred_region
      _
    $region5: #{encoder_mdre_forward.1} parent=1 // pred_fallthru
      _
    // Predicated region
    $region6: #{encoder_mdre_forward.1} parent=1 // pred_check
      _
    $region7: #{encoder_mdre_forward.1} parent=1 // pred_check_branch
      %19 = sbr.rel (0) target = $region9
    $region8: #{encoder_mdre_forward.1} parent=1 // pred_region
      _
    $region9: #{encoder_mdre_forward.1} parent=1 // pred_fallthru
      _
    // Predicated region
    $region10: #{encoder_mdre_forward.1} parent=1 // pred_check
      _
    $region11: #{encoder_mdre_forward.1} parent=1 // pred_check_branch
      %21 = sbr.rel (0) target = $region13
    $region12: #{encoder_mdre_forward.1} parent=1 // pred_region
      _
    $region13: #{encoder_mdre_forward.1} parent=1 // pred_fallthru
      _
    // Predicated region
    $region14: #{encoder_mdre_forward.1} parent=1 // pred_check
      _
    $region15: #{encoder_mdre_forward.1} parent=1 // pred_check_branch
      %23 = sbr.rel (0) target = $region17
    $region16: #{encoder_mdre_forward.1} parent=1 // pred_region
      _
    $region17: #{encoder_mdre_forward.1} parent=1 // pred_fallthru
      _
    // Predicated region
    $region18: #{encoder_mdre_forward.1} parent=1 // pred_check
      _
    $region19: #{encoder_mdre_forward.1} parent=1 // pred_check_branch
      %25 = sbr.rel (0) target = $region21
    $region20: #{encoder_mdre_forward.1} parent=1 // pred_region
      _
    $region21: #{encoder_mdre_forward.1} parent=1 // pred_fallthru
      _
    // Predicated region
    $region22: #{encoder_mdre_forward.1} parent=1 // pred_check
      _
    $region23: #{encoder_mdre_forward.1} parent=1 // pred_check_branch
      %27 = sbr.rel (0) target = $region25
    $region24: #{encoder_mdre_forward.1} parent=1 // pred_region
      _
    $region25: #{encoder_mdre_forward.1} parent=1 // pred_fallthru
      _
    // Predicated region
    $region26: #{encoder_mdre_forward.1} parent=1 // pred_check
      _
    $region27: #{encoder_mdre_forward.1} parent=1 // pred_check_branch
      %29 = sbr.rel (0) target = $region29
    $region28: #{encoder_mdre_forward.1} parent=1 // pred_region
      %s31 = ssub.s32 24576, 24576
      %32 = vsyncadd [#allocation4], %s31
      %s33 = sshll.u32 [#allocation3], 4
      %s34 = int_to_ptr.vmem [resolvable:$true] %s33
      %39 = dma.hbm_to_vmem [thread:$0]  %s6, 24576, %s34, [#allocation4], 768, 768, 48
    $region29: #{encoder_mdre_forward.1} parent=1 // pred_fallthru
      _
    // Predicated region
    $region30: #{encoder_mdre_forward.1} parent=1 // pred_check
      _
    $region31: #{encoder_mdre_forward.1} parent=1 // pred_check_branch
      %41 = sbr.rel (0) target = $region33
    $region32: #{encoder_mdre_forward.1} parent=1 // pred_region
      _
    $region33: #{encoder_mdre_forward.1} parent=1 // pred_fallthru
      _
    // Predicated region
    $region34: #{encoder_mdre_forward.1} parent=1 // pred_check
      _
    $region35: #{encoder_mdre_forward.1} parent=1 // pred_check_branch
      %43 = sbr.rel (0) target = $region37
    $region36: #{encoder_mdre_forward.1} parent=1 // pred_region
      _
    $region37: #{encoder_mdre_forward.1} parent=1 // pred_fallthru
      _
    // Predicated region
    $region38: #{encoder_mdre_forward.1} parent=1 // pred_check
      _
    $region39: #{encoder_mdre_forward.1} parent=1 // pred_check_branch
      %45 = sbr.rel (0) target = $region41
    $region40: #{encoder_mdre_forward.1} parent=1 // pred_region
      _
    $region41: #{encoder_mdre_forward.1} parent=1 // pred_fallthru
      _
    // Predicated region
    $region42: #{encoder_mdre_forward.1} parent=1 // pred_check
      _
    $region43: #{encoder_mdre_forward.1} parent=1 // pred_check_branch
      %47 = sbr.rel (0) target = $region45
    $region44: #{encoder_mdre_forward.1} parent=1 // pred_region
      %48 = dma.done [#allocation4], 24576
    $region45: #{encoder_mdre_forward.1} parent=1 // pred_fallthru
      _
    %v49 = vld [vmem:[%s1] sm:$0xff]
    %v50 = vld [vmem:[%s1 + $0x8] sm:$0xff]
    %v51 = vld [vmem:[%s1 + $0x10] sm:$0xff]
    %v52 = vld [vmem:[%s1 + $0x18] sm:$0xff]
    %v53 = vld [vmem:[%s1 + $0x20] sm:$0xff]
    %v54 = vld [vmem:[%s1 + $0x28] sm:$0xff]
    %v55 = vld [vmem:[%s1 + $0x30] sm:$0xff]
    %v56 = vld [vmem:[%s1 + $0x38] sm:$0xff]
    %v57 = vld [vmem:[%s2] sm:$0xff]
    %v58 = vld [vmem:[%s2 + $0x8] sm:$0xff]
    %v59 = vld [vmem:[%s2 + $0x10] sm:$0xff]
    %v60 = vld [vmem:[%s2 + $0x18] sm:$0xff]
    %v61 = vld [vmem:[%s2 + $0x20] sm:$0xff]
    %v62 = vld [vmem:[%s2 + $0x28] sm:$0xff]
    %v63 = vld [vmem:[%s2 + $0x30] sm:$0xff]
    %v64 = vld [vmem:[%s2 + $0x38] sm:$0xff]
    %v65 = vld [vmem:[%s3] sm:$0xff]
    %v66 = vld [vmem:[%s3 + $0x8] sm:$0xff]
    %v67 = vld [vmem:[%s3 + $0x10] sm:$0xff]
    %v68 = vld [vmem:[%s3 + $0x18] sm:$0xff]
    %v69 = vld [vmem:[%s3 + $0x20] sm:$0xff]
    %v70 = vld [vmem:[%s3 + $0x28] sm:$0xff]
    %v71 = vld [vmem:[%s3 + $0x30] sm:$0xff]
    %v72 = vld [vmem:[%s3 + $0x38] sm:$0xff]
    %v73 = vld [vmem:[%s3 + $0x40] sm:$0xff]
    %v74 = vld [vmem:[%s3 + $0x48] sm:$0xff]
    %v75 = vld [vmem:[%s3 + $0x50] sm:$0xff]
    %v76 = vld [vmem:[%s3 + $0x58] sm:$0xff]
    %v77 = vld [vmem:[%s3 + $0x60] sm:$0xff]
    %v78 = vld [vmem:[%s3 + $0x68] sm:$0xff]
    %v79 = vld [vmem:[%s3 + $0x70] sm:$0xff]
    %v80 = vld [vmem:[%s3 + $0x78] sm:$0xff]
    %v81 = vld [vmem:[%s3 + $0x80] sm:$0xff]
    %v82 = vld [vmem:[%s3 + $0x88] sm:$0xff]
    %v83 = vld [vmem:[%s3 + $0x90] sm:$0xff]
    %v84 = vld [vmem:[%s3 + $0x98] sm:$0xff]
    %v85 = vld [vmem:[%s3 + $0xa0] sm:$0xff]
    %v86 = vld [vmem:[%s3 + $0xa8] sm:$0xff]
    %v87 = vld [vmem:[%s3 + $0xb0] sm:$0xff]
    %v88 = vld [vmem:[%s3 + $0xb8] sm:$0xff]
    %v89 = vld [vmem:[%s4] sm:$0xff]
    %v90 = vld [vmem:[%s4 + $0x8] sm:$0xff]
    %v91 = vld [vmem:[%s4 + $0x10] sm:$0xff]
    %v92 = vld [vmem:[%s4 + $0x18] sm:$0xff]
    %v93 = vld [vmem:[%s4 + $0x20] sm:$0xff]
    %v94 = vld [vmem:[%s4 + $0x28] sm:$0xff]
    %v95 = vld [vmem:[%s4 + $0x30] sm:$0xff]
    %v96 = vld [vmem:[%s4 + $0x38] sm:$0xff]
    %v97 = vld [vmem:[%s4 + $0x40] sm:$0xff]
    %v98 = vld [vmem:[%s4 + $0x48] sm:$0xff]
    %v99 = vld [vmem:[%s4 + $0x50] sm:$0xff]
    %v100 = vld [vmem:[%s4 + $0x58] sm:$0xff]
    %vm101 = vcmask 130048
    %v103 = vsel %vm101, %v57, 0
    %v106 = vsel %vm101, %v58, 0
    %v109 = vsel %vm101, %v59, 0
    %v112 = vsel %vm101, %v60, 0
    %v115 = vsel %vm101, %v61, 0
    %v118 = vsel %vm101, %v62, 0
    %v121 = vsel %vm101, %v63, 0
    %v124 = vsel %vm101, %v64, 0
    %126 = vmatprep.subr.mxu0 %v90
    %127 = vmatpush1.msra.mxu0 %v89
    %128 = vmatprep.subr.mxu0 %v96
    %129 = vmatpush1.msra.mxu0 %v95
    %130 = vmatprep.subr.mxu0 0.0
    %131 = vmatpush1.msra.mxu0 0.0
    %132 = vmatprep.subr.mxu0 0.0
    %133 = vmatpush1.msra.mxu0 0.0
    %134 = vmatprep.subr.mxu0 0.0
    %135 = vmatpush1.msra.mxu0 0.0
    %136 = vmatprep.subr.mxu0 0.0
    %137 = vmatpush1.msra.mxu0 0.0
    %138 = vmatprep.subr.mxu0 0.0
    %139 = vmatpush1.msra.mxu0 0.0
    %140 = vmatprep.subr.mxu0 0.0
    %141 = vmatpush1.msra.mxu0 0.0
    %142 = vmatprep.subr.mxu0 0.0
    %143 = vmatpush1.msra.mxu0 0.0
    %144 = vmatprep.subr.mxu0 0.0
    %145 = vmatpush1.msra.mxu0 0.0
    %146 = vmatprep.subr.mxu0 0.0
    %147 = vmatpush1.msra.mxu0 0.0
    %148 = vmatprep.subr.mxu0 0.0
    %149 = vmatpush1.msra.mxu0 0.0
    %150 = vmatprep.subr.mxu0 0.0
    %151 = vmatpush1.msra.mxu0 0.0
    %152 = vmatprep.subr.mxu0 0.0
    %153 = vmatpush1.msra.mxu0 0.0
    %154 = vmatprep.subr.mxu0 0.0
    %155 = vmatpush1.msra.mxu0 0.0
    %156 = vmatprep.subr.mxu0 0.0
    %157 = vmatpush1.msra.mxu0 0.0
    %158 = vmatprep.subr.mxu0 0.0
    %159 = vmatpush1.msra.mxu0 0.0
    %160 = vmatprep.subr.mxu0 0.0
    %161 = vmatpush1.msra.mxu0 0.0
    %162 = vmatprep.subr.mxu0 0.0
    %163 = vmatpush1.msra.mxu0 0.0
    %164 = vmatprep.subr.mxu0 0.0
    %165 = vmatpush1.msra.mxu0 0.0
    %166 = vmatprep.subr.mxu0 0.0
    %167 = vmatpush1.msra.mxu0 0.0
    %168 = vmatprep.subr.mxu0 0.0
    %169 = vmatpush1.msra.mxu0 0.0
    %170 = vmatprep.subr.mxu0 0.0
    %171 = vmatpush1.msra.mxu0 0.0
    %172 = vmatprep.subr.mxu0 0.0
    %173 = vmatpush1.msra.mxu0 0.0
    %174 = vmatprep.subr.mxu0 0.0
    %175 = vmatpush1.msra.mxu0 0.0
    %176 = vmatprep.subr.mxu0 0.0
    %177 = vmatpush1.msra.mxu0 0.0
    %178 = vmatprep.subr.mxu0 0.0
    %179 = vmatpush1.msra.mxu0 0.0
    %180 = vmatprep.subr.mxu0 0.0
    %181 = vmatpush1.msra.mxu0 0.0
    %182 = vmatprep.subr.mxu0 0.0
    %183 = vmatpush1.msra.mxu0 0.0
    %184 = vmatprep.subr.mxu0 0.0
    %185 = vmatpush1.msra.mxu0 0.0
    %186 = vmatprep.subr.mxu0 0.0
    %187 = vmatpush1.msra.mxu0 0.0
    %188 = vmatprep.subr.mxu0 0.0
    %189 = vmatpush1.msra.mxu0 0.0
    %190 = vmatprep.mubr.f32.mxu0 0.0
    %191 = vmatmul.mubr.f32.gmra.mrb[0].mxu0 %v103
    %v192 = vpop.f32.mrb[0].mxu0
    %v193 = vadd.f32 0.0, %v192
    %v194 = vpop.f32.mrb[0].mxu0
    %v195 = vadd.f32 0.0, %v194
    %196 = vmatprep.mubr.f32.mxu0 0.0
    %197 = vmatmul.mubr.f32.gmra.mrb[0].mxu0 %v106
    %v198 = vpop.f32.mrb[0].mxu0
    %v199 = vadd.f32 0.0, %v198
    %v200 = vpop.f32.mrb[0].mxu0
    %v201 = vadd.f32 0.0, %v200
    %202 = vmatprep.mubr.f32.mxu0 0.0
    %203 = vmatmul.mubr.f32.gmra.mrb[0].mxu0 %v109
    %v204 = vpop.f32.mrb[0].mxu0
    %v205 = vadd.f32 0.0, %v204
    %v206 = vpop.f32.mrb[0].mxu0
    %v207 = vadd.f32 0.0, %v206
    %208 = vmatprep.mubr.f32.mxu0 0.0
    %209 = vmatmul.mubr.f32.gmra.mrb[0].mxu0 %v112
    %v210 = vpop.f32.mrb[0].mxu0
    %v211 = vadd.f32 0.0, %v210
    %v212 = vpop.f32.mrb[0].mxu0
    %v213 = vadd.f32 0.0, %v212
    %214 = vmatprep.mubr.f32.mxu0 0.0
    %215 = vmatmul.mubr.f32.gmra.mrb[0].mxu0 %v115
    %v216 = vpop.f32.mrb[0].mxu0
    %v217 = vadd.f32 0.0, %v216
    %v218 = vpop.f32.mrb[0].mxu0
    %v219 = vadd.f32 0.0, %v218
    %220 = vmatprep.mubr.f32.mxu0 0.0
    %221 = vmatmul.mubr.f32.gmra.mrb[0].mxu0 %v118
    %v222 = vpop.f32.mrb[0].mxu0
    %v223 = vadd.f32 0.0, %v222
    %v224 = vpop.f32.mrb[0].mxu0
    %v225 = vadd.f32 0.0, %v224
    %226 = vmatprep.mubr.f32.mxu0 0.0
    %227 = vmatmul.mubr.f32.gmra.mrb[0].mxu0 %v121
    %v228 = vpop.f32.mrb[0].mxu0
    %v229 = vadd.f32 0.0, %v228
    %v230 = vpop.f32.mrb[0].mxu0
    %v231 = vadd.f32 0.0, %v230
    %232 = vmatprep.mubr.f32.mxu0 0.0
    %233 = vmatmul.mubr.f32.gmra.mrb[0].mxu0 %v124
    %v234 = vpop.f32.mrb[0].mxu0
    %v235 = vadd.f32 0.0, %v234
    %v236 = vpop.f32.mrb[0].mxu0
    %v237 = vadd.f32 0.0, %v236
    %238 = vdwg.mxu0
    %239 = vmatprep.subr.mxu0 %v92
    %240 = vmatpush1.msra.mxu0 %v91
    %241 = vmatprep.subr.mxu0 %v98
    %242 = vmatpush1.msra.mxu0 %v97
    %243 = vmatprep.subr.mxu0 0.0
    %244 = vmatpush1.msra.mxu0 0.0
    %245 = vmatprep.subr.mxu0 0.0
    %246 = vmatpush1.msra.mxu0 0.0
    %247 = vmatprep.subr.mxu0 0.0
    %248 = vmatpush1.msra.mxu0 0.0
    %249 = vmatprep.subr.mxu0 0.0
    %250 = vmatpush1.msra.mxu0 0.0
    %251 = vmatprep.subr.mxu0 0.0
    %252 = vmatpush1.msra.mxu0 0.0
    %253 = vmatprep.subr.mxu0 0.0
    %254 = vmatpush1.msra.mxu0 0.0
    %255 = vmatprep.subr.mxu0 0.0
    %256 = vmatpush1.msra.mxu0 0.0
    %257 = vmatprep.subr.mxu0 0.0
    %258 = vmatpush1.msra.mxu0 0.0
    %259 = vmatprep.subr.mxu0 0.0
    %260 = vmatpush1.msra.mxu0 0.0
    %261 = vmatprep.subr.mxu0 0.0
    %262 = vmatpush1.msra.mxu0 0.0
    %263 = vmatprep.subr.mxu0 0.0
    %264 = vmatpush1.msra.mxu0 0.0
    %265 = vmatprep.subr.mxu0 0.0
    %266 = vmatpush1.msra.mxu0 0.0
    %267 = vmatprep.subr.mxu0 0.0
    %268 = vmatpush1.msra.mxu0 0.0
    %269 = vmatprep.subr.mxu0 0.0
    %270 = vmatpush1.msra.mxu0 0.0
    %271 = vmatprep.subr.mxu0 0.0
    %272 = vmatpush1.msra.mxu0 0.0
    %273 = vmatprep.subr.mxu0 0.0
    %274 = vmatpush1.msra.mxu0 0.0
    %275 = vmatprep.subr.mxu0 0.0
    %276 = vmatpush1.msra.mxu0 0.0
    %277 = vmatprep.subr.mxu0 0.0
    %278 = vmatpush1.msra.mxu0 0.0
    %279 = vmatprep.subr.mxu0 0.0
    %280 = vmatpush1.msra.mxu0 0.0
    %281 = vmatprep.subr.mxu0 0.0
    %282 = vmatpush1.msra.mxu0 0.0
    %283 = vmatprep.subr.mxu0 0.0
    %284 = vmatpush1.msra.mxu0 0.0
    %285 = vmatprep.subr.mxu0 0.0
    %286 = vmatpush1.msra.mxu0 0.0
    %287 = vmatprep.subr.mxu0 0.0
    %288 = vmatpush1.msra.mxu0 0.0
    %289 = vmatprep.subr.mxu0 0.0
    %290 = vmatpush1.msra.mxu0 0.0
    %291 = vmatprep.subr.mxu0 0.0
    %292 = vmatpush1.msra.mxu0 0.0
    %293 = vmatprep.subr.mxu0 0.0
    %294 = vmatpush1.msra.mxu0 0.0
    %295 = vmatprep.subr.mxu0 0.0
    %296 = vmatpush1.msra.mxu0 0.0
    %297 = vmatprep.subr.mxu0 0.0
    %298 = vmatpush1.msra.mxu0 0.0
    %299 = vmatprep.subr.mxu0 0.0
    %300 = vmatpush1.msra.mxu0 0.0
    %301 = vmatprep.subr.mxu0 0.0
    %302 = vmatpush1.msra.mxu0 0.0
    %303 = vmatprep.mubr.f32.mxu0 0.0
    %304 = vmatmul.mubr.f32.gmra.mrb[0].mxu0 %v103
    %v305 = vpop.f32.mrb[0].mxu0
    %v306 = vadd.f32 0.0, %v305
    %v307 = vpop.f32.mrb[0].mxu0
    %v308 = vadd.f32 0.0, %v307
    %309 = vmatprep.mubr.f32.mxu0 0.0
    %310 = vmatmul.mubr.f32.gmra.mrb[0].mxu0 %v106
    %v311 = vpop.f32.mrb[0].mxu0
    %v312 = vadd.f32 0.0, %v311
    %v313 = vpop.f32.mrb[0].mxu0
    %v314 = vadd.f32 0.0, %v313
    %315 = vmatprep.mubr.f32.mxu0 0.0
    %316 = vmatmul.mubr.f32.gmra.mrb[0].mxu0 %v109
    %v317 = vpop.f32.mrb[0].mxu0
    %v318 = vadd.f32 0.0, %v317
    %v319 = vpop.f32.mrb[0].mxu0
    %v320 = vadd.f32 0.0, %v319
    %321 = vmatprep.mubr.f32.mxu0 0.0
    %322 = vmatmul.mubr.f32.gmra.mrb[0].mxu0 %v112
    %v323 = vpop.f32.mrb[0].mxu0
    %v324 = vadd.f32 0.0, %v323
    %v325 = vpop.f32.mrb[0].mxu0
    %v326 = vadd.f32 0.0, %v325
    %327 = vmatprep.mubr.f32.mxu0 0.0
    %328 = vmatmul.mubr.f32.gmra.mrb[0].mxu0 %v115
    %v329 = vpop.f32.mrb[0].mxu0
    %v330 = vadd.f32 0.0, %v329
    %v331 = vpop.f32.mrb[0].mxu0
    %v332 = vadd.f32 0.0, %v331
    %333 = vmatprep.mubr.f32.mxu0 0.0
    %334 = vmatmul.mubr.f32.gmra.mrb[0].mxu0 %v118
    %v335 = vpop.f32.mrb[0].mxu0
    %v336 = vadd.f32 0.0, %v335
    %v337 = vpop.f32.mrb[0].mxu0
    %v338 = vadd.f32 0.0, %v337
    %339 = vmatprep.mubr.f32.mxu0 0.0
    %340 = vmatmul.mubr.f32.gmra.mrb[0].mxu0 %v121
    %v341 = vpop.f32.mrb[0].mxu0
    %v342 = vadd.f32 0.0, %v341
    %v343 = vpop.f32.mrb[0].mxu0
    %v344 = vadd.f32 0.0, %v343
    %345 = vmatprep.mubr.f32.mxu0 0.0
    %346 = vmatmul.mubr.f32.gmra.mrb[0].mxu0 %v124
    %v347 = vpop.f32.mrb[0].mxu0
    %v348 = vadd.f32 0.0, %v347
    %v349 = vpop.f32.mrb[0].mxu0
    %v350 = vadd.f32 0.0, %v349
    %351 = vdwg.mxu0
    %352 = vmatprep.subr.mxu0 %v94
    %353 = vmatpush1.msra.mxu0 %v93
    %354 = vmatprep.subr.mxu0 %v100
    %355 = vmatpush1.msra.mxu0 %v99
    %356 = vmatprep.subr.mxu0 0.0
    %357 = vmatpush1.msra.mxu0 0.0
    %358 = vmatprep.subr.mxu0 0.0
    %359 = vmatpush1.msra.mxu0 0.0
    %360 = vmatprep.subr.mxu0 0.0
    %361 = vmatpush1.msra.mxu0 0.0
    %362 = vmatprep.subr.mxu0 0.0
    %363 = vmatpush1.msra.mxu0 0.0
    %364 = vmatprep.subr.mxu0 0.0
    %365 = vmatpush1.msra.mxu0 0.0
    %366 = vmatprep.subr.mxu0 0.0
    %367 = vmatpush1.msra.mxu0 0.0
    %368 = vmatprep.subr.mxu0 0.0
    %369 = vmatpush1.msra.mxu0 0.0
    %370 = vmatprep.subr.mxu0 0.0
    %371 = vmatpush1.msra.mxu0 0.0
    %372 = vmatprep.subr.mxu0 0.0
    %373 = vmatpush1.msra.mxu0 0.0
    %374 = vmatprep.subr.mxu0 0.0
    %375 = vmatpush1.msra.mxu0 0.0
    %376 = vmatprep.subr.mxu0 0.0
    %377 = vmatpush1.msra.mxu0 0.0
    %378 = vmatprep.subr.mxu0 0.0
    %379 = vmatpush1.msra.mxu0 0.0
    %380 = vmatprep.subr.mxu0 0.0
    %381 = vmatpush1.msra.mxu0 0.0
    %382 = vmatprep.subr.mxu0 0.0
    %383 = vmatpush1.msra.mxu0 0.0
    %384 = vmatprep.subr.mxu0 0.0
    %385 = vmatpush1.msra.mxu0 0.0
    %386 = vmatprep.subr.mxu0 0.0
    %387 = vmatpush1.msra.mxu0 0.0
    %388 = vmatprep.subr.mxu0 0.0
    %389 = vmatpush1.msra.mxu0 0.0
    %390 = vmatprep.subr.mxu0 0.0
    %391 = vmatpush1.msra.mxu0 0.0
    %392 = vmatprep.subr.mxu0 0.0
    %393 = vmatpush1.msra.mxu0 0.0
    %394 = vmatprep.subr.mxu0 0.0
    %395 = vmatpush1.msra.mxu0 0.0
    %396 = vmatprep.subr.mxu0 0.0
    %397 = vmatpush1.msra.mxu0 0.0
    %398 = vmatprep.subr.mxu0 0.0
    %399 = vmatpush1.msra.mxu0 0.0
    %400 = vmatprep.subr.mxu0 0.0
    %401 = vmatpush1.msra.mxu0 0.0
    %402 = vmatprep.subr.mxu0 0.0
    %403 = vmatpush1.msra.mxu0 0.0
    %404 = vmatprep.subr.mxu0 0.0
    %405 = vmatpush1.msra.mxu0 0.0
    %406 = vmatprep.subr.mxu0 0.0
    %407 = vmatpush1.msra.mxu0 0.0
    %408 = vmatprep.subr.mxu0 0.0
    %409 = vmatpush1.msra.mxu0 0.0
    %410 = vmatprep.subr.mxu0 0.0
    %411 = vmatpush1.msra.mxu0 0.0
    %412 = vmatprep.subr.mxu0 0.0
    %413 = vmatpush1.msra.mxu0 0.0
    %414 = vmatprep.subr.mxu0 0.0
    %415 = vmatpush1.msra.mxu0 0.0
    %416 = vmatprep.mubr.f32.mxu0 0.0
    %417 = vmatmul.mubr.f32.gmra.mrb[0].mxu0 %v103
    %v418 = vpop.f32.mrb[0].mxu0
    %v419 = vadd.f32 0.0, %v418
    %v420 = vpop.f32.mrb[0].mxu0
    %v421 = vadd.f32 0.0, %v420
    %422 = vmatprep.mubr.f32.mxu0 0.0
    %423 = vmatmul.mubr.f32.gmra.mrb[0].mxu0 %v106
    %v424 = vpop.f32.mrb[0].mxu0
    %v425 = vadd.f32 0.0, %v424
    %v426 = vpop.f32.mrb[0].mxu0
    %v427 = vadd.f32 0.0, %v426
    %428 = vmatprep.mubr.f32.mxu0 0.0
    %429 = vmatmul.mubr.f32.gmra.mrb[0].mxu0 %v109
    %v430 = vpop.f32.mrb[0].mxu0
    %v431 = vadd.f32 0.0, %v430
    %v432 = vpop.f32.mrb[0].mxu0
    %v433 = vadd.f32 0.0, %v432
    %434 = vmatprep.mubr.f32.mxu0 0.0
    %435 = vmatmul.mubr.f32.gmra.mrb[0].mxu0 %v112
    %v436 = vpop.f32.mrb[0].mxu0
    %v437 = vadd.f32 0.0, %v436
    %v438 = vpop.f32.mrb[0].mxu0
    %v439 = vadd.f32 0.0, %v438
    %440 = vmatprep.mubr.f32.mxu0 0.0
    %441 = vmatmul.mubr.f32.gmra.mrb[0].mxu0 %v115
    %v442 = vpop.f32.mrb[0].mxu0
    %v443 = vadd.f32 0.0, %v442
    %v444 = vpop.f32.mrb[0].mxu0
    %v445 = vadd.f32 0.0, %v444
    %446 = vmatprep.mubr.f32.mxu0 0.0
    %447 = vmatmul.mubr.f32.gmra.mrb[0].mxu0 %v118
    %v448 = vpop.f32.mrb[0].mxu0
    %v449 = vadd.f32 0.0, %v448
    %v450 = vpop.f32.mrb[0].mxu0
    %v451 = vadd.f32 0.0, %v450
    %452 = vmatprep.mubr.f32.mxu0 0.0
    %453 = vmatmul.mubr.f32.gmra.mrb[0].mxu0 %v121
    %v454 = vpop.f32.mrb[0].mxu0
    %v455 = vadd.f32 0.0, %v454
    %v456 = vpop.f32.mrb[0].mxu0
    %v457 = vadd.f32 0.0, %v456
    %458 = vmatprep.mubr.f32.mxu0 0.0
    %459 = vmatmul.mubr.f32.gmra.mrb[0].mxu0 %v124
    %v460 = vpop.f32.mrb[0].mxu0
    %v461 = vadd.f32 0.0, %v460
    %v462 = vpop.f32.mrb[0].mxu0
    %v463 = vadd.f32 0.0, %v462
    %464 = vdwg.mxu0
    %vm465 = vcmask 261120
    %v467 = vsel %vm465, %v49, 0
    %v470 = vsel %vm465, %v50, 0
    %v473 = vsel %vm465, %v51, 0
    %v476 = vsel %vm465, %v52, 0
    %v479 = vsel %vm465, %v53, 0
    %v482 = vsel %vm465, %v54, 0
    %v485 = vsel %vm465, %v55, 0
    %v488 = vsel %vm465, %v56, 0
    %490 = vmatprep.subr.mxu0 %v66
    %491 = vmatpush1.msra.mxu0 %v65
    %492 = vmatprep.subr.mxu0 %v72
    %493 = vmatpush1.msra.mxu0 %v71
    %494 = vmatprep.subr.mxu0 %v78
    %495 = vmatpush1.msra.mxu0 %v77
    %496 = vmatprep.subr.mxu0 %v84
    %497 = vmatpush1.msra.mxu0 %v83
    %498 = vmatprep.subr.mxu0 0.0
    %499 = vmatpush1.msra.mxu0 0.0
    %500 = vmatprep.subr.mxu0 0.0
    %501 = vmatpush1.msra.mxu0 0.0
    %502 = vmatprep.subr.mxu0 0.0
    %503 = vmatpush1.msra.mxu0 0.0
    %504 = vmatprep.subr.mxu0 0.0
    %505 = vmatpush1.msra.mxu0 0.0
    %506 = vmatprep.subr.mxu0 0.0
    %507 = vmatpush1.msra.mxu0 0.0
    %508 = vmatprep.subr.mxu0 0.0
    %509 = vmatpush1.msra.mxu0 0.0
    %510 = vmatprep.subr.mxu0 0.0
    %511 = vmatpush1.msra.mxu0 0.0
    %512 = vmatprep.subr.mxu0 0.0
    %513 = vmatpush1.msra.mxu0 0.0
    %514 = vmatprep.subr.mxu0 0.0
    %515 = vmatpush1.msra.mxu0 0.0
    %516 = vmatprep.subr.mxu0 0.0
    %517 = vmatpush1.msra.mxu0 0.0
    %518 = vmatprep.subr.mxu0 0.0
    %519 = vmatpush1.msra.mxu0 0.0
    %520 = vmatprep.subr.mxu0 0.0
    %521 = vmatpush1.msra.mxu0 0.0
    %522 = vmatprep.subr.mxu0 0.0
    %523 = vmatpush1.msra.mxu0 0.0
    %524 = vmatprep.subr.mxu0 0.0
    %525 = vmatpush1.msra.mxu0 0.0
    %526 = vmatprep.subr.mxu0 0.0
    %527 = vmatpush1.msra.mxu0 0.0
    %528 = vmatprep.subr.mxu0 0.0
    %529 = vmatpush1.msra.mxu0 0.0
    %530 = vmatprep.subr.mxu0 0.0
    %531 = vmatpush1.msra.mxu0 0.0
    %532 = vmatprep.subr.mxu0 0.0
    %533 = vmatpush1.msra.mxu0 0.0
    %534 = vmatprep.subr.mxu0 0.0
    %535 = vmatpush1.msra.mxu0 0.0
    %536 = vmatprep.subr.mxu0 0.0
    %537 = vmatpush1.msra.mxu0 0.0
    %538 = vmatprep.subr.mxu0 0.0
    %539 = vmatpush1.msra.mxu0 0.0
    %540 = vmatprep.subr.mxu0 0.0
    %541 = vmatpush1.msra.mxu0 0.0
    %542 = vmatprep.subr.mxu0 0.0
    %543 = vmatpush1.msra.mxu0 0.0
    %544 = vmatprep.subr.mxu0 0.0
    %545 = vmatpush1.msra.mxu0 0.0
    %546 = vmatprep.subr.mxu0 0.0
    %547 = vmatpush1.msra.mxu0 0.0
    %548 = vmatprep.subr.mxu0 0.0
    %549 = vmatpush1.msra.mxu0 0.0
    %550 = vmatprep.subr.mxu0 0.0
    %551 = vmatpush1.msra.mxu0 0.0
    %552 = vmatprep.subr.mxu0 0.0
    %553 = vmatpush1.msra.mxu0 0.0
    %554 = vmatprep.mubr.f32.mxu0 0.0
    %555 = vmatmul.mubr.f32.gmra.mrb[0].mxu0 %v467
    %v556 = vpop.f32.mrb[0].mxu0
    %v557 = vadd.f32 %v193, %v556
    %v558 = vpop.f32.mrb[0].mxu0
    %v559 = vadd.f32 %v195, %v558
    %560 = vmatprep.mubr.f32.mxu0 0.0
    %561 = vmatmul.mubr.f32.gmra.mrb[0].mxu0 %v470
    %v562 = vpop.f32.mrb[0].mxu0
    %v563 = vadd.f32 %v199, %v562
    %v564 = vpop.f32.mrb[0].mxu0
    %v565 = vadd.f32 %v201, %v564
    %566 = vmatprep.mubr.f32.mxu0 0.0
    %567 = vmatmul.mubr.f32.gmra.mrb[0].mxu0 %v473
    %v568 = vpop.f32.mrb[0].mxu0
    %v569 = vadd.f32 %v205, %v568
    %v570 = vpop.f32.mrb[0].mxu0
    %v571 = vadd.f32 %v207, %v570
    %572 = vmatprep.mubr.f32.mxu0 0.0
    %573 = vmatmul.mubr.f32.gmra.mrb[0].mxu0 %v476
    %v574 = vpop.f32.mrb[0].mxu0
    %v575 = vadd.f32 %v211, %v574
    %v576 = vpop.f32.mrb[0].mxu0
    %v577 = vadd.f32 %v213, %v576
    %578 = vmatprep.mubr.f32.mxu0 0.0
    %579 = vmatmul.mubr.f32.gmra.mrb[0].mxu0 %v479
    %v580 = vpop.f32.mrb[0].mxu0
    %v581 = vadd.f32 %v217, %v580
    %v582 = vpop.f32.mrb[0].mxu0
    %v583 = vadd.f32 %v219, %v582
    %584 = vmatprep.mubr.f32.mxu0 0.0
    %585 = vmatmul.mubr.f32.gmra.mrb[0].mxu0 %v482
    %v586 = vpop.f32.mrb[0].mxu0
    %v587 = vadd.f32 %v223, %v586
    %v588 = vpop.f32.mrb[0].mxu0
    %v589 = vadd.f32 %v225, %v588
    %590 = vmatprep.mubr.f32.mxu0 0.0
    %591 = vmatmul.mubr.f32.gmra.mrb[0].mxu0 %v485
    %v592 = vpop.f32.mrb[0].mxu0
    %v593 = vadd.f32 %v229, %v592
    %v594 = vpop.f32.mrb[0].mxu0
    %v595 = vadd.f32 %v231, %v594
    %596 = vmatprep.mubr.f32.mxu0 0.0
    %597 = vmatmul.mubr.f32.gmra.mrb[0].mxu0 %v488
    %v598 = vpop.f32.mrb[0].mxu0
    %v599 = vadd.f32 %v235, %v598
    %v600 = vpop.f32.mrb[0].mxu0
    %v601 = vadd.f32 %v237, %v600
    %602 = vdwg.mxu0
    %603 = vmatprep.subr.mxu0 %v68
    %604 = vmatpush1.msra.mxu0 %v67
    %605 = vmatprep.subr.mxu0 %v74
    %606 = vmatpush1.msra.mxu0 %v73
    %607 = vmatprep.subr.mxu0 %v80
    %608 = vmatpush1.msra.mxu0 %v79
    %609 = vmatprep.subr.mxu0 %v86
    %610 = vmatpush1.msra.mxu0 %v85
    %611 = vmatprep.subr.mxu0 0.0
    %612 = vmatpush1.msra.mxu0 0.0
    %613 = vmatprep.subr.mxu0 0.0
    %614 = vmatpush1.msra.mxu0 0.0
    %615 = vmatprep.subr.mxu0 0.0
    %616 = vmatpush1.msra.mxu0 0.0
    %617 = vmatprep.subr.mxu0 0.0
    %618 = vmatpush1.msra.mxu0 0.0
    %619 = vmatprep.subr.mxu0 0.0
    %620 = vmatpush1.msra.mxu0 0.0
    %621 = vmatprep.subr.mxu0 0.0
    %622 = vmatpush1.msra.mxu0 0.0
    %623 = vmatprep.subr.mxu0 0.0
    %624 = vmatpush1.msra.mxu0 0.0
    %625 = vmatprep.subr.mxu0 0.0
    %626 = vmatpush1.msra.mxu0 0.0
    %627 = vmatprep.subr.mxu0 0.0
    %628 = vmatpush1.msra.mxu0 0.0
    %629 = vmatprep.subr.mxu0 0.0
    %630 = vmatpush1.msra.mxu0 0.0
    %631 = vmatprep.subr.mxu0 0.0
    %632 = vmatpush1.msra.mxu0 0.0
    %633 = vmatprep.subr.mxu0 0.0
    %634 = vmatpush1.msra.mxu0 0.0
    %635 = vmatprep.subr.mxu0 0.0
    %636 = vmatpush1.msra.mxu0 0.0
    %637 = vmatprep.subr.mxu0 0.0
    %638 = vmatpush1.msra.mxu0 0.0
    %639 = vmatprep.subr.mxu0 0.0
    %640 = vmatpush1.msra.mxu0 0.0
    %641 = vmatprep.subr.mxu0 0.0
    %642 = vmatpush1.msra.mxu0 0.0
    %643 = vmatprep.subr.mxu0 0.0
    %644 = vmatpush1.msra.mxu0 0.0
    %645 = vmatprep.subr.mxu0 0.0
    %646 = vmatpush1.msra.mxu0 0.0
    %647 = vmatprep.subr.mxu0 0.0
    %648 = vmatpush1.msra.mxu0 0.0
    %649 = vmatprep.subr.mxu0 0.0
    %650 = vmatpush1.msra.mxu0 0.0
    %651 = vmatprep.subr.mxu0 0.0
    %652 = vmatpush1.msra.mxu0 0.0
    %653 = vmatprep.subr.mxu0 0.0
    %654 = vmatpush1.msra.mxu0 0.0
    %655 = vmatprep.subr.mxu0 0.0
    %656 = vmatpush1.msra.mxu0 0.0
    %657 = vmatprep.subr.mxu0 0.0
    %658 = vmatpush1.msra.mxu0 0.0
    %659 = vmatprep.subr.mxu0 0.0
    %660 = vmatpush1.msra.mxu0 0.0
    %661 = vmatprep.subr.mxu0 0.0
    %662 = vmatpush1.msra.mxu0 0.0
    %663 = vmatprep.subr.mxu0 0.0
    %664 = vmatpush1.msra.mxu0 0.0
    %665 = vmatprep.subr.mxu0 0.0
    %666 = vmatpush1.msra.mxu0 0.0
    %667 = vmatprep.mubr.f32.mxu0 0.0
    %668 = vmatmul.mubr.f32.gmra.mrb[0].mxu0 %v467
    %v669 = vpop.f32.mrb[0].mxu0
    %v670 = vadd.f32 %v306, %v669
    %v671 = vpop.f32.mrb[0].mxu0
    %v672 = vadd.f32 %v308, %v671
    %673 = vmatprep.mubr.f32.mxu0 0.0
    %674 = vmatmul.mubr.f32.gmra.mrb[0].mxu0 %v470
    %v675 = vpop.f32.mrb[0].mxu0
    %v676 = vadd.f32 %v312, %v675
    %v677 = vpop.f32.mrb[0].mxu0
    %v678 = vadd.f32 %v314, %v677
    %679 = vmatprep.mubr.f32.mxu0 0.0
    %680 = vmatmul.mubr.f32.gmra.mrb[0].mxu0 %v473
    %v681 = vpop.f32.mrb[0].mxu0
    %v682 = vadd.f32 %v318, %v681
    %v683 = vpop.f32.mrb[0].mxu0
    %v684 = vadd.f32 %v320, %v683
    %685 = vmatprep.mubr.f32.mxu0 0.0
    %686 = vmatmul.mubr.f32.gmra.mrb[0].mxu0 %v476
    %v687 = vpop.f32.mrb[0].mxu0
    %v688 = vadd.f32 %v324, %v687
    %v689 = vpop.f32.mrb[0].mxu0
    %v690 = vadd.f32 %v326, %v689
    %691 = vmatprep.mubr.f32.mxu0 0.0
    %692 = vmatmul.mubr.f32.gmra.mrb[0].mxu0 %v479
    %v693 = vpop.f32.mrb[0].mxu0
    %v694 = vadd.f32 %v330, %v693
    %v695 = vpop.f32.mrb[0].mxu0
    %v696 = vadd.f32 %v332, %v695
    %697 = vmatprep.mubr.f32.mxu0 0.0
    %698 = vmatmul.mubr.f32.gmra.mrb[0].mxu0 %v482
    %v699 = vpop.f32.mrb[0].mxu0
    %v700 = vadd.f32 %v336, %v699
    %v701 = vpop.f32.mrb[0].mxu0
    %v702 = vadd.f32 %v338, %v701
    %703 = vmatprep.mubr.f32.mxu0 0.0
    %704 = vmatmul.mubr.f32.gmra.mrb[0].mxu0 %v485
    %v705 = vpop.f32.mrb[0].mxu0
    %v706 = vadd.f32 %v342, %v705
    %v707 = vpop.f32.mrb[0].mxu0
    %v708 = vadd.f32 %v344, %v707
    %709 = vmatprep.mubr.f32.mxu0 0.0
    %710 = vmatmul.mubr.f32.gmra.mrb[0].mxu0 %v488
    %v711 = vpop.f32.mrb[0].mxu0
    %v712 = vadd.f32 %v348, %v711
    %v713 = vpop.f32.mrb[0].mxu0
    %v714 = vadd.f32 %v350, %v713
    %715 = vdwg.mxu0
    %716 = vmatprep.subr.mxu0 %v70
    %717 = vmatpush1.msra.mxu0 %v69
    %718 = vmatprep.subr.mxu0 %v76
    %719 = vmatpush1.msra.mxu0 %v75
    %720 = vmatprep.subr.mxu0 %v82
    %721 = vmatpush1.msra.mxu0 %v81
    %722 = vmatprep.subr.mxu0 %v88
    %723 = vmatpush1.msra.mxu0 %v87
    %724 = vmatprep.subr.mxu0 0.0
    %725 = vmatpush1.msra.mxu0 0.0
    %726 = vmatprep.subr.mxu0 0.0
    %727 = vmatpush1.msra.mxu0 0.0
    %728 = vmatprep.subr.mxu0 0.0
    %729 = vmatpush1.msra.mxu0 0.0
    %730 = vmatprep.subr.mxu0 0.0
    %731 = vmatpush1.msra.mxu0 0.0
    %732 = vmatprep.subr.mxu0 0.0
    %733 = vmatpush1.msra.mxu0 0.0
    %734 = vmatprep.subr.mxu0 0.0
    %735 = vmatpush1.msra.mxu0 0.0
    %736 = vmatprep.subr.mxu0 0.0
    %737 = vmatpush1.msra.mxu0 0.0
    %738 = vmatprep.subr.mxu0 0.0
    %739 = vmatpush1.msra.mxu0 0.0
    %740 = vmatprep.subr.mxu0 0.0
    %741 = vmatpush1.msra.mxu0 0.0
    %742 = vmatprep.subr.mxu0 0.0
    %743 = vmatpush1.msra.mxu0 0.0
    %744 = vmatprep.subr.mxu0 0.0
    %745 = vmatpush1.msra.mxu0 0.0
    %746 = vmatprep.subr.mxu0 0.0
    %747 = vmatpush1.msra.mxu0 0.0
    %748 = vmatprep.subr.mxu0 0.0
    %749 = vmatpush1.msra.mxu0 0.0
    %750 = vmatprep.subr.mxu0 0.0
    %751 = vmatpush1.msra.mxu0 0.0
    %752 = vmatprep.subr.mxu0 0.0
    %753 = vmatpush1.msra.mxu0 0.0
    %754 = vmatprep.subr.mxu0 0.0
    %755 = vmatpush1.msra.mxu0 0.0
    %756 = vmatprep.subr.mxu0 0.0
    %757 = vmatpush1.msra.mxu0 0.0
    %758 = vmatprep.subr.mxu0 0.0
    %759 = vmatpush1.msra.mxu0 0.0
    %760 = vmatprep.subr.mxu0 0.0
    %761 = vmatpush1.msra.mxu0 0.0
    %762 = vmatprep.subr.mxu0 0.0
    %763 = vmatpush1.msra.mxu0 0.0
    %764 = vmatprep.subr.mxu0 0.0
    %765 = vmatpush1.msra.mxu0 0.0
    %766 = vmatprep.subr.mxu0 0.0
    %767 = vmatpush1.msra.mxu0 0.0
    %768 = vmatprep.subr.mxu0 0.0
    %769 = vmatpush1.msra.mxu0 0.0
    %770 = vmatprep.subr.mxu0 0.0
    %771 = vmatpush1.msra.mxu0 0.0
    %772 = vmatprep.subr.mxu0 0.0
    %773 = vmatpush1.msra.mxu0 0.0
    %774 = vmatprep.subr.mxu0 0.0
    %775 = vmatpush1.msra.mxu0 0.0
    %776 = vmatprep.subr.mxu0 0.0
    %777 = vmatpush1.msra.mxu0 0.0
    %778 = vmatprep.subr.mxu0 0.0
    %779 = vmatpush1.msra.mxu0 0.0
    %780 = vmatprep.mubr.f32.mxu0 0.0
    %781 = vmatmul.mubr.f32.gmra.mrb[0].mxu0 %v467
    %v782 = vpop.f32.mrb[0].mxu0
    %v783 = vadd.f32 %v419, %v782
    %v784 = vpop.f32.mrb[0].mxu0
    %v785 = vadd.f32 %v421, %v784
    %786 = vmatprep.mubr.f32.mxu0 0.0
    %787 = vmatmul.mubr.f32.gmra.mrb[0].mxu0 %v470
    %v788 = vpop.f32.mrb[0].mxu0
    %v789 = vadd.f32 %v425, %v788
    %v790 = vpop.f32.mrb[0].mxu0
    %v791 = vadd.f32 %v427, %v790
    %792 = vmatprep.mubr.f32.mxu0 0.0
    %793 = vmatmul.mubr.f32.gmra.mrb[0].mxu0 %v473
    %v794 = vpop.f32.mrb[0].mxu0
    %v795 = vadd.f32 %v431, %v794
    %v796 = vpop.f32.mrb[0].mxu0
    %v797 = vadd.f32 %v433, %v796
    %798 = vmatprep.mubr.f32.mxu0 0.0
    %799 = vmatmul.mubr.f32.gmra.mrb[0].mxu0 %v476
    %v800 = vpop.f32.mrb[0].mxu0
    %v801 = vadd.f32 %v437, %v800
    %v802 = vpop.f32.mrb[0].mxu0
    %v803 = vadd.f32 %v439, %v802
    %804 = vmatprep.mubr.f32.mxu0 0.0
    %805 = vmatmul.mubr.f32.gmra.mrb[0].mxu0 %v479
    %v806 = vpop.f32.mrb[0].mxu0
    %v807 = vadd.f32 %v443, %v806
    %v808 = vpop.f32.mrb[0].mxu0
    %v809 = vadd.f32 %v445, %v808
    %810 = vmatprep.mubr.f32.mxu0 0.0
    %811 = vmatmul.mubr.f32.gmra.mrb[0].mxu0 %v482
    %v812 = vpop.f32.mrb[0].mxu0
    %v813 = vadd.f32 %v449, %v812
    %v814 = vpop.f32.mrb[0].mxu0
    %v815 = vadd.f32 %v451, %v814
    %816 = vmatprep.mubr.f32.mxu0 0.0
    %817 = vmatmul.mubr.f32.gmra.mrb[0].mxu0 %v485
    %v818 = vpop.f32.mrb[0].mxu0
    %v819 = vadd.f32 %v455, %v818
    %v820 = vpop.f32.mrb[0].mxu0
    %v821 = vadd.f32 %v457, %v820
    %822 = vmatprep.mubr.f32.mxu0 0.0
    %823 = vmatmul.mubr.f32.gmra.mrb[0].mxu0 %v488
    %v824 = vpop.f32.mrb[0].mxu0
    %v825 = vadd.f32 %v461, %v824
    %v826 = vpop.f32.mrb[0].mxu0
    %v827 = vadd.f32 %v463, %v826
    %828 = vdwg.mxu0
    %v829 = vld [vmem:[%s5] sm:$0x3f]
    %v831 = vlaneseq
    %v832 = vshrl.u32 %v831, 7
    %v833 = vsub.s32 0, %v832
    %v834 = vrot.slane %v829, %v833
    %v835 = vlaneseq
    %v836 = vshrl.u32 %v835, 7
    %v837 = vsub.s32 1, %v836
    %v838 = vrot.slane %v829, %v837
    %v839 = vlaneseq
    %v840 = vshrl.u32 %v839, 7
    %v841 = vsub.s32 2, %v840
    %v842 = vrot.slane %v829, %v841
    %v843 = vlaneseq
    %v844 = vshrl.u32 %v843, 7
    %v845 = vsub.s32 3, %v844
    %v846 = vrot.slane %v829, %v845
    %v847 = vlaneseq
    %v848 = vshrl.u32 %v847, 7
    %v849 = vsub.s32 4, %v848
    %v850 = vrot.slane %v829, %v849
    %v851 = vlaneseq
    %v852 = vshrl.u32 %v851, 7
    %v853 = vsub.s32 5, %v852
    %v854 = vrot.slane %v829, %v853
    %v861 = vadd.f32 %v557, %v834
    %v862 = vadd.f32 %v559, %v838
    %v863 = vadd.f32 %v670, %v842
    %v864 = vadd.f32 %v672, %v846
    %v865 = vadd.f32 %v783, %v850
    %v866 = vadd.f32 %v785, %v854
    %v867 = vadd.f32 %v563, %v834
    %v868 = vadd.f32 %v565, %v838
    %v869 = vadd.f32 %v676, %v842
    %v870 = vadd.f32 %v678, %v846
    %v871 = vadd.f32 %v789, %v850
    %v872 = vadd.f32 %v791, %v854
    %v873 = vadd.f32 %v569, %v834
    %v874 = vadd.f32 %v571, %v838
    %v875 = vadd.f32 %v682, %v842
    %v876 = vadd.f32 %v684, %v846
    %v877 = vadd.f32 %v795, %v850
    %v878 = vadd.f32 %v797, %v854
    %v879 = vadd.f32 %v575, %v834
    %v880 = vadd.f32 %v577, %v838
    %v881 = vadd.f32 %v688, %v842
    %v882 = vadd.f32 %v690, %v846
    %v883 = vadd.f32 %v801, %v850
    %v884 = vadd.f32 %v803, %v854
    %v885 = vadd.f32 %v581, %v834
    %v886 = vadd.f32 %v583, %v838
    %v887 = vadd.f32 %v694, %v842
    %v888 = vadd.f32 %v696, %v846
    %v889 = vadd.f32 %v807, %v850
    %v890 = vadd.f32 %v809, %v854
    %v891 = vadd.f32 %v587, %v834
    %v892 = vadd.f32 %v589, %v838
    %v893 = vadd.f32 %v700, %v842
    %v894 = vadd.f32 %v702, %v846
    %v895 = vadd.f32 %v813, %v850
    %v896 = vadd.f32 %v815, %v854
    %v897 = vadd.f32 %v593, %v834
    %v898 = vadd.f32 %v595, %v838
    %v899 = vadd.f32 %v706, %v842
    %v900 = vadd.f32 %v708, %v846
    %v901 = vadd.f32 %v819, %v850
    %v902 = vadd.f32 %v821, %v854
    %v903 = vadd.f32 %v599, %v834
    %v904 = vadd.f32 %v601, %v838
    %v905 = vadd.f32 %v712, %v842
    %v906 = vadd.f32 %v714, %v846
    %v907 = vadd.f32 %v825, %v850
    %v908 = vadd.f32 %v827, %v854
    %909 = vst [vmem:[#allocation2] sm:$0xff] %v861
    %910 = vst [vmem:[#allocation2 + $0x8] sm:$0xff] %v862
    %911 = vst [vmem:[#allocation2 + $0x10] sm:$0xff] %v863
    %912 = vst [vmem:[#allocation2 + $0x18] sm:$0xff] %v864
    %913 = vst [vmem:[#allocation2 + $0x20] sm:$0xff] %v865
    %914 = vst [vmem:[#allocation2 + $0x28] sm:$0xff] %v866
    %915 = vst [vmem:[#allocation2 + $0x30] sm:$0xff] %v867
    %916 = vst [vmem:[#allocation2 + $0x38] sm:$0xff] %v868
    %917 = vst [vmem:[#allocation2 + $0x40] sm:$0xff] %v869
    %918 = vst [vmem:[#allocation2 + $0x48] sm:$0xff] %v870
    %919 = vst [vmem:[#allocation2 + $0x50] sm:$0xff] %v871
    %920 = vst [vmem:[#allocation2 + $0x58] sm:$0xff] %v872
    %921 = vst [vmem:[#allocation2 + $0x60] sm:$0xff] %v873
    %922 = vst [vmem:[#allocation2 + $0x68] sm:$0xff] %v874
    %923 = vst [vmem:[#allocation2 + $0x70] sm:$0xff] %v875
    %924 = vst [vmem:[#allocation2 + $0x78] sm:$0xff] %v876
    %925 = vst [vmem:[#allocation2 + $0x80] sm:$0xff] %v877
    %926 = vst [vmem:[#allocation2 + $0x88] sm:$0xff] %v878
    %927 = vst [vmem:[#allocation2 + $0x90] sm:$0xff] %v879
    %928 = vst [vmem:[#allocation2 + $0x98] sm:$0xff] %v880
    %929 = vst [vmem:[#allocation2 + $0xa0] sm:$0xff] %v881
    %930 = vst [vmem:[#allocation2 + $0xa8] sm:$0xff] %v882
    %931 = vst [vmem:[#allocation2 + $0xb0] sm:$0xff] %v883
    %932 = vst [vmem:[#allocation2 + $0xb8] sm:$0xff] %v884
    %933 = vst [vmem:[#allocation2 + $0xc0] sm:$0xff] %v885
    %934 = vst [vmem:[#allocation2 + $0xc8] sm:$0xff] %v886
    %935 = vst [vmem:[#allocation2 + $0xd0] sm:$0xff] %v887
    %936 = vst [vmem:[#allocation2 + $0xd8] sm:$0xff] %v888
    %937 = vst [vmem:[#allocation2 + $0xe0] sm:$0xff] %v889
    %938 = vst [vmem:[#allocation2 + $0xe8] sm:$0xff] %v890
    %939 = vst [vmem:[#allocation2 + $0xf0] sm:$0xff] %v891
    %940 = vst [vmem:[#allocation2 + $0xf8] sm:$0xff] %v892
    %941 = vst [vmem:[#allocation2 + $0x100] sm:$0xff] %v893
    %942 = vst [vmem:[#allocation2 + $0x108] sm:$0xff] %v894
    %943 = vst [vmem:[#allocation2 + $0x110] sm:$0xff] %v895
    %944 = vst [vmem:[#allocation2 + $0x118] sm:$0xff] %v896
    %945 = vst [vmem:[#allocation2 + $0x120] sm:$0xff] %v897
    %946 = vst [vmem:[#allocation2 + $0x128] sm:$0xff] %v898
    %947 = vst [vmem:[#allocation2 + $0x130] sm:$0xff] %v899
    %948 = vst [vmem:[#allocation2 + $0x138] sm:$0xff] %v900
    %949 = vst [vmem:[#allocation2 + $0x140] sm:$0xff] %v901
    %950 = vst [vmem:[#allocation2 + $0x148] sm:$0xff] %v902
    %951 = vst [vmem:[#allocation2 + $0x150] sm:$0xff] %v903
    %952 = vst [vmem:[#allocation2 + $0x158] sm:$0xff] %v904
    %953 = vst [vmem:[#allocation2 + $0x160] sm:$0xff] %v905
    %954 = vst [vmem:[#allocation2 + $0x168] sm:$0xff] %v906
    %955 = vst [vmem:[#allocation2 + $0x170] sm:$0xff] %v907
    %956 = vst [vmem:[#allocation2 + $0x178] sm:$0xff] %v908
    %v957 = vld [vmem:[%s0] sm:$0xff]
    %vm958 = vcmp.le.s32.totalorder %v957, 0
    %vm959 = vcmp.le.s32.totalorder %v957, 1
    %vm960 = vcmp.le.s32.totalorder %v957, 2
    %vm961 = vcmp.le.s32.totalorder %v957, 3
    %vm962 = vcmp.le.s32.totalorder %v957, 4
    %vm963 = vcmp.le.s32.totalorder %v957, 5
    %vm964 = vcmp.le.s32.totalorder %v957, 6
    %vm965 = vcmp.le.s32.totalorder %v957, 7
    %v966 = vsel %vm958, 1, 0
    %v967 = vsel %vm959, 1, 0
    %v968 = vsel %vm960, 1, 0
    %v969 = vsel %vm961, 1, 0
    %v970 = vsel %vm962, 1, 0
    %v971 = vsel %vm963, 1, 0
    %v972 = vsel %vm964, 1, 0
    %v973 = vsel %vm965, 1, 0
    %v974 = vcvt.s32.f32 %v966
    %v975 = vcvt.s32.f32 %v967
    %v976 = vcvt.s32.f32 %v968
    %v977 = vcvt.s32.f32 %v969
    %v978 = vcvt.s32.f32 %v970
    %v979 = vcvt.s32.f32 %v971
    %v980 = vcvt.s32.f32 %v972
    %v981 = vcvt.s32.f32 %v973
    %v982 = vmul.f32 %v974, 30.0
    %v983 = vmul.f32 %v975, 30.0
    %v984 = vmul.f32 %v976, 30.0
    %v985 = vmul.f32 %v977, 30.0
    %v986 = vmul.f32 %v978, 30.0
    %v987 = vmul.f32 %v979, 30.0
    %v988 = vmul.f32 %v980, 30.0
    %v989 = vmul.f32 %v981, 30.0
    %v990 = vld [vmem:[#allocation2 + $0x10] sm:$0xff]
    %v991 = vld [vmem:[#allocation2 + $0x18] sm:$0xff]
    %v992 = vld [vmem:[#allocation2 + $0x40] sm:$0xff]
    %v993 = vld [vmem:[#allocation2 + $0x48] sm:$0xff]
    %v994 = vld [vmem:[#allocation2 + $0x70] sm:$0xff]
    %v995 = vld [vmem:[#allocation2 + $0x78] sm:$0xff]
    %v996 = vld [vmem:[#allocation2 + $0xa0] sm:$0xff]
    %v997 = vld [vmem:[#allocation2 + $0xa8] sm:$0xff]
    %v998 = vld [vmem:[#allocation2 + $0xd0] sm:$0xff]
    %v999 = vld [vmem:[#allocation2 + $0xd8] sm:$0xff]
    %v1000 = vld [vmem:[#allocation2 + $0x100] sm:$0xff]
    %v1001 = vld [vmem:[#allocation2 + $0x108] sm:$0xff]
    %v1002 = vld [vmem:[#allocation2 + $0x130] sm:$0xff]
    %v1003 = vld [vmem:[#allocation2 + $0x138] sm:$0xff]
    %v1004 = vld [vmem:[#allocation2 + $0x160] sm:$0xff]
    %v1005 = vld [vmem:[#allocation2 + $0x168] sm:$0xff]
    %1007 = vset.pattern.permute.xlu0 0
    %1008 = vperm.xlu0 %1007, %v982
    %v1009 = vpop.permute.xlu0 %1008
    %1012 = vset.pattern.permute.xlu0 0
    %1013 = vperm.xlu0 %1012, %v983
    %v1014 = vpop.permute.xlu0 %1013
    %1017 = vset.pattern.permute.xlu0 0
    %1018 = vperm.xlu0 %1017, %v984
    %v1019 = vpop.permute.xlu0 %1018
    %1022 = vset.pattern.permute.xlu0 0
    %1023 = vperm.xlu0 %1022, %v985
    %v1024 = vpop.permute.xlu0 %1023
    %1027 = vset.pattern.permute.xlu0 0
    %1028 = vperm.xlu0 %1027, %v986
    %v1029 = vpop.permute.xlu0 %1028
    %1032 = vset.pattern.permute.xlu0 0
    %1033 = vperm.xlu0 %1032, %v987
    %v1034 = vpop.permute.xlu0 %1033
    %1037 = vset.pattern.permute.xlu0 0
    %1038 = vperm.xlu0 %1037, %v988
    %v1039 = vpop.permute.xlu0 %1038
    %1042 = vset.pattern.permute.xlu0 0
    %1043 = vperm.xlu0 %1042, %v989
    %v1044 = vpop.permute.xlu0 %1043
    %v1046 = vadd.f32 %v990, %v1009
    %v1047 = vadd.f32 %v991, %v1009
    %v1048 = vadd.f32 %v992, %v1014
    %v1049 = vadd.f32 %v993, %v1014
    %v1050 = vadd.f32 %v994, %v1019
    %v1051 = vadd.f32 %v995, %v1019
    %v1052 = vadd.f32 %v996, %v1024
    %v1053 = vadd.f32 %v997, %v1024
    %v1054 = vadd.f32 %v998, %v1029
    %v1055 = vadd.f32 %v999, %v1029
    %v1056 = vadd.f32 %v1000, %v1034
    %v1057 = vadd.f32 %v1001, %v1034
    %v1058 = vadd.f32 %v1002, %v1039
    %v1059 = vadd.f32 %v1003, %v1039
    %v1060 = vadd.f32 %v1004, %v1044
    %v1061 = vadd.f32 %v1005, %v1044
    %1062 = vst [vmem:[#allocation2 + $0x10] sm:$0xff] %v1046
    %1063 = vst [vmem:[#allocation2 + $0x18] sm:$0xff] %v1047
    %1064 = vst [vmem:[#allocation2 + $0x40] sm:$0xff] %v1048
    %1065 = vst [vmem:[#allocation2 + $0x48] sm:$0xff] %v1049
    %1066 = vst [vmem:[#allocation2 + $0x70] sm:$0xff] %v1050
    %1067 = vst [vmem:[#allocation2 + $0x78] sm:$0xff] %v1051
    %1068 = vst [vmem:[#allocation2 + $0xa0] sm:$0xff] %v1052
    %1069 = vst [vmem:[#allocation2 + $0xa8] sm:$0xff] %v1053
    %1070 = vst [vmem:[#allocation2 + $0xd0] sm:$0xff] %v1054
    %1071 = vst [vmem:[#allocation2 + $0xd8] sm:$0xff] %v1055
    %1072 = vst [vmem:[#allocation2 + $0x100] sm:$0xff] %v1056
    %1073 = vst [vmem:[#allocation2 + $0x108] sm:$0xff] %v1057
    %1074 = vst [vmem:[#allocation2 + $0x130] sm:$0xff] %v1058
    %1075 = vst [vmem:[#allocation2 + $0x138] sm:$0xff] %v1059
    %1076 = vst [vmem:[#allocation2 + $0x160] sm:$0xff] %v1060
    %1077 = vst [vmem:[#allocation2 + $0x168] sm:$0xff] %v1061
    %v1078 = vld [vmem:[#allocation3] sm:$0xff]
    %v1079 = vld [vmem:[#allocation3 + $0x8] sm:$0xff]
    %v1080 = vld [vmem:[#allocation3 + $0x10] sm:$0xff]
    %v1081 = vld [vmem:[#allocation3 + $0x18] sm:$0xff]
    %v1082 = vld [vmem:[#allocation3 + $0x20] sm:$0xff]
    %v1083 = vld [vmem:[#allocation3 + $0x28] sm:$0xff]
    %v1084 = vld [vmem:[#allocation3 + $0x30] sm:$0xff]
    %v1085 = vld [vmem:[#allocation3 + $0x38] sm:$0xff]
    %v1086 = vld [vmem:[#allocation3 + $0x40] sm:$0xff]
    %v1087 = vld [vmem:[#allocation3 + $0x48] sm:$0xff]
    %v1088 = vld [vmem:[#allocation3 + $0x50] sm:$0xff]
    %v1089 = vld [vmem:[#allocation3 + $0x58] sm:$0xff]
    %v1090 = vld [vmem:[#allocation3 + $0x60] sm:$0xff]
    %v1091 = vld [vmem:[#allocation3 + $0x68] sm:$0xff]
    %v1092 = vld [vmem:[#allocation3 + $0x70] sm:$0xff]
    %v1093 = vld [vmem:[#allocation3 + $0x78] sm:$0xff]
    %v1094 = vld [vmem:[#allocation3 + $0x80] sm:$0xff]
    %v1095 = vld [vmem:[#allocation3 + $0x88] sm:$0xff]
    %v1096 = vld [vmem:[#allocation3 + $0x90] sm:$0xff]
    %v1097 = vld [vmem:[#allocation3 + $0x98] sm:$0xff]
    %v1098 = vld [vmem:[#allocation3 + $0xa0] sm:$0xff]
    %v1099 = vld [vmem:[#allocation3 + $0xa8] sm:$0xff]
    %v1100 = vld [vmem:[#allocation3 + $0xb0] sm:$0xff]
    %v1101 = vld [vmem:[#allocation3 + $0xb8] sm:$0xff]
    %v1102 = vld [vmem:[#allocation3 + $0xc0] sm:$0xff]
    %v1103 = vld [vmem:[#allocation3 + $0xc8] sm:$0xff]
    %v1104 = vld [vmem:[#allocation3 + $0xd0] sm:$0xff]
    %v1105 = vld [vmem:[#allocation3 + $0xd8] sm:$0xff]
    %v1106 = vld [vmem:[#allocation3 + $0xe0] sm:$0xff]
    %v1107 = vld [vmem:[#allocation3 + $0xe8] sm:$0xff]
    %v1108 = vld [vmem:[#allocation3 + $0xf0] sm:$0xff]
    %v1109 = vld [vmem:[#allocation3 + $0xf8] sm:$0xff]
    %v1110 = vld [vmem:[#allocation3 + $0x100] sm:$0xff]
    %v1111 = vld [vmem:[#allocation3 + $0x108] sm:$0xff]
    %v1112 = vld [vmem:[#allocation3 + $0x110] sm:$0xff]
    %v1113 = vld [vmem:[#allocation3 + $0x118] sm:$0xff]
    %v1114 = vld [vmem:[#allocation3 + $0x120] sm:$0xff]
    %v1115 = vld [vmem:[#allocation3 + $0x128] sm:$0xff]
    %v1116 = vld [vmem:[#allocation3 + $0x130] sm:$0xff]
    %v1117 = vld [vmem:[#allocation3 + $0x138] sm:$0xff]
    %v1118 = vld [vmem:[#allocation3 + $0x140] sm:$0xff]
    %v1119 = vld [vmem:[#allocation3 + $0x148] sm:$0xff]
    %v1120 = vld [vmem:[#allocation3 + $0x150] sm:$0xff]
    %v1121 = vld [vmem:[#allocation3 + $0x158] sm:$0xff]
    %v1122 = vld [vmem:[#allocation3 + $0x160] sm:$0xff]
    %v1123 = vld [vmem:[#allocation3 + $0x168] sm:$0xff]
    %v1124 = vld [vmem:[#allocation3 + $0x170] sm:$0xff]
    %v1125 = vld [vmem:[#allocation3 + $0x178] sm:$0xff]
    %v1126 = vld [vmem:[#allocation3 + $0x180] sm:$0xff]
    %v1127 = vld [vmem:[#allocation3 + $0x188] sm:$0xff]
    %v1128 = vld [vmem:[#allocation3 + $0x190] sm:$0xff]
    %v1129 = vld [vmem:[#allocation3 + $0x198] sm:$0xff]
    %v1130 = vld [vmem:[#allocation3 + $0x1a0] sm:$0xff]
    %v1131 = vld [vmem:[#allocation3 + $0x1a8] sm:$0xff]
    %v1132 = vld [vmem:[#allocation3 + $0x1b0] sm:$0xff]
    %v1133 = vld [vmem:[#allocation3 + $0x1b8] sm:$0xff]
    %v1134 = vld [vmem:[#allocation3 + $0x1c0] sm:$0xff]
    %v1135 = vld [vmem:[#allocation3 + $0x1c8] sm:$0xff]
    %v1136 = vld [vmem:[#allocation3 + $0x1d0] sm:$0xff]
    %v1137 = vld [vmem:[#allocation3 + $0x1d8] sm:$0xff]
    %v1138 = vld [vmem:[#allocation3 + $0x1e0] sm:$0xff]
    %v1139 = vld [vmem:[#allocation3 + $0x1e8] sm:$0xff]
    %v1140 = vld [vmem:[#allocation3 + $0x1f0] sm:$0xff]
    %v1141 = vld [vmem:[#allocation3 + $0x1f8] sm:$0xff]
    %v1142 = vld [vmem:[#allocation3 + $0x200] sm:$0xff]
    %v1143 = vld [vmem:[#allocation3 + $0x208] sm:$0xff]
    %v1144 = vld [vmem:[#allocation3 + $0x210] sm:$0xff]
    %v1145 = vld [vmem:[#allocation3 + $0x218] sm:$0xff]
    %v1146 = vld [vmem:[#allocation3 + $0x220] sm:$0xff]
    %v1147 = vld [vmem:[#allocation3 + $0x228] sm:$0xff]
    %v1148 = vld [vmem:[#allocation3 + $0x230] sm:$0xff]
    %v1149 = vld [vmem:[#allocation3 + $0x238] sm:$0xff]
    %v1150 = vld [vmem:[#allocation3 + $0x240] sm:$0xff]
    %v1151 = vld [vmem:[#allocation3 + $0x248] sm:$0xff]
    %v1152 = vld [vmem:[#allocation3 + $0x250] sm:$0xff]
    %v1153 = vld [vmem:[#allocation3 + $0x258] sm:$0xff]
    %v1154 = vld [vmem:[#allocation3 + $0x260] sm:$0xff]
    %v1155 = vld [vmem:[#allocation3 + $0x268] sm:$0xff]
    %v1156 = vld [vmem:[#allocation3 + $0x270] sm:$0xff]
    %v1157 = vld [vmem:[#allocation3 + $0x278] sm:$0xff]
    %v1158 = vld [vmem:[#allocation3 + $0x280] sm:$0xff]
    %v1159 = vld [vmem:[#allocation3 + $0x288] sm:$0xff]
    %v1160 = vld [vmem:[#allocation3 + $0x290] sm:$0xff]
    %v1161 = vld [vmem:[#allocation3 + $0x298] sm:$0xff]
    %v1162 = vld [vmem:[#allocation3 + $0x2a0] sm:$0xff]
    %v1163 = vld [vmem:[#allocation3 + $0x2a8] sm:$0xff]
    %v1164 = vld [vmem:[#allocation3 + $0x2b0] sm:$0xff]
    %v1165 = vld [vmem:[#allocation3 + $0x2b8] sm:$0xff]
    %v1166 = vld [vmem:[#allocation3 + $0x2c0] sm:$0xff]
    %v1167 = vld [vmem:[#allocation3 + $0x2c8] sm:$0xff]
    %v1168 = vld [vmem:[#allocation3 + $0x2d0] sm:$0xff]
    %v1169 = vld [vmem:[#allocation3 + $0x2d8] sm:$0xff]
    %v1170 = vld [vmem:[#allocation3 + $0x2e0] sm:$0xff]
    %v1171 = vld [vmem:[#allocation3 + $0x2e8] sm:$0xff]
    %v1172 = vld [vmem:[#allocation3 + $0x2f0] sm:$0xff]
    %v1173 = vld [vmem:[#allocation3 + $0x2f8] sm:$0xff]
    %v1174 = vld [vmem:[#allocation3 + $0x300] sm:$0xff]
    %v1175 = vld [vmem:[#allocation3 + $0x308] sm:$0xff]
    %v1176 = vld [vmem:[#allocation3 + $0x310] sm:$0xff]
    %v1177 = vld [vmem:[#allocation3 + $0x318] sm:$0xff]
    %v1178 = vld [vmem:[#allocation3 + $0x320] sm:$0xff]
    %v1179 = vld [vmem:[#allocation3 + $0x328] sm:$0xff]
    %v1180 = vld [vmem:[#allocation3 + $0x330] sm:$0xff]
    %v1181 = vld [vmem:[#allocation3 + $0x338] sm:$0xff]
    %v1182 = vld [vmem:[#allocation3 + $0x340] sm:$0xff]
    %v1183 = vld [vmem:[#allocation3 + $0x348] sm:$0xff]
    %v1184 = vld [vmem:[#allocation3 + $0x350] sm:$0xff]
    %v1185 = vld [vmem:[#allocation3 + $0x358] sm:$0xff]
    %v1186 = vld [vmem:[#allocation3 + $0x360] sm:$0xff]
    %v1187 = vld [vmem:[#allocation3 + $0x368] sm:$0xff]
    %v1188 = vld [vmem:[#allocation3 + $0x370] sm:$0xff]
    %v1189 = vld [vmem:[#allocation3 + $0x378] sm:$0xff]
    %v1190 = vld [vmem:[#allocation3 + $0x380] sm:$0xff]
    %v1191 = vld [vmem:[#allocation3 + $0x388] sm:$0xff]
    %v1192 = vld [vmem:[#allocation3 + $0x390] sm:$0xff]
    %v1193 = vld [vmem:[#allocation3 + $0x398] sm:$0xff]
    %v1194 = vld [vmem:[#allocation3 + $0x3a0] sm:$0xff]
    %v1195 = vld [vmem:[#allocation3 + $0x3a8] sm:$0xff]
    %v1196 = vld [vmem:[#allocation3 + $0x3b0] sm:$0xff]
    %v1197 = vld [vmem:[#allocation3 + $0x3b8] sm:$0xff]
    %v1198 = vld [vmem:[#allocation3 + $0x3c0] sm:$0xff]
    %v1199 = vld [vmem:[#allocation3 + $0x3c8] sm:$0xff]
    %v1200 = vld [vmem:[#allocation3 + $0x3d0] sm:$0xff]
    %v1201 = vld [vmem:[#allocation3 + $0x3d8] sm:$0xff]
    %v1202 = vld [vmem:[#allocation3 + $0x3e0] sm:$0xff]
    %v1203 = vld [vmem:[#allocation3 + $0x3e8] sm:$0xff]
    %v1204 = vld [vmem:[#allocation3 + $0x3f0] sm:$0xff]
    %v1205 = vld [vmem:[#allocation3 + $0x3f8] sm:$0xff]
    %v1206 = vld [vmem:[#allocation3 + $0x400] sm:$0xff]
    %v1207 = vld [vmem:[#allocation3 + $0x408] sm:$0xff]
    %v1208 = vld [vmem:[#allocation3 + $0x410] sm:$0xff]
    %v1209 = vld [vmem:[#allocation3 + $0x418] sm:$0xff]
    %v1210 = vld [vmem:[#allocation3 + $0x420] sm:$0xff]
    %v1211 = vld [vmem:[#allocation3 + $0x428] sm:$0xff]
    %v1212 = vld [vmem:[#allocation3 + $0x430] sm:$0xff]
    %v1213 = vld [vmem:[#allocation3 + $0x438] sm:$0xff]
    %v1214 = vld [vmem:[#allocation3 + $0x440] sm:$0xff]
    %v1215 = vld [vmem:[#allocation3 + $0x448] sm:$0xff]
    %v1216 = vld [vmem:[#allocation3 + $0x450] sm:$0xff]
    %v1217 = vld [vmem:[#allocation3 + $0x458] sm:$0xff]
    %v1218 = vld [vmem:[#allocation3 + $0x460] sm:$0xff]
    %v1219 = vld [vmem:[#allocation3 + $0x468] sm:$0xff]
    %v1220 = vld [vmem:[#allocation3 + $0x470] sm:$0xff]
    %v1221 = vld [vmem:[#allocation3 + $0x478] sm:$0xff]
    %v1222 = vld [vmem:[#allocation3 + $0x480] sm:$0xff]
    %v1223 = vld [vmem:[#allocation3 + $0x488] sm:$0xff]
    %v1224 = vld [vmem:[#allocation3 + $0x490] sm:$0xff]
    %v1225 = vld [vmem:[#allocation3 + $0x498] sm:$0xff]
    %v1226 = vld [vmem:[#allocation3 + $0x4a0] sm:$0xff]
    %v1227 = vld [vmem:[#allocation3 + $0x4a8] sm:$0xff]
    %v1228 = vld [vmem:[#allocation3 + $0x4b0] sm:$0xff]
    %v1229 = vld [vmem:[#allocation3 + $0x4b8] sm:$0xff]
    %v1230 = vld [vmem:[#allocation3 + $0x4c0] sm:$0xff]
    %v1231 = vld [vmem:[#allocation3 + $0x4c8] sm:$0xff]
    %v1232 = vld [vmem:[#allocation3 + $0x4d0] sm:$0xff]
    %v1233 = vld [vmem:[#allocation3 + $0x4d8] sm:$0xff]
    %v1234 = vld [vmem:[#allocation3 + $0x4e0] sm:$0xff]
    %v1235 = vld [vmem:[#allocation3 + $0x4e8] sm:$0xff]
    %v1236 = vld [vmem:[#allocation3 + $0x4f0] sm:$0xff]
    %v1237 = vld [vmem:[#allocation3 + $0x4f8] sm:$0xff]
    %v1238 = vld [vmem:[#allocation3 + $0x500] sm:$0xff]
    %v1239 = vld [vmem:[#allocation3 + $0x508] sm:$0xff]
    %v1240 = vld [vmem:[#allocation3 + $0x510] sm:$0xff]
    %v1241 = vld [vmem:[#allocation3 + $0x518] sm:$0xff]
    %v1242 = vld [vmem:[#allocation3 + $0x520] sm:$0xff]
    %v1243 = vld [vmem:[#allocation3 + $0x528] sm:$0xff]
    %v1244 = vld [vmem:[#allocation3 + $0x530] sm:$0xff]
    %v1245 = vld [vmem:[#allocation3 + $0x538] sm:$0xff]
    %v1246 = vld [vmem:[#allocation3 + $0x540] sm:$0xff]
    %v1247 = vld [vmem:[#allocation3 + $0x548] sm:$0xff]
    %v1248 = vld [vmem:[#allocation3 + $0x550] sm:$0xff]
    %v1249 = vld [vmem:[#allocation3 + $0x558] sm:$0xff]
    %v1250 = vld [vmem:[#allocation3 + $0x560] sm:$0xff]
    %v1251 = vld [vmem:[#allocation3 + $0x568] sm:$0xff]
    %v1252 = vld [vmem:[#allocation3 + $0x570] sm:$0xff]
    %v1253 = vld [vmem:[#allocation3 + $0x578] sm:$0xff]
    %v1254 = vld [vmem:[#allocation3 + $0x580] sm:$0xff]
    %v1255 = vld [vmem:[#allocation3 + $0x588] sm:$0xff]
    %v1256 = vld [vmem:[#allocation3 + $0x590] sm:$0xff]
    %v1257 = vld [vmem:[#allocation3 + $0x598] sm:$0xff]
    %v1258 = vld [vmem:[#allocation3 + $0x5a0] sm:$0xff]
    %v1259 = vld [vmem:[#allocation3 + $0x5a8] sm:$0xff]
    %v1260 = vld [vmem:[#allocation3 + $0x5b0] sm:$0xff]
    %v1261 = vld [vmem:[#allocation3 + $0x5b8] sm:$0xff]
    %v1262 = vld [vmem:[#allocation3 + $0x5c0] sm:$0xff]
    %v1263 = vld [vmem:[#allocation3 + $0x5c8] sm:$0xff]
    %v1264 = vld [vmem:[#allocation3 + $0x5d0] sm:$0xff]
    %v1265 = vld [vmem:[#allocation3 + $0x5d8] sm:$0xff]
    %v1266 = vld [vmem:[#allocation3 + $0x5e0] sm:$0xff]
    %v1267 = vld [vmem:[#allocation3 + $0x5e8] sm:$0xff]
    %v1268 = vld [vmem:[#allocation3 + $0x5f0] sm:$0xff]
    %v1269 = vld [vmem:[#allocation3 + $0x5f8] sm:$0xff]
    %v1270 = vld [vmem:[%s7] sm:$0x3]
    %v1271 = vld [vmem:[#allocation2] sm:$0xff]
    %v1272 = vld [vmem:[#allocation2 + $0x8] sm:$0xff]
    %v1273 = vld [vmem:[#allocation2 + $0x10] sm:$0xff]
    %v1274 = vld [vmem:[#allocation2 + $0x18] sm:$0xff]
    %v1275 = vld [vmem:[#allocation2 + $0x20] sm:$0xff]
    %v1276 = vld [vmem:[#allocation2 + $0x28] sm:$0xff]
    %1277 = vmatprep.subr.mxu0 %v1079
    %1278 = vmatpush1.msra.mxu0 %v1078
    %1279 = vmatprep.subr.mxu0 %v1085
    %1280 = vmatpush1.msra.mxu0 %v1084
    %1281 = vmatprep.subr.mxu0 %v1091
    %1282 = vmatpush1.msra.mxu0 %v1090
    %1283 = vmatprep.subr.mxu0 %v1097
    %1284 = vmatpush1.msra.mxu0 %v1096
    %1285 = vmatprep.subr.mxu0 %v1103
    %1286 = vmatpush1.msra.mxu0 %v1102
    %1287 = vmatprep.subr.mxu0 %v1109
    %1288 = vmatpush1.msra.mxu0 %v1108
    %1289 = vmatprep.subr.mxu0 %v1115
    %1290 = vmatpush1.msra.mxu0 %v1114
    %1291 = vmatprep.subr.mxu0 %v1121
    %1292 = vmatpush1.msra.mxu0 %v1120
    %1293 = vmatprep.subr.mxu0 %v1127
    %1294 = vmatpush1.msra.mxu0 %v1126
    %1295 = vmatprep.subr.mxu0 %v1133
    %1296 = vmatpush1.msra.mxu0 %v1132
    %1297 = vmatprep.subr.mxu0 %v1139
    %1298 = vmatpush1.msra.mxu0 %v1138
    %1299 = vmatprep.subr.mxu0 %v1145
    %1300 = vmatpush1.msra.mxu0 %v1144
    %1301 = vmatprep.subr.mxu0 %v1151
    %1302 = vmatpush1.msra.mxu0 %v1150
    %1303 = vmatprep.subr.mxu0 %v1157
    %1304 = vmatpush1.msra.mxu0 %v1156
    %1305 = vmatprep.subr.mxu0 %v1163
    %1306 = vmatpush1.msra.mxu0 %v1162
    %1307 = vmatprep.subr.mxu0 %v1169
    %1308 = vmatpush1.msra.mxu0 %v1168
    %1309 = vmatprep.subr.mxu0 %v1175
    %1310 = vmatpush1.msra.mxu0 %v1174
    %1311 = vmatprep.subr.mxu0 %v1181
    %1312 = vmatpush1.msra.mxu0 %v1180
    %1313 = vmatprep.subr.mxu0 %v1187
    %1314 = vmatpush1.msra.mxu0 %v1186
    %1315 = vmatprep.subr.mxu0 %v1193
    %1316 = vmatpush1.msra.mxu0 %v1192
    %1317 = vmatprep.subr.mxu0 %v1199
    %1318 = vmatpush1.msra.mxu0 %v1198
    %1319 = vmatprep.subr.mxu0 %v1205
    %1320 = vmatpush1.msra.mxu0 %v1204
    %1321 = vmatprep.subr.mxu0 %v1211
    %1322 = vmatpush1.msra.mxu0 %v1210
    %1323 = vmatprep.subr.mxu0 %v1217
    %1324 = vmatpush1.msra.mxu0 %v1216
    %1325 = vmatprep.subr.mxu0 %v1223
    %1326 = vmatpush1.msra.mxu0 %v1222
    %1327 = vmatprep.subr.mxu0 %v1229
    %1328 = vmatpush1.msra.mxu0 %v1228
    %1329 = vmatprep.subr.mxu0 %v1235
    %1330 = vmatpush1.msra.mxu0 %v1234
    %1331 = vmatprep.subr.mxu0 %v1241
    %1332 = vmatpush1.msra.mxu0 %v1240
    %1333 = vmatprep.subr.mxu0 %v1247
    %1334 = vmatpush1.msra.mxu0 %v1246
    %1335 = vmatprep.subr.mxu0 %v1253
    %1336 = vmatpush1.msra.mxu0 %v1252
    %1337 = vmatprep.subr.mxu0 %v1259
    %1338 = vmatpush1.msra.mxu0 %v1258
    %1339 = vmatprep.subr.mxu0 %v1265
    %1340 = vmatpush1.msra.mxu0 %v1264
    %1341 = vmatprep.mubr.f32.mxu0 0.0
    %1342 = vmatmul.mubr.f32.gmra.mrb[0].mxu0 0.0
    %v1343 = vpop.f32.mrb[0].mxu0
    %v1344 = vadd.f32 0.0, %v1343
    %v1345 = vpop.f32.mrb[0].mxu0
    %v1346 = vadd.f32 0.0, %v1345
    %1347 = vdwg.mxu0
    %1348 = vmatprep.subr.mxu0 %v1081
    %1349 = vmatpush1.msra.mxu0 %v1080
    %1350 = vmatprep.subr.mxu0 %v1087
    %1351 = vmatpush1.msra.mxu0 %v1086
    %1352 = vmatprep.subr.mxu0 %v1093
    %1353 = vmatpush1.msra.mxu0 %v1092
    %1354 = vmatprep.subr.mxu0 %v1099
    %1355 = vmatpush1.msra.mxu0 %v1098
    %1356 = vmatprep.subr.mxu0 %v1105
    %1357 = vmatpush1.msra.mxu0 %v1104
    %1358 = vmatprep.subr.mxu0 %v1111
    %1359 = vmatpush1.msra.mxu0 %v1110
    %1360 = vmatprep.subr.mxu0 %v1117
    %1361 = vmatpush1.msra.mxu0 %v1116
    %1362 = vmatprep.subr.mxu0 %v1123
    %1363 = vmatpush1.msra.mxu0 %v1122
    %1364 = vmatprep.subr.mxu0 %v1129
    %1365 = vmatpush1.msra.mxu0 %v1128
    %1366 = vmatprep.subr.mxu0 %v1135
    %1367 = vmatpush1.msra.mxu0 %v1134
    %1368 = vmatprep.subr.mxu0 %v1141
    %1369 = vmatpush1.msra.mxu0 %v1140
    %1370 = vmatprep.subr.mxu0 %v1147
    %1371 = vmatpush1.msra.mxu0 %v1146
    %1372 = vmatprep.subr.mxu0 %v1153
    %1373 = vmatpush1.msra.mxu0 %v1152
    %1374 = vmatprep.subr.mxu0 %v1159
    %1375 = vmatpush1.msra.mxu0 %v1158
    %1376 = vmatprep.subr.mxu0 %v1165
    %1377 = vmatpush1.msra.mxu0 %v1164
    %1378 = vmatprep.subr.mxu0 %v1171
    %1379 = vmatpush1.msra.mxu0 %v1170
    %1380 = vmatprep.subr.mxu0 %v1177
    %1381 = vmatpush1.msra.mxu0 %v1176
    %1382 = vmatprep.subr.mxu0 %v1183
    %1383 = vmatpush1.msra.mxu0 %v1182
    %1384 = vmatprep.subr.mxu0 %v1189
    %1385 = vmatpush1.msra.mxu0 %v1188
    %1386 = vmatprep.subr.mxu0 %v1195
    %1387 = vmatpush1.msra.mxu0 %v1194
    %1388 = vmatprep.subr.mxu0 %v1201
    %1389 = vmatpush1.msra.mxu0 %v1200
    %1390 = vmatprep.subr.mxu0 %v1207
    %1391 = vmatpush1.msra.mxu0 %v1206
    %1392 = vmatprep.subr.mxu0 %v1213
    %1393 = vmatpush1.msra.mxu0 %v1212
    %1394 = vmatprep.subr.mxu0 %v1219
    %1395 = vmatpush1.msra.mxu0 %v1218
    %1396 = vmatprep.subr.mxu0 %v1225
    %1397 = vmatpush1.msra.mxu0 %v1224
    %1398 = vmatprep.subr.mxu0 %v1231
    %1399 = vmatpush1.msra.mxu0 %v1230
    %1400 = vmatprep.subr.mxu0 %v1237
    %1401 = vmatpush1.msra.mxu0 %v1236
    %1402 = vmatprep.subr.mxu0 %v1243
    %1403 = vmatpush1.msra.mxu0 %v1242
    %1404 = vmatprep.subr.mxu0 %v1249
    %1405 = vmatpush1.msra.mxu0 %v1248
    %1406 = vmatprep.subr.mxu0 %v1255
    %1407 = vmatpush1.msra.mxu0 %v1254
    %1408 = vmatprep.subr.mxu0 %v1261
    %1409 = vmatpush1.msra.mxu0 %v1260
    %1410 = vmatprep.subr.mxu0 %v1267
    %1411 = vmatpush1.msra.mxu0 %v1266
    %1412 = vmatprep.mubr.f32.mxu0 0.0
    %1413 = vmatmul.mubr.f32.gmra.mrb[0].mxu0 0.0
    %v1414 = vpop.f32.mrb[0].mxu0
    %v1415 = vadd.f32 0.0, %v1414
    %v1416 = vpop.f32.mrb[0].mxu0
    %v1417 = vadd.f32 0.0, %v1416
    %1418 = vdwg.mxu0
    %1419 = vmatprep.subr.mxu0 %v1083
    %1420 = vmatpush1.msra.mxu0 %v1082
    %1421 = vmatprep.subr.mxu0 %v1089
    %1422 = vmatpush1.msra.mxu0 %v1088
    %1423 = vmatprep.subr.mxu0 %v1095
    %1424 = vmatpush1.msra.mxu0 %v1094
    %1425 = vmatprep.subr.mxu0 %v1101
    %1426 = vmatpush1.msra.mxu0 %v1100
    %1427 = vmatprep.subr.mxu0 %v1107
    %1428 = vmatpush1.msra.mxu0 %v1106
    %1429 = vmatprep.subr.mxu0 %v1113
    %1430 = vmatpush1.msra.mxu0 %v1112
    %1431 = vmatprep.subr.mxu0 %v1119
    %1432 = vmatpush1.msra.mxu0 %v1118
    %1433 = vmatprep.subr.mxu0 %v1125
    %1434 = vmatpush1.msra.mxu0 %v1124
    %1435 = vmatprep.subr.mxu0 %v1131
    %1436 = vmatpush1.msra.mxu0 %v1130
    %1437 = vmatprep.subr.mxu0 %v1137
    %1438 = vmatpush1.msra.mxu0 %v1136
    %1439 = vmatprep.subr.mxu0 %v1143
    %1440 = vmatpush1.msra.mxu0 %v1142
    %1441 = vmatprep.subr.mxu0 %v1149
    %1442 = vmatpush1.msra.mxu0 %v1148
    %1443 = vmatprep.subr.mxu0 %v1155
    %1444 = vmatpush1.msra.mxu0 %v1154
    %1445 = vmatprep.subr.mxu0 %v1161
    %1446 = vmatpush1.msra.mxu0 %v1160
    %1447 = vmatprep.subr.mxu0 %v1167
    %1448 = vmatpush1.msra.mxu0 %v1166
    %1449 = vmatprep.subr.mxu0 %v1173
    %1450 = vmatpush1.msra.mxu0 %v1172
    %1451 = vmatprep.subr.mxu0 %v1179
    %1452 = vmatpush1.msra.mxu0 %v1178
    %1453 = vmatprep.subr.mxu0 %v1185
    %1454 = vmatpush1.msra.mxu0 %v1184
    %1455 = vmatprep.subr.mxu0 %v1191
    %1456 = vmatpush1.msra.mxu0 %v1190
    %1457 = vmatprep.subr.mxu0 %v1197
    %1458 = vmatpush1.msra.mxu0 %v1196
    %1459 = vmatprep.subr.mxu0 %v1203
    %1460 = vmatpush1.msra.mxu0 %v1202
    %1461 = vmatprep.subr.mxu0 %v1209
    %1462 = vmatpush1.msra.mxu0 %v1208
    %1463 = vmatprep.subr.mxu0 %v1215
    %1464 = vmatpush1.msra.mxu0 %v1214
    %1465 = vmatprep.subr.mxu0 %v1221
    %1466 = vmatpush1.msra.mxu0 %v1220
    %1467 = vmatprep.subr.mxu0 %v1227
    %1468 = vmatpush1.msra.mxu0 %v1226
    %1469 = vmatprep.subr.mxu0 %v1233
    %1470 = vmatpush1.msra.mxu0 %v1232
    %1471 = vmatprep.subr.mxu0 %v1239
    %1472 = vmatpush1.msra.mxu0 %v1238
    %1473 = vmatprep.subr.mxu0 %v1245
    %1474 = vmatpush1.msra.mxu0 %v1244
    %1475 = vmatprep.subr.mxu0 %v1251
    %1476 = vmatpush1.msra.mxu0 %v1250
    %1477 = vmatprep.subr.mxu0 %v1257
    %1478 = vmatpush1.msra.mxu0 %v1256
    %1479 = vmatprep.subr.mxu0 %v1263
    %1480 = vmatpush1.msra.mxu0 %v1262
    %1481 = vmatprep.subr.mxu0 %v1269
    %1482 = vmatpush1.msra.mxu0 %v1268
    %1483 = vmatprep.mubr.f32.mxu0 0.0
    %1484 = vmatmul.mubr.f32.gmra.mrb[0].mxu0 0.0
    %v1485 = vpop.f32.mrb[0].mxu0
    %v1486 = vadd.f32 0.0, %v1485
    %v1487 = vpop.f32.mrb[0].mxu0
    %v1488 = vadd.f32 0.0, %v1487
    %1489 = vdwg.mxu0
    %v1490 = vadd.f32 %v1271, %v1344
    %v1491 = vadd.f32 %v1272, %v1346
    %v1492 = vxor.u32 %v1490, 2147483648
    %v1493 = vxor.u32 %v1491, 2147483648
    %v1494 = vmul.f32 %v1492, 1.442695
    %v1495 = vpow.pop %v1494
    %v1496 = vmul.f32 %v1493, 1.442695
    %v1497 = vpow.pop %v1496
    %v1498 = vadd.f32 %v1495, 1.0
    %v1499 = vadd.f32 %v1497, 1.0
    %v1500 = vrcp.pop %v1498
    %v1501 = vmul.f32 1.0, %v1500
    %v1502 = vrcp.pop %v1499
    %v1503 = vmul.f32 1.0, %v1502
    %v1504 = vadd.f32 %v1273, %v1415
    %v1505 = vadd.f32 %v1274, %v1417
    %v1506 = vxor.u32 %v1504, 2147483648
    %v1507 = vxor.u32 %v1505, 2147483648
    %v1508 = vmul.f32 %v1506, 1.442695
    %v1509 = vpow.pop %v1508
    %v1510 = vmul.f32 %v1507, 1.442695
    %v1511 = vpow.pop %v1510
    %v1512 = vadd.f32 %v1509, 1.0
    %v1513 = vadd.f32 %v1511, 1.0
    %v1514 = vrcp.pop %v1512
    %v1515 = vmul.f32 1.0, %v1514
    %v1516 = vrcp.pop %v1513
    %v1517 = vmul.f32 1.0, %v1516
    %v1519 = vlaneseq
    %v1520 = vshrl.u32 %v1519, 7
    %v1521 = vsub.s32 0, %v1520
    %v1522 = vrot.slane %v1270, %v1521
    %v1523 = vlaneseq
    %v1524 = vshrl.u32 %v1523, 7
    %v1525 = vsub.s32 1, %v1524
    %v1526 = vrot.slane %v1270, %v1525
    %v1529 = vadd.f32 %v1486, %v1522
    %v1530 = vadd.f32 %v1488, %v1526
    %v1531 = vmul.f32 %v1501, %v1529
    %v1532 = vmul.f32 %v1503, %v1530
    %v1533 = vadd.f32 %v1275, %v1531
    %v1534 = vadd.f32 %v1276, %v1532
    %v1535 = vtanh.pop %v1533
    %v1536 = vtanh.pop %v1534
    %v1537 = vsub.f32 1.0, %v1515
    %v1538 = vsub.f32 1.0, %v1517
    %v1539 = vmul.f32 %v1537, %v1535
    %v1540 = vmul.f32 %v1538, %v1536
    %v1541 = vmul.f32 %v1515, 0.0
    %v1542 = vmul.f32 %v1517, 0.0
    %v1543 = vadd.f32 %v1539, %v1541
    %v1544 = vadd.f32 %v1540, %v1542
    %s1545 = scalar_lea.vmem [#allocation2], 48
    %v1546 = vld [vmem:[%s1545] sm:$0xff]
    %v1547 = vld [vmem:[%s1545 + $0x8] sm:$0xff]
    %v1548 = vld [vmem:[%s1545 + $0x10] sm:$0xff]
    %v1549 = vld [vmem:[%s1545 + $0x18] sm:$0xff]
    %v1550 = vld [vmem:[%s1545 + $0x20] sm:$0xff]
    %v1551 = vld [vmem:[%s1545 + $0x28] sm:$0xff]
    %1552 = vmatprep.subr.mxu0 %v1079
    %1553 = vmatpush1.msra.mxu0 %v1078
    %1554 = vmatprep.subr.mxu0 %v1085
    %1555 = vmatpush1.msra.mxu0 %v1084
    %1556 = vmatprep.subr.mxu0 %v1091
    %1557 = vmatpush1.msra.mxu0 %v1090
    %1558 = vmatprep.subr.mxu0 %v1097
    %1559 = vmatpush1.msra.mxu0 %v1096
    %1560 = vmatprep.subr.mxu0 %v1103
    %1561 = vmatpush1.msra.mxu0 %v1102
    %1562 = vmatprep.subr.mxu0 %v1109
    %1563 = vmatpush1.msra.mxu0 %v1108
    %1564 = vmatprep.subr.mxu0 %v1115
    %1565 = vmatpush1.msra.mxu0 %v1114
    %1566 = vmatprep.subr.mxu0 %v1121
    %1567 = vmatpush1.msra.mxu0 %v1120
    %1568 = vmatprep.subr.mxu0 %v1127
    %1569 = vmatpush1.msra.mxu0 %v1126
    %1570 = vmatprep.subr.mxu0 %v1133
    %1571 = vmatpush1.msra.mxu0 %v1132
    %1572 = vmatprep.subr.mxu0 %v1139
    %1573 = vmatpush1.msra.mxu0 %v1138
    %1574 = vmatprep.subr.mxu0 %v1145
    %1575 = vmatpush1.msra.mxu0 %v1144
    %1576 = vmatprep.subr.mxu0 %v1151
    %1577 = vmatpush1.msra.mxu0 %v1150
    %1578 = vmatprep.subr.mxu0 %v1157
    %1579 = vmatpush1.msra.mxu0 %v1156
    %1580 = vmatprep.subr.mxu0 %v1163
    %1581 = vmatpush1.msra.mxu0 %v1162
    %1582 = vmatprep.subr.mxu0 %v1169
    %1583 = vmatpush1.msra.mxu0 %v1168
    %1584 = vmatprep.subr.mxu0 %v1175
    %1585 = vmatpush1.msra.mxu0 %v1174
    %1586 = vmatprep.subr.mxu0 %v1181
    %1587 = vmatpush1.msra.mxu0 %v1180
    %1588 = vmatprep.subr.mxu0 %v1187
    %1589 = vmatpush1.msra.mxu0 %v1186
    %1590 = vmatprep.subr.mxu0 %v1193
    %1591 = vmatpush1.msra.mxu0 %v1192
    %1592 = vmatprep.subr.mxu0 %v1199
    %1593 = vmatpush1.msra.mxu0 %v1198
    %1594 = vmatprep.subr.mxu0 %v1205
    %1595 = vmatpush1.msra.mxu0 %v1204
    %1596 = vmatprep.subr.mxu0 %v1211
    %1597 = vmatpush1.msra.mxu0 %v1210
    %1598 = vmatprep.subr.mxu0 %v1217
    %1599 = vmatpush1.msra.mxu0 %v1216
    %1600 = vmatprep.subr.mxu0 %v1223
    %1601 = vmatpush1.msra.mxu0 %v1222
    %1602 = vmatprep.subr.mxu0 %v1229
    %1603 = vmatpush1.msra.mxu0 %v1228
    %1604 = vmatprep.subr.mxu0 %v1235
    %1605 = vmatpush1.msra.mxu0 %v1234
    %1606 = vmatprep.subr.mxu0 %v1241
    %1607 = vmatpush1.msra.mxu0 %v1240
    %1608 = vmatprep.subr.mxu0 %v1247
    %1609 = vmatpush1.msra.mxu0 %v1246
    %1610 = vmatprep.subr.mxu0 %v1253
    %1611 = vmatpush1.msra.mxu0 %v1252
    %1612 = vmatprep.subr.mxu0 %v1259
    %1613 = vmatpush1.msra.mxu0 %v1258
    %1614 = vmatprep.subr.mxu0 %v1265
    %1615 = vmatpush1.msra.mxu0 %v1264
    %1616 = vmatprep.mubr.f32.mxu0 %v1544
    %1617 = vmatmul.mubr.f32.gmra.mrb[0].mxu0 %v1543
    %v1618 = vpop.f32.mrb[0].mxu0
    %v1619 = vadd.f32 0.0, %v1618
    %v1620 = vpop.f32.mrb[0].mxu0
    %v1621 = vadd.f32 0.0, %v1620
    %1622 = vdwg.mxu0
    %1623 = vmatprep.subr.mxu0 %v1081
    %1624 = vmatpush1.msra.mxu0 %v1080
    %1625 = vmatprep.subr.mxu0 %v1087
    %1626 = vmatpush1.msra.mxu0 %v1086
    %1627 = vmatprep.subr.mxu0 %v1093
    %1628 = vmatpush1.msra.mxu0 %v1092
    %1629 = vmatprep.subr.mxu0 %v1099
    %1630 = vmatpush1.msra.mxu0 %v1098
    %1631 = vmatprep.subr.mxu0 %v1105
    %1632 = vmatpush1.msra.mxu0 %v1104
    %1633 = vmatprep.subr.mxu0 %v1111
    %1634 = vmatpush1.msra.mxu0 %v1110
    %1635 = vmatprep.subr.mxu0 %v1117
    %1636 = vmatpush1.msra.mxu0 %v1116
    %1637 = vmatprep.subr.mxu0 %v1123
    %1638 = vmatpush1.msra.mxu0 %v1122
    %1639 = vmatprep.subr.mxu0 %v1129
    %1640 = vmatpush1.msra.mxu0 %v1128
    %1641 = vmatprep.subr.mxu0 %v1135
    %1642 = vmatpush1.msra.mxu0 %v1134
    %1643 = vmatprep.subr.mxu0 %v1141
    %1644 = vmatpush1.msra.mxu0 %v1140
    %1645 = vmatprep.subr.mxu0 %v1147
    %1646 = vmatpush1.msra.mxu0 %v1146
    %1647 = vmatprep.subr.mxu0 %v1153
    %1648 = vmatpush1.msra.mxu0 %v1152
    %1649 = vmatprep.subr.mxu0 %v1159
    %1650 = vmatpush1.msra.mxu0 %v1158
    %1651 = vmatprep.subr.mxu0 %v1165
    %1652 = vmatpush1.msra.mxu0 %v1164
    %1653 = vmatprep.subr.mxu0 %v1171
    %1654 = vmatpush1.msra.mxu0 %v1170
    %1655 = vmatprep.subr.mxu0 %v1177
    %1656 = vmatpush1.msra.mxu0 %v1176
    %1657 = vmatprep.subr.mxu0 %v1183
    %1658 = vmatpush1.msra.mxu0 %v1182
    %1659 = vmatprep.subr.mxu0 %v1189
    %1660 = vmatpush1.msra.mxu0 %v1188
    %1661 = vmatprep.subr.mxu0 %v1195
    %1662 = vmatpush1.msra.mxu0 %v1194
    %1663 = vmatprep.subr.mxu0 %v1201
    %1664 = vmatpush1.msra.mxu0 %v1200
    %1665 = vmatprep.subr.mxu0 %v1207
    %1666 = vmatpush1.msra.mxu0 %v1206
    %1667 = vmatprep.subr.mxu0 %v1213
    %1668 = vmatpush1.msra.mxu0 %v1212
    %1669 = vmatprep.subr.mxu0 %v1219
    %1670 = vmatpush1.msra.mxu0 %v1218
    %1671 = vmatprep.subr.mxu0 %v1225
    %1672 = vmatpush1.msra.mxu0 %v1224
    %1673 = vmatprep.subr.mxu0 %v1231
    %1674 = vmatpush1.msra.mxu0 %v1230
    %1675 = vmatprep.subr.mxu0 %v1237
    %1676 = vmatpush1.msra.mxu0 %v1236
    %1677 = vmatprep.subr.mxu0 %v1243
    %1678 = vmatpush1.msra.mxu0 %v1242
    %1679 = vmatprep.subr.mxu0 %v1249
    %1680 = vmatpush1.msra.mxu0 %v1248
    %1681 = vmatprep.subr.mxu0 %v1255
    %1682 = vmatpush1.msra.mxu0 %v1254
    %1683 = vmatprep.subr.mxu0 %v1261
    %1684 = vmatpush1.msra.mxu0 %v1260
    %1685 = vmatprep.subr.mxu0 %v1267
    %1686 = vmatpush1.msra.mxu0 %v1266
    %1687 = vmatprep.mubr.f32.mxu0 %v1544
    %1688 = vmatmul.mubr.f32.gmra.mrb[0].mxu0 %v1543
    %v1689 = vpop.f32.mrb[0].mxu0
    %v1690 = vadd.f32 0.0, %v1689
    %v1691 = vpop.f32.mrb[0].mxu0
    %v1692 = vadd.f32 0.0, %v1691
    %1693 = vdwg.mxu0
    %1694 = vmatprep.subr.mxu0 %v1083
    %1695 = vmatpush1.msra.mxu0 %v1082
    %1696 = vmatprep.subr.mxu0 %v1089
    %1697 = vmatpush1.msra.mxu0 %v1088
    %1698 = vmatprep.subr.mxu0 %v1095
    %1699 = vmatpush1.msra.mxu0 %v1094
    %1700 = vmatprep.subr.mxu0 %v1101
    %1701 = vmatpush1.msra.mxu0 %v1100
    %1702 = vmatprep.subr.mxu0 %v1107
    %1703 = vmatpush1.msra.mxu0 %v1106
    %1704 = vmatprep.subr.mxu0 %v1113
    %1705 = vmatpush1.msra.mxu0 %v1112
    %1706 = vmatprep.subr.mxu0 %v1119
    %1707 = vmatpush1.msra.mxu0 %v1118
    %1708 = vmatprep.subr.mxu0 %v1125
    %1709 = vmatpush1.msra.mxu0 %v1124
    %1710 = vmatprep.subr.mxu0 %v1131
    %1711 = vmatpush1.msra.mxu0 %v1130
    %1712 = vmatprep.subr.mxu0 %v1137
    %1713 = vmatpush1.msra.mxu0 %v1136
    %1714 = vmatprep.subr.mxu0 %v1143
    %1715 = vmatpush1.msra.mxu0 %v1142
    %1716 = vmatprep.subr.mxu0 %v1149
    %1717 = vmatpush1.msra.mxu0 %v1148
    %1718 = vmatprep.subr.mxu0 %v1155
    %1719 = vmatpush1.msra.mxu0 %v1154
    %1720 = vmatprep.subr.mxu0 %v1161
    %1721 = vmatpush1.msra.mxu0 %v1160
    %1722 = vmatprep.subr.mxu0 %v1167
    %1723 = vmatpush1.msra.mxu0 %v1166
    %1724 = vmatprep.subr.mxu0 %v1173
    %1725 = vmatpush1.msra.mxu0 %v1172
    %1726 = vmatprep.subr.mxu0 %v1179
    %1727 = vmatpush1.msra.mxu0 %v1178
    %1728 = vmatprep.subr.mxu0 %v1185
    %1729 = vmatpush1.msra.mxu0 %v1184
    %1730 = vmatprep.subr.mxu0 %v1191
    %1731 = vmatpush1.msra.mxu0 %v1190
    %1732 = vmatprep.subr.mxu0 %v1197
    %1733 = vmatpush1.msra.mxu0 %v1196
    %1734 = vmatprep.subr.mxu0 %v1203
    %1735 = vmatpush1.msra.mxu0 %v1202
    %1736 = vmatprep.subr.mxu0 %v1209
    %1737 = vmatpush1.msra.mxu0 %v1208
    %1738 = vmatprep.subr.mxu0 %v1215
    %1739 = vmatpush1.msra.mxu0 %v1214
    %1740 = vmatprep.subr.mxu0 %v1221
    %1741 = vmatpush1.msra.mxu0 %v1220
    %1742 = vmatprep.subr.mxu0 %v1227
    %1743 = vmatpush1.msra.mxu0 %v1226
    %1744 = vmatprep.subr.mxu0 %v1233
    %1745 = vmatpush1.msra.mxu0 %v1232
    %1746 = vmatprep.subr.mxu0 %v1239
    %1747 = vmatpush1.msra.mxu0 %v1238
    %1748 = vmatprep.subr.mxu0 %v1245
    %1749 = vmatpush1.msra.mxu0 %v1244
    %1750 = vmatprep.subr.mxu0 %v1251
    %1751 = vmatpush1.msra.mxu0 %v1250
    %1752 = vmatprep.subr.mxu0 %v1257
    %1753 = vmatpush1.msra.mxu0 %v1256
    %1754 = vmatprep.subr.mxu0 %v1263
    %1755 = vmatpush1.msra.mxu0 %v1262
    %1756 = vmatprep.subr.mxu0 %v1269
    %1757 = vmatpush1.msra.mxu0 %v1268
    %1758 = vmatprep.mubr.f32.mxu0 %v1544
    %1759 = vmatmul.mubr.f32.gmra.mrb[0].mxu0 %v1543
    %v1760 = vpop.f32.mrb[0].mxu0
    %v1761 = vadd.f32 0.0, %v1760
    %v1762 = vpop.f32.mrb[0].mxu0
    %v1763 = vadd.f32 0.0, %v1762
    %1764 = vdwg.mxu0
    %v1765 = vadd.f32 %v1546, %v1619
    %v1766 = vadd.f32 %v1547, %v1621
    %v1767 = vxor.u32 %v1765, 2147483648
    %v1768 = vxor.u32 %v1766, 2147483648
    %v1769 = vmul.f32 %v1767, 1.442695
    %v1770 = vpow.pop %v1769
    %v1771 = vmul.f32 %v1768, 1.442695
    %v1772 = vpow.pop %v1771
    %v1773 = vadd.f32 %v1770, 1.0
    %v1774 = vadd.f32 %v1772, 1.0
    %v1775 = vrcp.pop %v1773
    %v1776 = vmul.f32 1.0, %v1775
    %v1777 = vrcp.pop %v1774
    %v1778 = vmul.f32 1.0, %v1777
    %v1779 = vadd.f32 %v1548, %v1690
    %v1780 = vadd.f32 %v1549, %v1692
    %v1781 = vxor.u32 %v1779, 2147483648
    %v1782 = vxor.u32 %v1780, 2147483648
    %v1783 = vmul.f32 %v1781, 1.442695
    %v1784 = vpow.pop %v1783
    %v1785 = vmul.f32 %v1782, 1.442695
    %v1786 = vpow.pop %v1785
    %v1787 = vadd.f32 %v1784, 1.0
    %v1788 = vadd.f32 %v1786, 1.0
    %v1789 = vrcp.pop %v1787
    %v1790 = vmul.f32 1.0, %v1789
    %v1791 = vrcp.pop %v1788
    %v1792 = vmul.f32 1.0, %v1791
    %v1793 = vadd.f32 %v1761, %v1522
    %v1794 = vadd.f32 %v1763, %v1526
    %v1795 = vmul.f32 %v1776, %v1793
    %v1796 = vmul.f32 %v1778, %v1794
    %v1797 = vadd.f32 %v1550, %v1795
    %v1798 = vadd.f32 %v1551, %v1796
    %v1799 = vtanh.pop %v1797
    %v1800 = vtanh.pop %v1798
    %v1801 = vsub.f32 1.0, %v1790
    %v1802 = vsub.f32 1.0, %v1792
    %v1803 = vmul.f32 %v1801, %v1799
    %v1804 = vmul.f32 %v1802, %v1800
    %v1805 = vmul.f32 %v1790, %v1543
    %v1806 = vmul.f32 %v1792, %v1544
    %v1807 = vadd.f32 %v1803, %v1805
    %v1808 = vadd.f32 %v1804, %v1806
    %s1809 = scalar_lea.vmem [#allocation2], 96
    %v1810 = vld [vmem:[%s1809] sm:$0xff]
    %v1811 = vld [vmem:[%s1809 + $0x8] sm:$0xff]
    %v1812 = vld [vmem:[%s1809 + $0x10] sm:$0xff]
    %v1813 = vld [vmem:[%s1809 + $0x18] sm:$0xff]
    %v1814 = vld [vmem:[%s1809 + $0x20] sm:$0xff]
    %v1815 = vld [vmem:[%s1809 + $0x28] sm:$0xff]
    %1816 = vmatprep.subr.mxu0 %v1079
    %1817 = vmatpush1.msra.mxu0 %v1078
    %1818 = vmatprep.subr.mxu0 %v1085
    %1819 = vmatpush1.msra.mxu0 %v1084
    %1820 = vmatprep.subr.mxu0 %v1091
    %1821 = vmatpush1.msra.mxu0 %v1090
    %1822 = vmatprep.subr.mxu0 %v1097
    %1823 = vmatpush1.msra.mxu0 %v1096
    %1824 = vmatprep.subr.mxu0 %v1103
    %1825 = vmatpush1.msra.mxu0 %v1102
    %1826 = vmatprep.subr.mxu0 %v1109
    %1827 = vmatpush1.msra.mxu0 %v1108
    %1828 = vmatprep.subr.mxu0 %v1115
    %1829 = vmatpush1.msra.mxu0 %v1114
    %1830 = vmatprep.subr.mxu0 %v1121
    %1831 = vmatpush1.msra.mxu0 %v1120
    %1832 = vmatprep.subr.mxu0 %v1127
    %1833 = vmatpush1.msra.mxu0 %v1126
    %1834 = vmatprep.subr.mxu0 %v1133
    %1835 = vmatpush1.msra.mxu0 %v1132
    %1836 = vmatprep.subr.mxu0 %v1139
    %1837 = vmatpush1.msra.mxu0 %v1138
    %1838 = vmatprep.subr.mxu0 %v1145
    %1839 = vmatpush1.msra.mxu0 %v1144
    %1840 = vmatprep.subr.mxu0 %v1151
    %1841 = vmatpush1.msra.mxu0 %v1150
    %1842 = vmatprep.subr.mxu0 %v1157
    %1843 = vmatpush1.msra.mxu0 %v1156
    %1844 = vmatprep.subr.mxu0 %v1163
    %1845 = vmatpush1.msra.mxu0 %v1162
    %1846 = vmatprep.subr.mxu0 %v1169
    %1847 = vmatpush1.msra.mxu0 %v1168
    %1848 = vmatprep.subr.mxu0 %v1175
    %1849 = vmatpush1.msra.mxu0 %v1174
    %1850 = vmatprep.subr.mxu0 %v1181
    %1851 = vmatpush1.msra.mxu0 %v1180
    %1852 = vmatprep.subr.mxu0 %v1187
    %1853 = vmatpush1.msra.mxu0 %v1186
    %1854 = vmatprep.subr.mxu0 %v1193
    %1855 = vmatpush1.msra.mxu0 %v1192
    %1856 = vmatprep.subr.mxu0 %v1199
    %1857 = vmatpush1.msra.mxu0 %v1198
    %1858 = vmatprep.subr.mxu0 %v1205
    %1859 = vmatpush1.msra.mxu0 %v1204
    %1860 = vmatprep.subr.mxu0 %v1211
    %1861 = vmatpush1.msra.mxu0 %v1210
    %1862 = vmatprep.subr.mxu0 %v1217
    %1863 = vmatpush1.msra.mxu0 %v1216
    %1864 = vmatprep.subr.mxu0 %v1223
    %1865 = vmatpush1.msra.mxu0 %v1222
    %1866 = vmatprep.subr.mxu0 %v1229
    %1867 = vmatpush1.msra.mxu0 %v1228
    %1868 = vmatprep.subr.mxu0 %v1235
    %1869 = vmatpush1.msra.mxu0 %v1234
    %1870 = vmatprep.subr.mxu0 %v1241
    %1871 = vmatpush1.msra.mxu0 %v1240
    %1872 = vmatprep.subr.mxu0 %v1247
    %1873 = vmatpush1.msra.mxu0 %v1246
    %1874 = vmatprep.subr.mxu0 %v1253
    %1875 = vmatpush1.msra.mxu0 %v1252
    %1876 = vmatprep.subr.mxu0 %v1259
    %1877 = vmatpush1.msra.mxu0 %v1258
    %1878 = vmatprep.subr.mxu0 %v1265
    %1879 = vmatpush1.msra.mxu0 %v1264
    %1880 = vmatprep.mubr.f32.mxu0 %v1808
    %1881 = vmatmul.mubr.f32.gmra.mrb[0].mxu0 %v1807
    %v1882 = vpop.f32.mrb[0].mxu0
    %v1883 = vadd.f32 0.0, %v1882
    %v1884 = vpop.f32.mrb[0].mxu0
    %v1885 = vadd.f32 0.0, %v1884
    %1886 = vdwg.mxu0
    %1887 = vmatprep.subr.mxu0 %v1081
    %1888 = vmatpush1.msra.mxu0 %v1080
    %1889 = vmatprep.subr.mxu0 %v1087
    %1890 = vmatpush1.msra.mxu0 %v1086
    %1891 = vmatprep.subr.mxu0 %v1093
    %1892 = vmatpush1.msra.mxu0 %v1092
    %1893 = vmatprep.subr.mxu0 %v1099
    %1894 = vmatpush1.msra.mxu0 %v1098
    %1895 = vmatprep.subr.mxu0 %v1105
    %1896 = vmatpush1.msra.mxu0 %v1104
    %1897 = vmatprep.subr.mxu0 %v1111
    %1898 = vmatpush1.msra.mxu0 %v1110
    %1899 = vmatprep.subr.mxu0 %v1117
    %1900 = vmatpush1.msra.mxu0 %v1116
    %1901 = vmatprep.subr.mxu0 %v1123
    %1902 = vmatpush1.msra.mxu0 %v1122
    %1903 = vmatprep.subr.mxu0 %v1129
    %1904 = vmatpush1.msra.mxu0 %v1128
    %1905 = vmatprep.subr.mxu0 %v1135
    %1906 = vmatpush1.msra.mxu0 %v1134
    %1907 = vmatprep.subr.mxu0 %v1141
    %1908 = vmatpush1.msra.mxu0 %v1140
    %1909 = vmatprep.subr.mxu0 %v1147
    %1910 = vmatpush1.msra.mxu0 %v1146
    %1911 = vmatprep.subr.mxu0 %v1153
    %1912 = vmatpush1.msra.mxu0 %v1152
    %1913 = vmatprep.subr.mxu0 %v1159
    %1914 = vmatpush1.msra.mxu0 %v1158
    %1915 = vmatprep.subr.mxu0 %v1165
    %1916 = vmatpush1.msra.mxu0 %v1164
    %1917 = vmatprep.subr.mxu0 %v1171
    %1918 = vmatpush1.msra.mxu0 %v1170
    %1919 = vmatprep.subr.mxu0 %v1177
    %1920 = vmatpush1.msra.mxu0 %v1176
    %1921 = vmatprep.subr.mxu0 %v1183
    %1922 = vmatpush1.msra.mxu0 %v1182
    %1923 = vmatprep.subr.mxu0 %v1189
    %1924 = vmatpush1.msra.mxu0 %v1188
    %1925 = vmatprep.subr.mxu0 %v1195
    %1926 = vmatpush1.msra.mxu0 %v1194
    %1927 = vmatprep.subr.mxu0 %v1201
    %1928 = vmatpush1.msra.mxu0 %v1200
    %1929 = vmatprep.subr.mxu0 %v1207
    %1930 = vmatpush1.msra.mxu0 %v1206
    %1931 = vmatprep.subr.mxu0 %v1213
    %1932 = vmatpush1.msra.mxu0 %v1212
    %1933 = vmatprep.subr.mxu0 %v1219
    %1934 = vmatpush1.msra.mxu0 %v1218
    %1935 = vmatprep.subr.mxu0 %v1225
    %1936 = vmatpush1.msra.mxu0 %v1224
    %1937 = vmatprep.subr.mxu0 %v1231
    %1938 = vmatpush1.msra.mxu0 %v1230
    %1939 = vmatprep.subr.mxu0 %v1237
    %1940 = vmatpush1.msra.mxu0 %v1236
    %1941 = vmatprep.subr.mxu0 %v1243
    %1942 = vmatpush1.msra.mxu0 %v1242
    %1943 = vmatprep.subr.mxu0 %v1249
    %1944 = vmatpush1.msra.mxu0 %v1248
    %1945 = vmatprep.subr.mxu0 %v1255
    %1946 = vmatpush1.msra.mxu0 %v1254
    %1947 = vmatprep.subr.mxu0 %v1261
    %1948 = vmatpush1.msra.mxu0 %v1260
    %1949 = vmatprep.subr.mxu0 %v1267
    %1950 = vmatpush1.msra.mxu0 %v1266
    %1951 = vmatprep.mubr.f32.mxu0 %v1808
    %1952 = vmatmul.mubr.f32.gmra.mrb[0].mxu0 %v1807
    %v1953 = vpop.f32.mrb[0].mxu0
    %v1954 = vadd.f32 0.0, %v1953
    %v1955 = vpop.f32.mrb[0].mxu0
    %v1956 = vadd.f32 0.0, %v1955
    %1957 = vdwg.mxu0
    %1958 = vmatprep.subr.mxu0 %v1083
    %1959 = vmatpush1.msra.mxu0 %v1082
    %1960 = vmatprep.subr.mxu0 %v1089
    %1961 = vmatpush1.msra.mxu0 %v1088
    %1962 = vmatprep.subr.mxu0 %v1095
    %1963 = vmatpush1.msra.mxu0 %v1094
    %1964 = vmatprep.subr.mxu0 %v1101
    %1965 = vmatpush1.msra.mxu0 %v1100
    %1966 = vmatprep.subr.mxu0 %v1107
    %1967 = vmatpush1.msra.mxu0 %v1106
    %1968 = vmatprep.subr.mxu0 %v1113
    %1969 = vmatpush1.msra.mxu0 %v1112
    %1970 = vmatprep.subr.mxu0 %v1119
    %1971 = vmatpush1.msra.mxu0 %v1118
    %1972 = vmatprep.subr.mxu0 %v1125
    %1973 = vmatpush1.msra.mxu0 %v1124
    %1974 = vmatprep.subr.mxu0 %v1131
    %1975 = vmatpush1.msra.mxu0 %v1130
    %1976 = vmatprep.subr.mxu0 %v1137
    %1977 = vmatpush1.msra.mxu0 %v1136
    %1978 = vmatprep.subr.mxu0 %v1143
    %1979 = vmatpush1.msra.mxu0 %v1142
    %1980 = vmatprep.subr.mxu0 %v1149
    %1981 = vmatpush1.msra.mxu0 %v1148
    %1982 = vmatprep.subr.mxu0 %v1155
    %1983 = vmatpush1.msra.mxu0 %v1154
    %1984 = vmatprep.subr.mxu0 %v1161
    %1985 = vmatpush1.msra.mxu0 %v1160
    %1986 = vmatprep.subr.mxu0 %v1167
    %1987 = vmatpush1.msra.mxu0 %v1166
    %1988 = vmatprep.subr.mxu0 %v1173
    %1989 = vmatpush1.msra.mxu0 %v1172
    %1990 = vmatprep.subr.mxu0 %v1179
    %1991 = vmatpush1.msra.mxu0 %v1178
    %1992 = vmatprep.subr.mxu0 %v1185
    %1993 = vmatpush1.msra.mxu0 %v1184
    %1994 = vmatprep.subr.mxu0 %v1191
    %1995 = vmatpush1.msra.mxu0 %v1190
    %1996 = vmatprep.subr.mxu0 %v1197
    %1997 = vmatpush1.msra.mxu0 %v1196
    %1998 = vmatprep.subr.mxu0 %v1203
    %1999 = vmatpush1.msra.mxu0 %v1202
    %2000 = vmatprep.subr.mxu0 %v1209
    %2001 = vmatpush1.msra.mxu0 %v1208
    %2002 = vmatprep.subr.mxu0 %v1215
    %2003 = vmatpush1.msra.mxu0 %v1214
    %2004 = vmatprep.subr.mxu0 %v1221
    %2005 = vmatpush1.msra.mxu0 %v1220
    %2006 = vmatprep.subr.mxu0 %v1227
    %2007 = vmatpush1.msra.mxu0 %v1226
    %2008 = vmatprep.subr.mxu0 %v1233
    %2009 = vmatpush1.msra.mxu0 %v1232
    %2010 = vmatprep.subr.mxu0 %v1239
    %2011 = vmatpush1.msra.mxu0 %v1238
    %2012 = vmatprep.subr.mxu0 %v1245
    %2013 = vmatpush1.msra.mxu0 %v1244
    %2014 = vmatprep.subr.mxu0 %v1251
    %2015 = vmatpush1.msra.mxu0 %v1250
    %2016 = vmatprep.subr.mxu0 %v1257
    %2017 = vmatpush1.msra.mxu0 %v1256
    %2018 = vmatprep.subr.mxu0 %v1263
    %2019 = vmatpush1.msra.mxu0 %v1262
    %2020 = vmatprep.subr.mxu0 %v1269
    %2021 = vmatpush1.msra.mxu0 %v1268
    %2022 = vmatprep.mubr.f32.mxu0 %v1808
    %2023 = vmatmul.mubr.f32.gmra.mrb[0].mxu0 %v1807
    %v2024 = vpop.f32.mrb[0].mxu0
    %v2025 = vadd.f32 0.0, %v2024
    %v2026 = vpop.f32.mrb[0].mxu0
    %v2027 = vadd.f32 0.0, %v2026
    %2028 = vdwg.mxu0
    %v2029 = vadd.f32 %v1810, %v1883
    %v2030 = vadd.f32 %v1811, %v1885
    %v2031 = vxor.u32 %v2029, 2147483648
    %v2032 = vxor.u32 %v2030, 2147483648
    %v2033 = vmul.f32 %v2031, 1.442695
    %v2034 = vpow.pop %v2033
    %v2035 = vmul.f32 %v2032, 1.442695
    %v2036 = vpow.pop %v2035
    %v2037 = vadd.f32 %v2034, 1.0
    %v2038 = vadd.f32 %v2036, 1.0
    %v2039 = vrcp.pop %v2037
    %v2040 = vmul.f32 1.0, %v2039
    %v2041 = vrcp.pop %v2038
    %v2042 = vmul.f32 1.0, %v2041
    %v2043 = vadd.f32 %v1812, %v1954
    %v2044 = vadd.f32 %v1813, %v1956
    %v2045 = vxor.u32 %v2043, 2147483648
    %v2046 = vxor.u32 %v2044, 2147483648
    %v2047 = vmul.f32 %v2045, 1.442695
    %v2048 = vpow.pop %v2047
    %v2049 = vmul.f32 %v2046, 1.442695
    %v2050 = vpow.pop %v2049
    %v2051 = vadd.f32 %v2048, 1.0
    %v2052 = vadd.f32 %v2050, 1.0
    %v2053 = vrcp.pop %v2051
    %v2054 = vmul.f32 1.0, %v2053
    %v2055 = vrcp.pop %v2052
    %v2056 = vmul.f32 1.0, %v2055
    %v2057 = vadd.f32 %v2025, %v1522
    %v2058 = vadd.f32 %v2027, %v1526
    %v2059 = vmul.f32 %v2040, %v2057
    %v2060 = vmul.f32 %v2042, %v2058
    %v2061 = vadd.f32 %v1814, %v2059
    %v2062 = vadd.f32 %v1815, %v2060
    %v2063 = vtanh.pop %v2061
    %v2064 = vtanh.pop %v2062
    %v2065 = vsub.f32 1.0, %v2054
    %v2066 = vsub.f32 1.0, %v2056
    %v2067 = vmul.f32 %v2065, %v2063
    %v2068 = vmul.f32 %v2066, %v2064
    %v2069 = vmul.f32 %v2054, %v1807
    %v2070 = vmul.f32 %v2056, %v1808
    %v2071 = vadd.f32 %v2067, %v2069
    %v2072 = vadd.f32 %v2068, %v2070
    %s2073 = scalar_lea.vmem [#allocation2], 144
    %v2074 = vld [vmem:[%s2073] sm:$0xff]
    %v2075 = vld [vmem:[%s2073 + $0x8] sm:$0xff]
    %v2076 = vld [vmem:[%s2073 + $0x10] sm:$0xff]
    %v2077 = vld [vmem:[%s2073 + $0x18] sm:$0xff]
    %v2078 = vld [vmem:[%s2073 + $0x20] sm:$0xff]
    %v2079 = vld [vmem:[%s2073 + $0x28] sm:$0xff]
    %2080 = vmatprep.subr.mxu0 %v1079
    %2081 = vmatpush1.msra.mxu0 %v1078
    %2082 = vmatprep.subr.mxu0 %v1085
    %2083 = vmatpush1.msra.mxu0 %v1084
    %2084 = vmatprep.subr.mxu0 %v1091
    %2085 = vmatpush1.msra.mxu0 %v1090
    %2086 = vmatprep.subr.mxu0 %v1097
    %2087 = vmatpush1.msra.mxu0 %v1096
    %2088 = vmatprep.subr.mxu0 %v1103
    %2089 = vmatpush1.msra.mxu0 %v1102
    %2090 = vmatprep.subr.mxu0 %v1109
    %2091 = vmatpush1.msra.mxu0 %v1108
    %2092 = vmatprep.subr.mxu0 %v1115
    %2093 = vmatpush1.msra.mxu0 %v1114
    %2094 = vmatprep.subr.mxu0 %v1121
    %2095 = vmatpush1.msra.mxu0 %v1120
    %2096 = vmatprep.subr.mxu0 %v1127
    %2097 = vmatpush1.msra.mxu0 %v1126
    %2098 = vmatprep.subr.mxu0 %v1133
    %2099 = vmatpush1.msra.mxu0 %v1132
    %2100 = vmatprep.subr.mxu0 %v1139
    %2101 = vmatpush1.msra.mxu0 %v1138
    %2102 = vmatprep.subr.mxu0 %v1145
    %2103 = vmatpush1.msra.mxu0 %v1144
    %2104 = vmatprep.subr.mxu0 %v1151
    %2105 = vmatpush1.msra.mxu0 %v1150
    %2106 = vmatprep.subr.mxu0 %v1157
    %2107 = vmatpush1.msra.mxu0 %v1156
    %2108 = vmatprep.subr.mxu0 %v1163
    %2109 = vmatpush1.msra.mxu0 %v1162
    %2110 = vmatprep.subr.mxu0 %v1169
    %2111 = vmatpush1.msra.mxu0 %v1168
    %2112 = vmatprep.subr.mxu0 %v1175
    %2113 = vmatpush1.msra.mxu0 %v1174
    %2114 = vmatprep.subr.mxu0 %v1181
    %2115 = vmatpush1.msra.mxu0 %v1180
    %2116 = vmatprep.subr.mxu0 %v1187
    %2117 = vmatpush1.msra.mxu0 %v1186
    %2118 = vmatprep.subr.mxu0 %v1193
    %2119 = vmatpush1.msra.mxu0 %v1192
    %2120 = vmatprep.subr.mxu0 %v1199
    %2121 = vmatpush1.msra.mxu0 %v1198
    %2122 = vmatprep.subr.mxu0 %v1205
    %2123 = vmatpush1.msra.mxu0 %v1204
    %2124 = vmatprep.subr.mxu0 %v1211
    %2125 = vmatpush1.msra.mxu0 %v1210
    %2126 = vmatprep.subr.mxu0 %v1217
    %2127 = vmatpush1.msra.mxu0 %v1216
    %2128 = vmatprep.subr.mxu0 %v1223
    %2129 = vmatpush1.msra.mxu0 %v1222
    %2130 = vmatprep.subr.mxu0 %v1229
    %2131 = vmatpush1.msra.mxu0 %v1228
    %2132 = vmatprep.subr.mxu0 %v1235
    %2133 = vmatpush1.msra.mxu0 %v1234
    %2134 = vmatprep.subr.mxu0 %v1241
    %2135 = vmatpush1.msra.mxu0 %v1240
    %2136 = vmatprep.subr.mxu0 %v1247
    %2137 = vmatpush1.msra.mxu0 %v1246
    %2138 = vmatprep.subr.mxu0 %v1253
    %2139 = vmatpush1.msra.mxu0 %v1252
    %2140 = vmatprep.subr.mxu0 %v1259
    %2141 = vmatpush1.msra.mxu0 %v1258
    %2142 = vmatprep.subr.mxu0 %v1265
    %2143 = vmatpush1.msra.mxu0 %v1264
    %2144 = vmatprep.mubr.f32.mxu0 %v2072
    %2145 = vmatmul.mubr.f32.gmra.mrb[0].mxu0 %v2071
    %v2146 = vpop.f32.mrb[0].mxu0
    %v2147 = vadd.f32 0.0, %v2146
    %v2148 = vpop.f32.mrb[0].mxu0
    %v2149 = vadd.f32 0.0, %v2148
    %2150 = vdwg.mxu0
    %2151 = vmatprep.subr.mxu0 %v1081
    %2152 = vmatpush1.msra.mxu0 %v1080
    %2153 = vmatprep.subr.mxu0 %v1087
    %2154 = vmatpush1.msra.mxu0 %v1086
    %2155 = vmatprep.subr.mxu0 %v1093
    %2156 = vmatpush1.msra.mxu0 %v1092
    %2157 = vmatprep.subr.mxu0 %v1099
    %2158 = vmatpush1.msra.mxu0 %v1098
    %2159 = vmatprep.subr.mxu0 %v1105
    %2160 = vmatpush1.msra.mxu0 %v1104
    %2161 = vmatprep.subr.mxu0 %v1111
    %2162 = vmatpush1.msra.mxu0 %v1110
    %2163 = vmatprep.subr.mxu0 %v1117
    %2164 = vmatpush1.msra.mxu0 %v1116
    %2165 = vmatprep.subr.mxu0 %v1123
    %2166 = vmatpush1.msra.mxu0 %v1122
    %2167 = vmatprep.subr.mxu0 %v1129
    %2168 = vmatpush1.msra.mxu0 %v1128
    %2169 = vmatprep.subr.mxu0 %v1135
    %2170 = vmatpush1.msra.mxu0 %v1134
    %2171 = vmatprep.subr.mxu0 %v1141
    %2172 = vmatpush1.msra.mxu0 %v1140
    %2173 = vmatprep.subr.mxu0 %v1147
    %2174 = vmatpush1.msra.mxu0 %v1146
    %2175 = vmatprep.subr.mxu0 %v1153
    %2176 = vmatpush1.msra.mxu0 %v1152
    %2177 = vmatprep.subr.mxu0 %v1159
    %2178 = vmatpush1.msra.mxu0 %v1158
    %2179 = vmatprep.subr.mxu0 %v1165
    %2180 = vmatpush1.msra.mxu0 %v1164
    %2181 = vmatprep.subr.mxu0 %v1171
    %2182 = vmatpush1.msra.mxu0 %v1170
    %2183 = vmatprep.subr.mxu0 %v1177
    %2184 = vmatpush1.msra.mxu0 %v1176
    %2185 = vmatprep.subr.mxu0 %v1183
    %2186 = vmatpush1.msra.mxu0 %v1182
    %2187 = vmatprep.subr.mxu0 %v1189
    %2188 = vmatpush1.msra.mxu0 %v1188
    %2189 = vmatprep.subr.mxu0 %v1195
    %2190 = vmatpush1.msra.mxu0 %v1194
    %2191 = vmatprep.subr.mxu0 %v1201
    %2192 = vmatpush1.msra.mxu0 %v1200
    %2193 = vmatprep.subr.mxu0 %v1207
    %2194 = vmatpush1.msra.mxu0 %v1206
    %2195 = vmatprep.subr.mxu0 %v1213
    %2196 = vmatpush1.msra.mxu0 %v1212
    %2197 = vmatprep.subr.mxu0 %v1219
    %2198 = vmatpush1.msra.mxu0 %v1218
    %2199 = vmatprep.subr.mxu0 %v1225
    %2200 = vmatpush1.msra.mxu0 %v1224
    %2201 = vmatprep.subr.mxu0 %v1231
    %2202 = vmatpush1.msra.mxu0 %v1230
    %2203 = vmatprep.subr.mxu0 %v1237
    %2204 = vmatpush1.msra.mxu0 %v1236
    %2205 = vmatprep.subr.mxu0 %v1243
    %2206 = vmatpush1.msra.mxu0 %v1242
    %2207 = vmatprep.subr.mxu0 %v1249
    %2208 = vmatpush1.msra.mxu0 %v1248
    %2209 = vmatprep.subr.mxu0 %v1255
    %2210 = vmatpush1.msra.mxu0 %v1254
    %2211 = vmatprep.subr.mxu0 %v1261
    %2212 = vmatpush1.msra.mxu0 %v1260
    %2213 = vmatprep.subr.mxu0 %v1267
    %2214 = vmatpush1.msra.mxu0 %v1266
    %2215 = vmatprep.mubr.f32.mxu0 %v2072
    %2216 = vmatmul.mubr.f32.gmra.mrb[0].mxu0 %v2071
    %v2217 = vpop.f32.mrb[0].mxu0
    %v2218 = vadd.f32 0.0, %v2217
    %v2219 = vpop.f32.mrb[0].mxu0
    %v2220 = vadd.f32 0.0, %v2219
    %2221 = vdwg.mxu0
    %2222 = vmatprep.subr.mxu0 %v1083
    %2223 = vmatpush1.msra.mxu0 %v1082
    %2224 = vmatprep.subr.mxu0 %v1089
    %2225 = vmatpush1.msra.mxu0 %v1088
    %2226 = vmatprep.subr.mxu0 %v1095
    %2227 = vmatpush1.msra.mxu0 %v1094
    %2228 = vmatprep.subr.mxu0 %v1101
    %2229 = vmatpush1.msra.mxu0 %v1100
    %2230 = vmatprep.subr.mxu0 %v1107
    %2231 = vmatpush1.msra.mxu0 %v1106
    %2232 = vmatprep.subr.mxu0 %v1113
    %2233 = vmatpush1.msra.mxu0 %v1112
    %2234 = vmatprep.subr.mxu0 %v1119
    %2235 = vmatpush1.msra.mxu0 %v1118
    %2236 = vmatprep.subr.mxu0 %v1125
    %2237 = vmatpush1.msra.mxu0 %v1124
    %2238 = vmatprep.subr.mxu0 %v1131
    %2239 = vmatpush1.msra.mxu0 %v1130
    %2240 = vmatprep.subr.mxu0 %v1137
    %2241 = vmatpush1.msra.mxu0 %v1136
    %2242 = vmatprep.subr.mxu0 %v1143
    %2243 = vmatpush1.msra.mxu0 %v1142
    %2244 = vmatprep.subr.mxu0 %v1149
    %2245 = vmatpush1.msra.mxu0 %v1148
    %2246 = vmatprep.subr.mxu0 %v1155
    %2247 = vmatpush1.msra.mxu0 %v1154
    %2248 = vmatprep.subr.mxu0 %v1161
    %2249 = vmatpush1.msra.mxu0 %v1160
    %2250 = vmatprep.subr.mxu0 %v1167
    %2251 = vmatpush1.msra.mxu0 %v1166
    %2252 = vmatprep.subr.mxu0 %v1173
    %2253 = vmatpush1.msra.mxu0 %v1172
    %2254 = vmatprep.subr.mxu0 %v1179
    %2255 = vmatpush1.msra.mxu0 %v1178
    %2256 = vmatprep.subr.mxu0 %v1185
    %2257 = vmatpush1.msra.mxu0 %v1184
    %2258 = vmatprep.subr.mxu0 %v1191
    %2259 = vmatpush1.msra.mxu0 %v1190
    %2260 = vmatprep.subr.mxu0 %v1197
    %2261 = vmatpush1.msra.mxu0 %v1196
    %2262 = vmatprep.subr.mxu0 %v1203
    %2263 = vmatpush1.msra.mxu0 %v1202
    %2264 = vmatprep.subr.mxu0 %v1209
    %2265 = vmatpush1.msra.mxu0 %v1208
    %2266 = vmatprep.subr.mxu0 %v1215
    %2267 = vmatpush1.msra.mxu0 %v1214
    %2268 = vmatprep.subr.mxu0 %v1221
    %2269 = vmatpush1.msra.mxu0 %v1220
    %2270 = vmatprep.subr.mxu0 %v1227
    %2271 = vmatpush1.msra.mxu0 %v1226
    %2272 = vmatprep.subr.mxu0 %v1233
    %2273 = vmatpush1.msra.mxu0 %v1232
    %2274 = vmatprep.subr.mxu0 %v1239
    %2275 = vmatpush1.msra.mxu0 %v1238
    %2276 = vmatprep.subr.mxu0 %v1245
    %2277 = vmatpush1.msra.mxu0 %v1244
    %2278 = vmatprep.subr.mxu0 %v1251
    %2279 = vmatpush1.msra.mxu0 %v1250
    %2280 = vmatprep.subr.mxu0 %v1257
    %2281 = vmatpush1.msra.mxu0 %v1256
    %2282 = vmatprep.subr.mxu0 %v1263
    %2283 = vmatpush1.msra.mxu0 %v1262
    %2284 = vmatprep.subr.mxu0 %v1269
    %2285 = vmatpush1.msra.mxu0 %v1268
    %2286 = vmatprep.mubr.f32.mxu0 %v2072
    %2287 = vmatmul.mubr.f32.gmra.mrb[0].mxu0 %v2071
    %v2288 = vpop.f32.mrb[0].mxu0
    %v2289 = vadd.f32 0.0, %v2288
    %v2290 = vpop.f32.mrb[0].mxu0
    %v2291 = vadd.f32 0.0, %v2290
    %2292 = vdwg.mxu0
    %v2293 = vadd.f32 %v2074, %v2147
    %v2294 = vadd.f32 %v2075, %v2149
    %v2295 = vxor.u32 %v2293, 2147483648
    %v2296 = vxor.u32 %v2294, 2147483648
    %v2297 = vmul.f32 %v2295, 1.442695
    %v2298 = vpow.pop %v2297
    %v2299 = vmul.f32 %v2296, 1.442695
    %v2300 = vpow.pop %v2299
    %v2301 = vadd.f32 %v2298, 1.0
    %v2302 = vadd.f32 %v2300, 1.0
    %v2303 = vrcp.pop %v2301
    %v2304 = vmul.f32 1.0, %v2303
    %v2305 = vrcp.pop %v2302
    %v2306 = vmul.f32 1.0, %v2305
    %v2307 = vadd.f32 %v2076, %v2218
    %v2308 = vadd.f32 %v2077, %v2220
    %v2309 = vxor.u32 %v2307, 2147483648
    %v2310 = vxor.u32 %v2308, 2147483648
    %v2311 = vmul.f32 %v2309, 1.442695
    %v2312 = vpow.pop %v2311
    %v2313 = vmul.f32 %v2310, 1.442695
    %v2314 = vpow.pop %v2313
    %v2315 = vadd.f32 %v2312, 1.0
    %v2316 = vadd.f32 %v2314, 1.0
    %v2317 = vrcp.pop %v2315
    %v2318 = vmul.f32 1.0, %v2317
    %v2319 = vrcp.pop %v2316
    %v2320 = vmul.f32 1.0, %v2319
    %v2321 = vadd.f32 %v2289, %v1522
    %v2322 = vadd.f32 %v2291, %v1526
    %v2323 = vmul.f32 %v2304, %v2321
    %v2324 = vmul.f32 %v2306, %v2322
    %v2325 = vadd.f32 %v2078, %v2323
    %v2326 = vadd.f32 %v2079, %v2324
    %v2327 = vtanh.pop %v2325
    %v2328 = vtanh.pop %v2326
    %v2329 = vsub.f32 1.0, %v2318
    %v2330 = vsub.f32 1.0, %v2320
    %v2331 = vmul.f32 %v2329, %v2327
    %v2332 = vmul.f32 %v2330, %v2328
    %v2333 = vmul.f32 %v2318, %v2071
    %v2334 = vmul.f32 %v2320, %v2072
    %v2335 = vadd.f32 %v2331, %v2333
    %v2336 = vadd.f32 %v2332, %v2334
    %s2337 = scalar_lea.vmem [#allocation2], 192
    %v2338 = vld [vmem:[%s2337] sm:$0xff]
    %v2339 = vld [vmem:[%s2337 + $0x8] sm:$0xff]
    %v2340 = vld [vmem:[%s2337 + $0x10] sm:$0xff]
    %v2341 = vld [vmem:[%s2337 + $0x18] sm:$0xff]
    %v2342 = vld [vmem:[%s2337 + $0x20] sm:$0xff]
    %v2343 = vld [vmem:[%s2337 + $0x28] sm:$0xff]
    %2344 = vmatprep.subr.mxu0 %v1079
    %2345 = vmatpush1.msra.mxu0 %v1078
    %2346 = vmatprep.subr.mxu0 %v1085
    %2347 = vmatpush1.msra.mxu0 %v1084
    %2348 = vmatprep.subr.mxu0 %v1091
    %2349 = vmatpush1.msra.mxu0 %v1090
    %2350 = vmatprep.subr.mxu0 %v1097
    %2351 = vmatpush1.msra.mxu0 %v1096
    %2352 = vmatprep.subr.mxu0 %v1103
    %2353 = vmatpush1.msra.mxu0 %v1102
    %2354 = vmatprep.subr.mxu0 %v1109
    %2355 = vmatpush1.msra.mxu0 %v1108
    %2356 = vmatprep.subr.mxu0 %v1115
    %2357 = vmatpush1.msra.mxu0 %v1114
    %2358 = vmatprep.subr.mxu0 %v1121
    %2359 = vmatpush1.msra.mxu0 %v1120
    %2360 = vmatprep.subr.mxu0 %v1127
    %2361 = vmatpush1.msra.mxu0 %v1126
    %2362 = vmatprep.subr.mxu0 %v1133
    %2363 = vmatpush1.msra.mxu0 %v1132
    %2364 = vmatprep.subr.mxu0 %v1139
    %2365 = vmatpush1.msra.mxu0 %v1138
    %2366 = vmatprep.subr.mxu0 %v1145
    %2367 = vmatpush1.msra.mxu0 %v1144
    %2368 = vmatprep.subr.mxu0 %v1151
    %2369 = vmatpush1.msra.mxu0 %v1150
    %2370 = vmatprep.subr.mxu0 %v1157
    %2371 = vmatpush1.msra.mxu0 %v1156
    %2372 = vmatprep.subr.mxu0 %v1163
    %2373 = vmatpush1.msra.mxu0 %v1162
    %2374 = vmatprep.subr.mxu0 %v1169
    %2375 = vmatpush1.msra.mxu0 %v1168
    %2376 = vmatprep.subr.mxu0 %v1175
    %2377 = vmatpush1.msra.mxu0 %v1174
    %2378 = vmatprep.subr.mxu0 %v1181
    %2379 = vmatpush1.msra.mxu0 %v1180
    %2380 = vmatprep.subr.mxu0 %v1187
    %2381 = vmatpush1.msra.mxu0 %v1186
    %2382 = vmatprep.subr.mxu0 %v1193
    %2383 = vmatpush1.msra.mxu0 %v1192
    %2384 = vmatprep.subr.mxu0 %v1199
    %2385 = vmatpush1.msra.mxu0 %v1198
    %2386 = vmatprep.subr.mxu0 %v1205
    %2387 = vmatpush1.msra.mxu0 %v1204
    %2388 = vmatprep.subr.mxu0 %v1211
    %2389 = vmatpush1.msra.mxu0 %v1210
    %2390 = vmatprep.subr.mxu0 %v1217
    %2391 = vmatpush1.msra.mxu0 %v1216
    %2392 = vmatprep.subr.mxu0 %v1223
    %2393 = vmatpush1.msra.mxu0 %v1222
    %2394 = vmatprep.subr.mxu0 %v1229
    %2395 = vmatpush1.msra.mxu0 %v1228
    %2396 = vmatprep.subr.mxu0 %v1235
    %2397 = vmatpush1.msra.mxu0 %v1234
    %2398 = vmatprep.subr.mxu0 %v1241
    %2399 = vmatpush1.msra.mxu0 %v1240
    %2400 = vmatprep.subr.mxu0 %v1247
    %2401 = vmatpush1.msra.mxu0 %v1246
    %2402 = vmatprep.subr.mxu0 %v1253
    %2403 = vmatpush1.msra.mxu0 %v1252
    %2404 = vmatprep.subr.mxu0 %v1259
    %2405 = vmatpush1.msra.mxu0 %v1258
    %2406 = vmatprep.subr.mxu0 %v1265
    %2407 = vmatpush1.msra.mxu0 %v1264
    %2408 = vmatprep.mubr.f32.mxu0 %v2336
    %2409 = vmatmul.mubr.f32.gmra.mrb[0].mxu0 %v2335
    %v2410 = vpop.f32.mrb[0].mxu0
    %v2411 = vadd.f32 0.0, %v2410
    %v2412 = vpop.f32.mrb[0].mxu0
    %v2413 = vadd.f32 0.0, %v2412
    %2414 = vdwg.mxu0
    %2415 = vmatprep.subr.mxu0 %v1081
    %2416 = vmatpush1.msra.mxu0 %v1080
    %2417 = vmatprep.subr.mxu0 %v1087
    %2418 = vmatpush1.msra.mxu0 %v1086
    %2419 = vmatprep.subr.mxu0 %v1093
    %2420 = vmatpush1.msra.mxu0 %v1092
    %2421 = vmatprep.subr.mxu0 %v1099
    %2422 = vmatpush1.msra.mxu0 %v1098
    %2423 = vmatprep.subr.mxu0 %v1105
    %2424 = vmatpush1.msra.mxu0 %v1104
    %2425 = vmatprep.subr.mxu0 %v1111
    %2426 = vmatpush1.msra.mxu0 %v1110
    %2427 = vmatprep.subr.mxu0 %v1117
    %2428 = vmatpush1.msra.mxu0 %v1116
    %2429 = vmatprep.subr.mxu0 %v1123
    %2430 = vmatpush1.msra.mxu0 %v1122
    %2431 = vmatprep.subr.mxu0 %v1129
    %2432 = vmatpush1.msra.mxu0 %v1128
    %2433 = vmatprep.subr.mxu0 %v1135
    %2434 = vmatpush1.msra.mxu0 %v1134
    %2435 = vmatprep.subr.mxu0 %v1141
    %2436 = vmatpush1.msra.mxu0 %v1140
    %2437 = vmatprep.subr.mxu0 %v1147
    %2438 = vmatpush1.msra.mxu0 %v1146
    %2439 = vmatprep.subr.mxu0 %v1153
    %2440 = vmatpush1.msra.mxu0 %v1152
    %2441 = vmatprep.subr.mxu0 %v1159
    %2442 = vmatpush1.msra.mxu0 %v1158
    %2443 = vmatprep.subr.mxu0 %v1165
    %2444 = vmatpush1.msra.mxu0 %v1164
    %2445 = vmatprep.subr.mxu0 %v1171
    %2446 = vmatpush1.msra.mxu0 %v1170
    %2447 = vmatprep.subr.mxu0 %v1177
    %2448 = vmatpush1.msra.mxu0 %v1176
    %2449 = vmatprep.subr.mxu0 %v1183
    %2450 = vmatpush1.msra.mxu0 %v1182
    %2451 = vmatprep.subr.mxu0 %v1189
    %2452 = vmatpush1.msra.mxu0 %v1188
    %2453 = vmatprep.subr.mxu0 %v1195
    %2454 = vmatpush1.msra.mxu0 %v1194
    %2455 = vmatprep.subr.mxu0 %v1201
    %2456 = vmatpush1.msra.mxu0 %v1200
    %2457 = vmatprep.subr.mxu0 %v1207
    %2458 = vmatpush1.msra.mxu0 %v1206
    %2459 = vmatprep.subr.mxu0 %v1213
    %2460 = vmatpush1.msra.mxu0 %v1212
    %2461 = vmatprep.subr.mxu0 %v1219
    %2462 = vmatpush1.msra.mxu0 %v1218
    %2463 = vmatprep.subr.mxu0 %v1225
    %2464 = vmatpush1.msra.mxu0 %v1224
    %2465 = vmatprep.subr.mxu0 %v1231
    %2466 = vmatpush1.msra.mxu0 %v1230
    %2467 = vmatprep.subr.mxu0 %v1237
    %2468 = vmatpush1.msra.mxu0 %v1236
    %2469 = vmatprep.subr.mxu0 %v1243
    %2470 = vmatpush1.msra.mxu0 %v1242
    %2471 = vmatprep.subr.mxu0 %v1249
    %2472 = vmatpush1.msra.mxu0 %v1248
    %2473 = vmatprep.subr.mxu0 %v1255
    %2474 = vmatpush1.msra.mxu0 %v1254
    %2475 = vmatprep.subr.mxu0 %v1261
    %2476 = vmatpush1.msra.mxu0 %v1260
    %2477 = vmatprep.subr.mxu0 %v1267
    %2478 = vmatpush1.msra.mxu0 %v1266
    %2479 = vmatprep.mubr.f32.mxu0 %v2336
    %2480 = vmatmul.mubr.f32.gmra.mrb[0].mxu0 %v2335
    %v2481 = vpop.f32.mrb[0].mxu0
    %v2482 = vadd.f32 0.0, %v2481
    %v2483 = vpop.f32.mrb[0].mxu0
    %v2484 = vadd.f32 0.0, %v2483
    %2485 = vdwg.mxu0
    %2486 = vmatprep.subr.mxu0 %v1083
    %2487 = vmatpush1.msra.mxu0 %v1082
    %2488 = vmatprep.subr.mxu0 %v1089
    %2489 = vmatpush1.msra.mxu0 %v1088
    %2490 = vmatprep.subr.mxu0 %v1095
    %2491 = vmatpush1.msra.mxu0 %v1094
    %2492 = vmatprep.subr.mxu0 %v1101
    %2493 = vmatpush1.msra.mxu0 %v1100
    %2494 = vmatprep.subr.mxu0 %v1107
    %2495 = vmatpush1.msra.mxu0 %v1106
    %2496 = vmatprep.subr.mxu0 %v1113
    %2497 = vmatpush1.msra.mxu0 %v1112
    %2498 = vmatprep.subr.mxu0 %v1119
    %2499 = vmatpush1.msra.mxu0 %v1118
    %2500 = vmatprep.subr.mxu0 %v1125
    %2501 = vmatpush1.msra.mxu0 %v1124
    %2502 = vmatprep.subr.mxu0 %v1131
    %2503 = vmatpush1.msra.mxu0 %v1130
    %2504 = vmatprep.subr.mxu0 %v1137
    %2505 = vmatpush1.msra.mxu0 %v1136
    %2506 = vmatprep.subr.mxu0 %v1143
    %2507 = vmatpush1.msra.mxu0 %v1142
    %2508 = vmatprep.subr.mxu0 %v1149
    %2509 = vmatpush1.msra.mxu0 %v1148
    %2510 = vmatprep.subr.mxu0 %v1155
    %2511 = vmatpush1.msra.mxu0 %v1154
    %2512 = vmatprep.subr.mxu0 %v1161
    %2513 = vmatpush1.msra.mxu0 %v1160
    %2514 = vmatprep.subr.mxu0 %v1167
    %2515 = vmatpush1.msra.mxu0 %v1166
    %2516 = vmatprep.subr.mxu0 %v1173
    %2517 = vmatpush1.msra.mxu0 %v1172
    %2518 = vmatprep.subr.mxu0 %v1179
    %2519 = vmatpush1.msra.mxu0 %v1178
    %2520 = vmatprep.subr.mxu0 %v1185
    %2521 = vmatpush1.msra.mxu0 %v1184
    %2522 = vmatprep.subr.mxu0 %v1191
    %2523 = vmatpush1.msra.mxu0 %v1190
    %2524 = vmatprep.subr.mxu0 %v1197
    %2525 = vmatpush1.msra.mxu0 %v1196
    %2526 = vmatprep.subr.mxu0 %v1203
    %2527 = vmatpush1.msra.mxu0 %v1202
    %2528 = vmatprep.subr.mxu0 %v1209
    %2529 = vmatpush1.msra.mxu0 %v1208
    %2530 = vmatprep.subr.mxu0 %v1215
    %2531 = vmatpush1.msra.mxu0 %v1214
    %2532 = vmatprep.subr.mxu0 %v1221
    %2533 = vmatpush1.msra.mxu0 %v1220
    %2534 = vmatprep.subr.mxu0 %v1227
    %2535 = vmatpush1.msra.mxu0 %v1226
    %2536 = vmatprep.subr.mxu0 %v1233
    %2537 = vmatpush1.msra.mxu0 %v1232
    %2538 = vmatprep.subr.mxu0 %v1239
    %2539 = vmatpush1.msra.mxu0 %v1238
    %2540 = vmatprep.subr.mxu0 %v1245
    %2541 = vmatpush1.msra.mxu0 %v1244
    %2542 = vmatprep.subr.mxu0 %v1251
    %2543 = vmatpush1.msra.mxu0 %v1250
    %2544 = vmatprep.subr.mxu0 %v1257
    %2545 = vmatpush1.msra.mxu0 %v1256
    %2546 = vmatprep.subr.mxu0 %v1263
    %2547 = vmatpush1.msra.mxu0 %v1262
    %2548 = vmatprep.subr.mxu0 %v1269
    %2549 = vmatpush1.msra.mxu0 %v1268
    %2550 = vmatprep.mubr.f32.mxu0 %v2336
    %2551 = vmatmul.mubr.f32.gmra.mrb[0].mxu0 %v2335
    %v2552 = vpop.f32.mrb[0].mxu0
    %v2553 = vadd.f32 0.0, %v2552
    %v2554 = vpop.f32.mrb[0].mxu0
    %v2555 = vadd.f32 0.0, %v2554
    %2556 = vdwg.mxu0
    %v2557 = vadd.f32 %v2338, %v2411
    %v2558 = vadd.f32 %v2339, %v2413
    %v2559 = vxor.u32 %v2557, 2147483648
    %v2560 = vxor.u32 %v2558, 2147483648
    %v2561 = vmul.f32 %v2559, 1.442695
    %v2562 = vpow.pop %v2561
    %v2563 = vmul.f32 %v2560, 1.442695
    %v2564 = vpow.pop %v2563
    %v2565 = vadd.f32 %v2562, 1.0
    %v2566 = vadd.f32 %v2564, 1.0
    %v2567 = vrcp.pop %v2565
    %v2568 = vmul.f32 1.0, %v2567
    %v2569 = vrcp.pop %v2566
    %v2570 = vmul.f32 1.0, %v2569
    %v2571 = vadd.f32 %v2340, %v2482
    %v2572 = vadd.f32 %v2341, %v2484
    %v2573 = vxor.u32 %v2571, 2147483648
    %v2574 = vxor.u32 %v2572, 2147483648
    %v2575 = vmul.f32 %v2573, 1.442695
    %v2576 = vpow.pop %v2575
    %v2577 = vmul.f32 %v2574, 1.442695
    %v2578 = vpow.pop %v2577
    %v2579 = vadd.f32 %v2576, 1.0
    %v2580 = vadd.f32 %v2578, 1.0
    %v2581 = vrcp.pop %v2579
    %v2582 = vmul.f32 1.0, %v2581
    %v2583 = vrcp.pop %v2580
    %v2584 = vmul.f32 1.0, %v2583
    %v2585 = vadd.f32 %v2553, %v1522
    %v2586 = vadd.f32 %v2555, %v1526
    %v2587 = vmul.f32 %v2568, %v2585
    %v2588 = vmul.f32 %v2570, %v2586
    %v2589 = vadd.f32 %v2342, %v2587
    %v2590 = vadd.f32 %v2343, %v2588
    %v2591 = vtanh.pop %v2589
    %v2592 = vtanh.pop %v2590
    %v2593 = vsub.f32 1.0, %v2582
    %v2594 = vsub.f32 1.0, %v2584
    %v2595 = vmul.f32 %v2593, %v2591
    %v2596 = vmul.f32 %v2594, %v2592
    %v2597 = vmul.f32 %v2582, %v2335
    %v2598 = vmul.f32 %v2584, %v2336
    %v2599 = vadd.f32 %v2595, %v2597
    %v2600 = vadd.f32 %v2596, %v2598
    %s2601 = scalar_lea.vmem [#allocation2], 240
    %v2602 = vld [vmem:[%s2601] sm:$0xff]
    %v2603 = vld [vmem:[%s2601 + $0x8] sm:$0xff]
    %v2604 = vld [vmem:[%s2601 + $0x10] sm:$0xff]
    %v2605 = vld [vmem:[%s2601 + $0x18] sm:$0xff]
    %v2606 = vld [vmem:[%s2601 + $0x20] sm:$0xff]
    %v2607 = vld [vmem:[%s2601 + $0x28] sm:$0xff]
    %2608 = vmatprep.subr.mxu0 %v1079
    %2609 = vmatpush1.msra.mxu0 %v1078
    %2610 = vmatprep.subr.mxu0 %v1085
    %2611 = vmatpush1.msra.mxu0 %v1084
    %2612 = vmatprep.subr.mxu0 %v1091
    %2613 = vmatpush1.msra.mxu0 %v1090
    %2614 = vmatprep.subr.mxu0 %v1097
    %2615 = vmatpush1.msra.mxu0 %v1096
    %2616 = vmatprep.subr.mxu0 %v1103
    %2617 = vmatpush1.msra.mxu0 %v1102
    %2618 = vmatprep.subr.mxu0 %v1109
    %2619 = vmatpush1.msra.mxu0 %v1108
    %2620 = vmatprep.subr.mxu0 %v1115
    %2621 = vmatpush1.msra.mxu0 %v1114
    %2622 = vmatprep.subr.mxu0 %v1121
    %2623 = vmatpush1.msra.mxu0 %v1120
    %2624 = vmatprep.subr.mxu0 %v1127
    %2625 = vmatpush1.msra.mxu0 %v1126
    %2626 = vmatprep.subr.mxu0 %v1133
    %2627 = vmatpush1.msra.mxu0 %v1132
    %2628 = vmatprep.subr.mxu0 %v1139
    %2629 = vmatpush1.msra.mxu0 %v1138
    %2630 = vmatprep.subr.mxu0 %v1145
    %2631 = vmatpush1.msra.mxu0 %v1144
    %2632 = vmatprep.subr.mxu0 %v1151
    %2633 = vmatpush1.msra.mxu0 %v1150
    %2634 = vmatprep.subr.mxu0 %v1157
    %2635 = vmatpush1.msra.mxu0 %v1156
    %2636 = vmatprep.subr.mxu0 %v1163
    %2637 = vmatpush1.msra.mxu0 %v1162
    %2638 = vmatprep.subr.mxu0 %v1169
    %2639 = vmatpush1.msra.mxu0 %v1168
    %2640 = vmatprep.subr.mxu0 %v1175
    %2641 = vmatpush1.msra.mxu0 %v1174
    %2642 = vmatprep.subr.mxu0 %v1181
    %2643 = vmatpush1.msra.mxu0 %v1180
    %2644 = vmatprep.subr.mxu0 %v1187
    %2645 = vmatpush1.msra.mxu0 %v1186
    %2646 = vmatprep.subr.mxu0 %v1193
    %2647 = vmatpush1.msra.mxu0 %v1192
    %2648 = vmatprep.subr.mxu0 %v1199
    %2649 = vmatpush1.msra.mxu0 %v1198
    %2650 = vmatprep.subr.mxu0 %v1205
    %2651 = vmatpush1.msra.mxu0 %v1204
    %2652 = vmatprep.subr.mxu0 %v1211
    %2653 = vmatpush1.msra.mxu0 %v1210
    %2654 = vmatprep.subr.mxu0 %v1217
    %2655 = vmatpush1.msra.mxu0 %v1216
    %2656 = vmatprep.subr.mxu0 %v1223
    %2657 = vmatpush1.msra.mxu0 %v1222
    %2658 = vmatprep.subr.mxu0 %v1229
    %2659 = vmatpush1.msra.mxu0 %v1228
    %2660 = vmatprep.subr.mxu0 %v1235
    %2661 = vmatpush1.msra.mxu0 %v1234
    %2662 = vmatprep.subr.mxu0 %v1241
    %2663 = vmatpush1.msra.mxu0 %v1240
    %2664 = vmatprep.subr.mxu0 %v1247
    %2665 = vmatpush1.msra.mxu0 %v1246
    %2666 = vmatprep.subr.mxu0 %v1253
    %2667 = vmatpush1.msra.mxu0 %v1252
    %2668 = vmatprep.subr.mxu0 %v1259
    %2669 = vmatpush1.msra.mxu0 %v1258
    %2670 = vmatprep.subr.mxu0 %v1265
    %2671 = vmatpush1.msra.mxu0 %v1264
    %2672 = vmatprep.mubr.f32.mxu0 %v2600
    %2673 = vmatmul.mubr.f32.gmra.mrb[0].mxu0 %v2599
    %v2674 = vpop.f32.mrb[0].mxu0
    %v2675 = vadd.f32 0.0, %v2674
    %v2676 = vpop.f32.mrb[0].mxu0
    %v2677 = vadd.f32 0.0, %v2676
    %2678 = vdwg.mxu0
    %2679 = vmatprep.subr.mxu0 %v1081
    %2680 = vmatpush1.msra.mxu0 %v1080
    %2681 = vmatprep.subr.mxu0 %v1087
    %2682 = vmatpush1.msra.mxu0 %v1086
    %2683 = vmatprep.subr.mxu0 %v1093
    %2684 = vmatpush1.msra.mxu0 %v1092
    %2685 = vmatprep.subr.mxu0 %v1099
    %2686 = vmatpush1.msra.mxu0 %v1098
    %2687 = vmatprep.subr.mxu0 %v1105
    %2688 = vmatpush1.msra.mxu0 %v1104
    %2689 = vmatprep.subr.mxu0 %v1111
    %2690 = vmatpush1.msra.mxu0 %v1110
    %2691 = vmatprep.subr.mxu0 %v1117
    %2692 = vmatpush1.msra.mxu0 %v1116
    %2693 = vmatprep.subr.mxu0 %v1123
    %2694 = vmatpush1.msra.mxu0 %v1122
    %2695 = vmatprep.subr.mxu0 %v1129
    %2696 = vmatpush1.msra.mxu0 %v1128
    %2697 = vmatprep.subr.mxu0 %v1135
    %2698 = vmatpush1.msra.mxu0 %v1134
    %2699 = vmatprep.subr.mxu0 %v1141
    %2700 = vmatpush1.msra.mxu0 %v1140
    %2701 = vmatprep.subr.mxu0 %v1147
    %2702 = vmatpush1.msra.mxu0 %v1146
    %2703 = vmatprep.subr.mxu0 %v1153
    %2704 = vmatpush1.msra.mxu0 %v1152
    %2705 = vmatprep.subr.mxu0 %v1159
    %2706 = vmatpush1.msra.mxu0 %v1158
    %2707 = vmatprep.subr.mxu0 %v1165
    %2708 = vmatpush1.msra.mxu0 %v1164
    %2709 = vmatprep.subr.mxu0 %v1171
    %2710 = vmatpush1.msra.mxu0 %v1170
    %2711 = vmatprep.subr.mxu0 %v1177
    %2712 = vmatpush1.msra.mxu0 %v1176
    %2713 = vmatprep.subr.mxu0 %v1183
    %2714 = vmatpush1.msra.mxu0 %v1182
    %2715 = vmatprep.subr.mxu0 %v1189
    %2716 = vmatpush1.msra.mxu0 %v1188
    %2717 = vmatprep.subr.mxu0 %v1195
    %2718 = vmatpush1.msra.mxu0 %v1194
    %2719 = vmatprep.subr.mxu0 %v1201
    %2720 = vmatpush1.msra.mxu0 %v1200
    %2721 = vmatprep.subr.mxu0 %v1207
    %2722 = vmatpush1.msra.mxu0 %v1206
    %2723 = vmatprep.subr.mxu0 %v1213
    %2724 = vmatpush1.msra.mxu0 %v1212
    %2725 = vmatprep.subr.mxu0 %v1219
    %2726 = vmatpush1.msra.mxu0 %v1218
    %2727 = vmatprep.subr.mxu0 %v1225
    %2728 = vmatpush1.msra.mxu0 %v1224
    %2729 = vmatprep.subr.mxu0 %v1231
    %2730 = vmatpush1.msra.mxu0 %v1230
    %2731 = vmatprep.subr.mxu0 %v1237
    %2732 = vmatpush1.msra.mxu0 %v1236
    %2733 = vmatprep.subr.mxu0 %v1243
    %2734 = vmatpush1.msra.mxu0 %v1242
    %2735 = vmatprep.subr.mxu0 %v1249
    %2736 = vmatpush1.msra.mxu0 %v1248
    %2737 = vmatprep.subr.mxu0 %v1255
    %2738 = vmatpush1.msra.mxu0 %v1254
    %2739 = vmatprep.subr.mxu0 %v1261
    %2740 = vmatpush1.msra.mxu0 %v1260
    %2741 = vmatprep.subr.mxu0 %v1267
    %2742 = vmatpush1.msra.mxu0 %v1266
    %2743 = vmatprep.mubr.f32.mxu0 %v2600
    %2744 = vmatmul.mubr.f32.gmra.mrb[0].mxu0 %v2599
    %v2745 = vpop.f32.mrb[0].mxu0
    %v2746 = vadd.f32 0.0, %v2745
    %v2747 = vpop.f32.mrb[0].mxu0
    %v2748 = vadd.f32 0.0, %v2747
    %2749 = vdwg.mxu0
    %2750 = vmatprep.subr.mxu0 %v1083
    %2751 = vmatpush1.msra.mxu0 %v1082
    %2752 = vmatprep.subr.mxu0 %v1089
    %2753 = vmatpush1.msra.mxu0 %v1088
    %2754 = vmatprep.subr.mxu0 %v1095
    %2755 = vmatpush1.msra.mxu0 %v1094
    %2756 = vmatprep.subr.mxu0 %v1101
    %2757 = vmatpush1.msra.mxu0 %v1100
    %2758 = vmatprep.subr.mxu0 %v1107
    %2759 = vmatpush1.msra.mxu0 %v1106
    %2760 = vmatprep.subr.mxu0 %v1113
    %2761 = vmatpush1.msra.mxu0 %v1112
    %2762 = vmatprep.subr.mxu0 %v1119
    %2763 = vmatpush1.msra.mxu0 %v1118
    %2764 = vmatprep.subr.mxu0 %v1125
    %2765 = vmatpush1.msra.mxu0 %v1124
    %2766 = vmatprep.subr.mxu0 %v1131
    %2767 = vmatpush1.msra.mxu0 %v1130
    %2768 = vmatprep.subr.mxu0 %v1137
    %2769 = vmatpush1.msra.mxu0 %v1136
    %2770 = vmatprep.subr.mxu0 %v1143
    %2771 = vmatpush1.msra.mxu0 %v1142
    %2772 = vmatprep.subr.mxu0 %v1149
    %2773 = vmatpush1.msra.mxu0 %v1148
    %2774 = vmatprep.subr.mxu0 %v1155
    %2775 = vmatpush1.msra.mxu0 %v1154
    %2776 = vmatprep.subr.mxu0 %v1161
    %2777 = vmatpush1.msra.mxu0 %v1160
    %2778 = vmatprep.subr.mxu0 %v1167
    %2779 = vmatpush1.msra.mxu0 %v1166
    %2780 = vmatprep.subr.mxu0 %v1173
    %2781 = vmatpush1.msra.mxu0 %v1172
    %2782 = vmatprep.subr.mxu0 %v1179
    %2783 = vmatpush1.msra.mxu0 %v1178
    %2784 = vmatprep.subr.mxu0 %v1185
    %2785 = vmatpush1.msra.mxu0 %v1184
    %2786 = vmatprep.subr.mxu0 %v1191
    %2787 = vmatpush1.msra.mxu0 %v1190
    %2788 = vmatprep.subr.mxu0 %v1197
    %2789 = vmatpush1.msra.mxu0 %v1196
    %2790 = vmatprep.subr.mxu0 %v1203
    %2791 = vmatpush1.msra.mxu0 %v1202
    %2792 = vmatprep.subr.mxu0 %v1209
    %2793 = vmatpush1.msra.mxu0 %v1208
    %2794 = vmatprep.subr.mxu0 %v1215
    %2795 = vmatpush1.msra.mxu0 %v1214
    %2796 = vmatprep.subr.mxu0 %v1221
    %2797 = vmatpush1.msra.mxu0 %v1220
    %2798 = vmatprep.subr.mxu0 %v1227
    %2799 = vmatpush1.msra.mxu0 %v1226
    %2800 = vmatprep.subr.mxu0 %v1233
    %2801 = vmatpush1.msra.mxu0 %v1232
    %2802 = vmatprep.subr.mxu0 %v1239
    %2803 = vmatpush1.msra.mxu0 %v1238
    %2804 = vmatprep.subr.mxu0 %v1245
    %2805 = vmatpush1.msra.mxu0 %v1244
    %2806 = vmatprep.subr.mxu0 %v1251
    %2807 = vmatpush1.msra.mxu0 %v1250
    %2808 = vmatprep.subr.mxu0 %v1257
    %2809 = vmatpush1.msra.mxu0 %v1256
    %2810 = vmatprep.subr.mxu0 %v1263
    %2811 = vmatpush1.msra.mxu0 %v1262
    %2812 = vmatprep.subr.mxu0 %v1269
    %2813 = vmatpush1.msra.mxu0 %v1268
    %2814 = vmatprep.mubr.f32.mxu0 %v2600
    %2815 = vmatmul.mubr.f32.gmra.mrb[0].mxu0 %v2599
    %v2816 = vpop.f32.mrb[0].mxu0
    %v2817 = vadd.f32 0.0, %v2816
    %v2818 = vpop.f32.mrb[0].mxu0
    %v2819 = vadd.f32 0.0, %v2818
    %2820 = vdwg.mxu0
    %v2821 = vadd.f32 %v2602, %v2675
    %v2822 = vadd.f32 %v2603, %v2677
    %v2823 = vxor.u32 %v2821, 2147483648
    %v2824 = vxor.u32 %v2822, 2147483648
    %v2825 = vmul.f32 %v2823, 1.442695
    %v2826 = vpow.pop %v2825
    %v2827 = vmul.f32 %v2824, 1.442695
    %v2828 = vpow.pop %v2827
    %v2829 = vadd.f32 %v2826, 1.0
    %v2830 = vadd.f32 %v2828, 1.0
    %v2831 = vrcp.pop %v2829
    %v2832 = vmul.f32 1.0, %v2831
    %v2833 = vrcp.pop %v2830
    %v2834 = vmul.f32 1.0, %v2833
    %v2835 = vadd.f32 %v2604, %v2746
    %v2836 = vadd.f32 %v2605, %v2748
    %v2837 = vxor.u32 %v2835, 2147483648
    %v2838 = vxor.u32 %v2836, 2147483648
    %v2839 = vmul.f32 %v2837, 1.442695
    %v2840 = vpow.pop %v2839
    %v2841 = vmul.f32 %v2838, 1.442695
    %v2842 = vpow.pop %v2841
    %v2843 = vadd.f32 %v2840, 1.0
    %v2844 = vadd.f32 %v2842, 1.0
    %v2845 = vrcp.pop %v2843
    %v2846 = vmul.f32 1.0, %v2845
    %v2847 = vrcp.pop %v2844
    %v2848 = vmul.f32 1.0, %v2847
    %v2849 = vadd.f32 %v2817, %v1522
    %v2850 = vadd.f32 %v2819, %v1526
    %v2851 = vmul.f32 %v2832, %v2849
    %v2852 = vmul.f32 %v2834, %v2850
    %v2853 = vadd.f32 %v2606, %v2851
    %v2854 = vadd.f32 %v2607, %v2852
    %v2855 = vtanh.pop %v2853
    %v2856 = vtanh.pop %v2854
    %v2857 = vsub.f32 1.0, %v2846
    %v2858 = vsub.f32 1.0, %v2848
    %v2859 = vmul.f32 %v2857, %v2855
    %v2860 = vmul.f32 %v2858, %v2856
    %v2861 = vmul.f32 %v2846, %v2599
    %v2862 = vmul.f32 %v2848, %v2600
    %v2863 = vadd.f32 %v2859, %v2861
    %v2864 = vadd.f32 %v2860, %v2862
    %s2865 = scalar_lea.vmem [#allocation2], 288
    %v2866 = vld [vmem:[%s2865] sm:$0xff]
    %v2867 = vld [vmem:[%s2865 + $0x8] sm:$0xff]
    %v2868 = vld [vmem:[%s2865 + $0x10] sm:$0xff]
    %v2869 = vld [vmem:[%s2865 + $0x18] sm:$0xff]
    %v2870 = vld [vmem:[%s2865 + $0x20] sm:$0xff]
    %v2871 = vld [vmem:[%s2865 + $0x28] sm:$0xff]
    %2872 = vmatprep.subr.mxu0 %v1079
    %2873 = vmatpush1.msra.mxu0 %v1078
    %2874 = vmatprep.subr.mxu0 %v1085
    %2875 = vmatpush1.msra.mxu0 %v1084
    %2876 = vmatprep.subr.mxu0 %v1091
    %2877 = vmatpush1.msra.mxu0 %v1090
    %2878 = vmatprep.subr.mxu0 %v1097
    %2879 = vmatpush1.msra.mxu0 %v1096
    %2880 = vmatprep.subr.mxu0 %v1103
    %2881 = vmatpush1.msra.mxu0 %v1102
    %2882 = vmatprep.subr.mxu0 %v1109
    %2883 = vmatpush1.msra.mxu0 %v1108
    %2884 = vmatprep.subr.mxu0 %v1115
    %2885 = vmatpush1.msra.mxu0 %v1114
    %2886 = vmatprep.subr.mxu0 %v1121
    %2887 = vmatpush1.msra.mxu0 %v1120
    %2888 = vmatprep.subr.mxu0 %v1127
    %2889 = vmatpush1.msra.mxu0 %v1126
    %2890 = vmatprep.subr.mxu0 %v1133
    %2891 = vmatpush1.msra.mxu0 %v1132
    %2892 = vmatprep.subr.mxu0 %v1139
    %2893 = vmatpush1.msra.mxu0 %v1138
    %2894 = vmatprep.subr.mxu0 %v1145
    %2895 = vmatpush1.msra.mxu0 %v1144
    %2896 = vmatprep.subr.mxu0 %v1151
    %2897 = vmatpush1.msra.mxu0 %v1150
    %2898 = vmatprep.subr.mxu0 %v1157
    %2899 = vmatpush1.msra.mxu0 %v1156
    %2900 = vmatprep.subr.mxu0 %v1163
    %2901 = vmatpush1.msra.mxu0 %v1162
    %2902 = vmatprep.subr.mxu0 %v1169
    %2903 = vmatpush1.msra.mxu0 %v1168
    %2904 = vmatprep.subr.mxu0 %v1175
    %2905 = vmatpush1.msra.mxu0 %v1174
    %2906 = vmatprep.subr.mxu0 %v1181
    %2907 = vmatpush1.msra.mxu0 %v1180
    %2908 = vmatprep.subr.mxu0 %v1187
    %2909 = vmatpush1.msra.mxu0 %v1186
    %2910 = vmatprep.subr.mxu0 %v1193
    %2911 = vmatpush1.msra.mxu0 %v1192
    %2912 = vmatprep.subr.mxu0 %v1199
    %2913 = vmatpush1.msra.mxu0 %v1198
    %2914 = vmatprep.subr.mxu0 %v1205
    %2915 = vmatpush1.msra.mxu0 %v1204
    %2916 = vmatprep.subr.mxu0 %v1211
    %2917 = vmatpush1.msra.mxu0 %v1210
    %2918 = vmatprep.subr.mxu0 %v1217
    %2919 = vmatpush1.msra.mxu0 %v1216
    %2920 = vmatprep.subr.mxu0 %v1223
    %2921 = vmatpush1.msra.mxu0 %v1222
    %2922 = vmatprep.subr.mxu0 %v1229
    %2923 = vmatpush1.msra.mxu0 %v1228
    %2924 = vmatprep.subr.mxu0 %v1235
    %2925 = vmatpush1.msra.mxu0 %v1234
    %2926 = vmatprep.subr.mxu0 %v1241
    %2927 = vmatpush1.msra.mxu0 %v1240
    %2928 = vmatprep.subr.mxu0 %v1247
    %2929 = vmatpush1.msra.mxu0 %v1246
    %2930 = vmatprep.subr.mxu0 %v1253
    %2931 = vmatpush1.msra.mxu0 %v1252
    %2932 = vmatprep.subr.mxu0 %v1259
    %2933 = vmatpush1.msra.mxu0 %v1258
    %2934 = vmatprep.subr.mxu0 %v1265
    %2935 = vmatpush1.msra.mxu0 %v1264
    %2936 = vmatprep.mubr.f32.mxu0 %v2864
    %2937 = vmatmul.mubr.f32.gmra.mrb[0].mxu0 %v2863
    %v2938 = vpop.f32.mrb[0].mxu0
    %v2939 = vadd.f32 0.0, %v2938
    %v2940 = vpop.f32.mrb[0].mxu0
    %v2941 = vadd.f32 0.0, %v2940
    %2942 = vdwg.mxu0
    %2943 = vmatprep.subr.mxu0 %v1081
    %2944 = vmatpush1.msra.mxu0 %v1080
    %2945 = vmatprep.subr.mxu0 %v1087
    %2946 = vmatpush1.msra.mxu0 %v1086
    %2947 = vmatprep.subr.mxu0 %v1093
    %2948 = vmatpush1.msra.mxu0 %v1092
    %2949 = vmatprep.subr.mxu0 %v1099
    %2950 = vmatpush1.msra.mxu0 %v1098
    %2951 = vmatprep.subr.mxu0 %v1105
    %2952 = vmatpush1.msra.mxu0 %v1104
    %2953 = vmatprep.subr.mxu0 %v1111
    %2954 = vmatpush1.msra.mxu0 %v1110
    %2955 = vmatprep.subr.mxu0 %v1117
    %2956 = vmatpush1.msra.mxu0 %v1116
    %2957 = vmatprep.subr.mxu0 %v1123
    %2958 = vmatpush1.msra.mxu0 %v1122
    %2959 = vmatprep.subr.mxu0 %v1129
    %2960 = vmatpush1.msra.mxu0 %v1128
    %2961 = vmatprep.subr.mxu0 %v1135
    %2962 = vmatpush1.msra.mxu0 %v1134
    %2963 = vmatprep.subr.mxu0 %v1141
    %2964 = vmatpush1.msra.mxu0 %v1140
    %2965 = vmatprep.subr.mxu0 %v1147
    %2966 = vmatpush1.msra.mxu0 %v1146
    %2967 = vmatprep.subr.mxu0 %v1153
    %2968 = vmatpush1.msra.mxu0 %v1152
    %2969 = vmatprep.subr.mxu0 %v1159
    %2970 = vmatpush1.msra.mxu0 %v1158
    %2971 = vmatprep.subr.mxu0 %v1165
    %2972 = vmatpush1.msra.mxu0 %v1164
    %2973 = vmatprep.subr.mxu0 %v1171
    %2974 = vmatpush1.msra.mxu0 %v1170
    %2975 = vmatprep.subr.mxu0 %v1177
    %2976 = vmatpush1.msra.mxu0 %v1176
    %2977 = vmatprep.subr.mxu0 %v1183
    %2978 = vmatpush1.msra.mxu0 %v1182
    %2979 = vmatprep.subr.mxu0 %v1189
    %2980 = vmatpush1.msra.mxu0 %v1188
    %2981 = vmatprep.subr.mxu0 %v1195
    %2982 = vmatpush1.msra.mxu0 %v1194
    %2983 = vmatprep.subr.mxu0 %v1201
    %2984 = vmatpush1.msra.mxu0 %v1200
    %2985 = vmatprep.subr.mxu0 %v1207
    %2986 = vmatpush1.msra.mxu0 %v1206
    %2987 = vmatprep.subr.mxu0 %v1213
    %2988 = vmatpush1.msra.mxu0 %v1212
    %2989 = vmatprep.subr.mxu0 %v1219
    %2990 = vmatpush1.msra.mxu0 %v1218
    %2991 = vmatprep.subr.mxu0 %v1225
    %2992 = vmatpush1.msra.mxu0 %v1224
    %2993 = vmatprep.subr.mxu0 %v1231
    %2994 = vmatpush1.msra.mxu0 %v1230
    %2995 = vmatprep.subr.mxu0 %v1237
    %2996 = vmatpush1.msra.mxu0 %v1236
    %2997 = vmatprep.subr.mxu0 %v1243
    %2998 = vmatpush1.msra.mxu0 %v1242
    %2999 = vmatprep.subr.mxu0 %v1249
    %3000 = vmatpush1.msra.mxu0 %v1248
    %3001 = vmatprep.subr.mxu0 %v1255
    %3002 = vmatpush1.msra.mxu0 %v1254
    %3003 = vmatprep.subr.mxu0 %v1261
    %3004 = vmatpush1.msra.mxu0 %v1260
    %3005 = vmatprep.subr.mxu0 %v1267
    %3006 = vmatpush1.msra.mxu0 %v1266
    %3007 = vmatprep.mubr.f32.mxu0 %v2864
    %3008 = vmatmul.mubr.f32.gmra.mrb[0].mxu0 %v2863
    %v3009 = vpop.f32.mrb[0].mxu0
    %v3010 = vadd.f32 0.0, %v3009
    %v3011 = vpop.f32.mrb[0].mxu0
    %v3012 = vadd.f32 0.0, %v3011
    %3013 = vdwg.mxu0
    %3014 = vmatprep.subr.mxu0 %v1083
    %3015 = vmatpush1.msra.mxu0 %v1082
    %3016 = vmatprep.subr.mxu0 %v1089
    %3017 = vmatpush1.msra.mxu0 %v1088
    %3018 = vmatprep.subr.mxu0 %v1095
    %3019 = vmatpush1.msra.mxu0 %v1094
    %3020 = vmatprep.subr.mxu0 %v1101
    %3021 = vmatpush1.msra.mxu0 %v1100
    %3022 = vmatprep.subr.mxu0 %v1107
    %3023 = vmatpush1.msra.mxu0 %v1106
    %3024 = vmatprep.subr.mxu0 %v1113
    %3025 = vmatpush1.msra.mxu0 %v1112
    %3026 = vmatprep.subr.mxu0 %v1119
    %3027 = vmatpush1.msra.mxu0 %v1118
    %3028 = vmatprep.subr.mxu0 %v1125
    %3029 = vmatpush1.msra.mxu0 %v1124
    %3030 = vmatprep.subr.mxu0 %v1131
    %3031 = vmatpush1.msra.mxu0 %v1130
    %3032 = vmatprep.subr.mxu0 %v1137
    %3033 = vmatpush1.msra.mxu0 %v1136
    %3034 = vmatprep.subr.mxu0 %v1143
    %3035 = vmatpush1.msra.mxu0 %v1142
    %3036 = vmatprep.subr.mxu0 %v1149
    %3037 = vmatpush1.msra.mxu0 %v1148
    %3038 = vmatprep.subr.mxu0 %v1155
    %3039 = vmatpush1.msra.mxu0 %v1154
    %3040 = vmatprep.subr.mxu0 %v1161
    %3041 = vmatpush1.msra.mxu0 %v1160
    %3042 = vmatprep.subr.mxu0 %v1167
    %3043 = vmatpush1.msra.mxu0 %v1166
    %3044 = vmatprep.subr.mxu0 %v1173
    %3045 = vmatpush1.msra.mxu0 %v1172
    %3046 = vmatprep.subr.mxu0 %v1179
    %3047 = vmatpush1.msra.mxu0 %v1178
    %3048 = vmatprep.subr.mxu0 %v1185
    %3049 = vmatpush1.msra.mxu0 %v1184
    %3050 = vmatprep.subr.mxu0 %v1191
    %3051 = vmatpush1.msra.mxu0 %v1190
    %3052 = vmatprep.subr.mxu0 %v1197
    %3053 = vmatpush1.msra.mxu0 %v1196
    %3054 = vmatprep.subr.mxu0 %v1203
    %3055 = vmatpush1.msra.mxu0 %v1202
    %3056 = vmatprep.subr.mxu0 %v1209
    %3057 = vmatpush1.msra.mxu0 %v1208
    %3058 = vmatprep.subr.mxu0 %v1215
    %3059 = vmatpush1.msra.mxu0 %v1214
    %3060 = vmatprep.subr.mxu0 %v1221
    %3061 = vmatpush1.msra.mxu0 %v1220
    %3062 = vmatprep.subr.mxu0 %v1227
    %3063 = vmatpush1.msra.mxu0 %v1226
    %3064 = vmatprep.subr.mxu0 %v1233
    %3065 = vmatpush1.msra.mxu0 %v1232
    %3066 = vmatprep.subr.mxu0 %v1239
    %3067 = vmatpush1.msra.mxu0 %v1238
    %3068 = vmatprep.subr.mxu0 %v1245
    %3069 = vmatpush1.msra.mxu0 %v1244
    %3070 = vmatprep.subr.mxu0 %v1251
    %3071 = vmatpush1.msra.mxu0 %v1250
    %3072 = vmatprep.subr.mxu0 %v1257
    %3073 = vmatpush1.msra.mxu0 %v1256
    %3074 = vmatprep.subr.mxu0 %v1263
    %3075 = vmatpush1.msra.mxu0 %v1262
    %3076 = vmatprep.subr.mxu0 %v1269
    %3077 = vmatpush1.msra.mxu0 %v1268
    %3078 = vmatprep.mubr.f32.mxu0 %v2864
    %3079 = vmatmul.mubr.f32.gmra.mrb[0].mxu0 %v2863
    %v3080 = vpop.f32.mrb[0].mxu0
    %v3081 = vadd.f32 0.0, %v3080
    %v3082 = vpop.f32.mrb[0].mxu0
    %v3083 = vadd.f32 0.0, %v3082
    %3084 = vdwg.mxu0
    %v3085 = vadd.f32 %v2866, %v2939
    %v3086 = vadd.f32 %v2867, %v2941
    %v3087 = vxor.u32 %v3085, 2147483648
    %v3088 = vxor.u32 %v3086, 2147483648
    %v3089 = vmul.f32 %v3087, 1.442695
    %v3090 = vpow.pop %v3089
    %v3091 = vmul.f32 %v3088, 1.442695
    %v3092 = vpow.pop %v3091
    %v3093 = vadd.f32 %v3090, 1.0
    %v3094 = vadd.f32 %v3092, 1.0
    %v3095 = vrcp.pop %v3093
    %v3096 = vmul.f32 1.0, %v3095
    %v3097 = vrcp.pop %v3094
    %v3098 = vmul.f32 1.0, %v3097
    %v3099 = vadd.f32 %v2868, %v3010
    %v3100 = vadd.f32 %v2869, %v3012
    %v3101 = vxor.u32 %v3099, 2147483648
    %v3102 = vxor.u32 %v3100, 2147483648
    %v3103 = vmul.f32 %v3101, 1.442695
    %v3104 = vpow.pop %v3103
    %v3105 = vmul.f32 %v3102, 1.442695
    %v3106 = vpow.pop %v3105
    %v3107 = vadd.f32 %v3104, 1.0
    %v3108 = vadd.f32 %v3106, 1.0
    %v3109 = vrcp.pop %v3107
    %v3110 = vmul.f32 1.0, %v3109
    %v3111 = vrcp.pop %v3108
    %v3112 = vmul.f32 1.0, %v3111
    %v3113 = vadd.f32 %v3081, %v1522
    %v3114 = vadd.f32 %v3083, %v1526
    %v3115 = vmul.f32 %v3096, %v3113
    %v3116 = vmul.f32 %v3098, %v3114
    %v3117 = vadd.f32 %v2870, %v3115
    %v3118 = vadd.f32 %v2871, %v3116
    %v3119 = vtanh.pop %v3117
    %v3120 = vtanh.pop %v3118
    %v3121 = vsub.f32 1.0, %v3110
    %v3122 = vsub.f32 1.0, %v3112
    %v3123 = vmul.f32 %v3121, %v3119
    %v3124 = vmul.f32 %v3122, %v3120
    %v3125 = vmul.f32 %v3110, %v2863
    %v3126 = vmul.f32 %v3112, %v2864
    %v3127 = vadd.f32 %v3123, %v3125
    %v3128 = vadd.f32 %v3124, %v3126
    %s3129 = scalar_lea.vmem [#allocation2], 336
    %v3130 = vld [vmem:[%s3129] sm:$0xff]
    %v3131 = vld [vmem:[%s3129 + $0x8] sm:$0xff]
    %v3132 = vld [vmem:[%s3129 + $0x10] sm:$0xff]
    %v3133 = vld [vmem:[%s3129 + $0x18] sm:$0xff]
    %v3134 = vld [vmem:[%s3129 + $0x20] sm:$0xff]
    %v3135 = vld [vmem:[%s3129 + $0x28] sm:$0xff]
    %3136 = vmatprep.subr.mxu0 %v1079
    %3137 = vmatpush1.msra.mxu0 %v1078
    %3138 = vmatprep.subr.mxu0 %v1085
    %3139 = vmatpush1.msra.mxu0 %v1084
    %3140 = vmatprep.subr.mxu0 %v1091
    %3141 = vmatpush1.msra.mxu0 %v1090
    %3142 = vmatprep.subr.mxu0 %v1097
    %3143 = vmatpush1.msra.mxu0 %v1096
    %3144 = vmatprep.subr.mxu0 %v1103
    %3145 = vmatpush1.msra.mxu0 %v1102
    %3146 = vmatprep.subr.mxu0 %v1109
    %3147 = vmatpush1.msra.mxu0 %v1108
    %3148 = vmatprep.subr.mxu0 %v1115
    %3149 = vmatpush1.msra.mxu0 %v1114
    %3150 = vmatprep.subr.mxu0 %v1121
    %3151 = vmatpush1.msra.mxu0 %v1120
    %3152 = vmatprep.subr.mxu0 %v1127
    %3153 = vmatpush1.msra.mxu0 %v1126
    %3154 = vmatprep.subr.mxu0 %v1133
    %3155 = vmatpush1.msra.mxu0 %v1132
    %3156 = vmatprep.subr.mxu0 %v1139
    %3157 = vmatpush1.msra.mxu0 %v1138
    %3158 = vmatprep.subr.mxu0 %v1145
    %3159 = vmatpush1.msra.mxu0 %v1144
    %3160 = vmatprep.subr.mxu0 %v1151
    %3161 = vmatpush1.msra.mxu0 %v1150
    %3162 = vmatprep.subr.mxu0 %v1157
    %3163 = vmatpush1.msra.mxu0 %v1156
    %3164 = vmatprep.subr.mxu0 %v1163
    %3165 = vmatpush1.msra.mxu0 %v1162
    %3166 = vmatprep.subr.mxu0 %v1169
    %3167 = vmatpush1.msra.mxu0 %v1168
    %3168 = vmatprep.subr.mxu0 %v1175
    %3169 = vmatpush1.msra.mxu0 %v1174
    %3170 = vmatprep.subr.mxu0 %v1181
    %3171 = vmatpush1.msra.mxu0 %v1180
    %3172 = vmatprep.subr.mxu0 %v1187
    %3173 = vmatpush1.msra.mxu0 %v1186
    %3174 = vmatprep.subr.mxu0 %v1193
    %3175 = vmatpush1.msra.mxu0 %v1192
    %3176 = vmatprep.subr.mxu0 %v1199
    %3177 = vmatpush1.msra.mxu0 %v1198
    %3178 = vmatprep.subr.mxu0 %v1205
    %3179 = vmatpush1.msra.mxu0 %v1204
    %3180 = vmatprep.subr.mxu0 %v1211
    %3181 = vmatpush1.msra.mxu0 %v1210
    %3182 = vmatprep.subr.mxu0 %v1217
    %3183 = vmatpush1.msra.mxu0 %v1216
    %3184 = vmatprep.subr.mxu0 %v1223
    %3185 = vmatpush1.msra.mxu0 %v1222
    %3186 = vmatprep.subr.mxu0 %v1229
    %3187 = vmatpush1.msra.mxu0 %v1228
    %3188 = vmatprep.subr.mxu0 %v1235
    %3189 = vmatpush1.msra.mxu0 %v1234
    %3190 = vmatprep.subr.mxu0 %v1241
    %3191 = vmatpush1.msra.mxu0 %v1240
    %3192 = vmatprep.subr.mxu0 %v1247
    %3193 = vmatpush1.msra.mxu0 %v1246
    %3194 = vmatprep.subr.mxu0 %v1253
    %3195 = vmatpush1.msra.mxu0 %v1252
    %3196 = vmatprep.subr.mxu0 %v1259
    %3197 = vmatpush1.msra.mxu0 %v1258
    %3198 = vmatprep.subr.mxu0 %v1265
    %3199 = vmatpush1.msra.mxu0 %v1264
    %3200 = vmatprep.mubr.f32.mxu0 %v3128
    %3201 = vmatmul.mubr.f32.gmra.mrb[0].mxu0 %v3127
    %v3202 = vpop.f32.mrb[0].mxu0
    %v3203 = vadd.f32 0.0, %v3202
    %v3204 = vpop.f32.mrb[0].mxu0
    %v3205 = vadd.f32 0.0, %v3204
    %3206 = vdwg.mxu0
    %3207 = vmatprep.subr.mxu0 %v1081
    %3208 = vmatpush1.msra.mxu0 %v1080
    %3209 = vmatprep.subr.mxu0 %v1087
    %3210 = vmatpush1.msra.mxu0 %v1086
    %3211 = vmatprep.subr.mxu0 %v1093
    %3212 = vmatpush1.msra.mxu0 %v1092
    %3213 = vmatprep.subr.mxu0 %v1099
    %3214 = vmatpush1.msra.mxu0 %v1098
    %3215 = vmatprep.subr.mxu0 %v1105
    %3216 = vmatpush1.msra.mxu0 %v1104
    %3217 = vmatprep.subr.mxu0 %v1111
    %3218 = vmatpush1.msra.mxu0 %v1110
    %3219 = vmatprep.subr.mxu0 %v1117
    %3220 = vmatpush1.msra.mxu0 %v1116
    %3221 = vmatprep.subr.mxu0 %v1123
    %3222 = vmatpush1.msra.mxu0 %v1122
    %3223 = vmatprep.subr.mxu0 %v1129
    %3224 = vmatpush1.msra.mxu0 %v1128
    %3225 = vmatprep.subr.mxu0 %v1135
    %3226 = vmatpush1.msra.mxu0 %v1134
    %3227 = vmatprep.subr.mxu0 %v1141
    %3228 = vmatpush1.msra.mxu0 %v1140
    %3229 = vmatprep.subr.mxu0 %v1147
    %3230 = vmatpush1.msra.mxu0 %v1146
    %3231 = vmatprep.subr.mxu0 %v1153
    %3232 = vmatpush1.msra.mxu0 %v1152
    %3233 = vmatprep.subr.mxu0 %v1159
    %3234 = vmatpush1.msra.mxu0 %v1158
    %3235 = vmatprep.subr.mxu0 %v1165
    %3236 = vmatpush1.msra.mxu0 %v1164
    %3237 = vmatprep.subr.mxu0 %v1171
    %3238 = vmatpush1.msra.mxu0 %v1170
    %3239 = vmatprep.subr.mxu0 %v1177
    %3240 = vmatpush1.msra.mxu0 %v1176
    %3241 = vmatprep.subr.mxu0 %v1183
    %3242 = vmatpush1.msra.mxu0 %v1182
    %3243 = vmatprep.subr.mxu0 %v1189
    %3244 = vmatpush1.msra.mxu0 %v1188
    %3245 = vmatprep.subr.mxu0 %v1195
    %3246 = vmatpush1.msra.mxu0 %v1194
    %3247 = vmatprep.subr.mxu0 %v1201
    %3248 = vmatpush1.msra.mxu0 %v1200
    %3249 = vmatprep.subr.mxu0 %v1207
    %3250 = vmatpush1.msra.mxu0 %v1206
    %3251 = vmatprep.subr.mxu0 %v1213
    %3252 = vmatpush1.msra.mxu0 %v1212
    %3253 = vmatprep.subr.mxu0 %v1219
    %3254 = vmatpush1.msra.mxu0 %v1218
    %3255 = vmatprep.subr.mxu0 %v1225
    %3256 = vmatpush1.msra.mxu0 %v1224
    %3257 = vmatprep.subr.mxu0 %v1231
    %3258 = vmatpush1.msra.mxu0 %v1230
    %3259 = vmatprep.subr.mxu0 %v1237
    %3260 = vmatpush1.msra.mxu0 %v1236
    %3261 = vmatprep.subr.mxu0 %v1243
    %3262 = vmatpush1.msra.mxu0 %v1242
    %3263 = vmatprep.subr.mxu0 %v1249
    %3264 = vmatpush1.msra.mxu0 %v1248
    %3265 = vmatprep.subr.mxu0 %v1255
    %3266 = vmatpush1.msra.mxu0 %v1254
    %3267 = vmatprep.subr.mxu0 %v1261
    %3268 = vmatpush1.msra.mxu0 %v1260
    %3269 = vmatprep.subr.mxu0 %v1267
    %3270 = vmatpush1.msra.mxu0 %v1266
    %3271 = vmatprep.mubr.f32.mxu0 %v3128
    %3272 = vmatmul.mubr.f32.gmra.mrb[0].mxu0 %v3127
    %v3273 = vpop.f32.mrb[0].mxu0
    %v3274 = vadd.f32 0.0, %v3273
    %v3275 = vpop.f32.mrb[0].mxu0
    %v3276 = vadd.f32 0.0, %v3275
    %3277 = vdwg.mxu0
    %3278 = vmatprep.subr.mxu0 %v1083
    %3279 = vmatpush1.msra.mxu0 %v1082
    %3280 = vmatprep.subr.mxu0 %v1089
    %3281 = vmatpush1.msra.mxu0 %v1088
    %3282 = vmatprep.subr.mxu0 %v1095
    %3283 = vmatpush1.msra.mxu0 %v1094
    %3284 = vmatprep.subr.mxu0 %v1101
    %3285 = vmatpush1.msra.mxu0 %v1100
    %3286 = vmatprep.subr.mxu0 %v1107
    %3287 = vmatpush1.msra.mxu0 %v1106
    %3288 = vmatprep.subr.mxu0 %v1113
    %3289 = vmatpush1.msra.mxu0 %v1112
    %3290 = vmatprep.subr.mxu0 %v1119
    %3291 = vmatpush1.msra.mxu0 %v1118
    %3292 = vmatprep.subr.mxu0 %v1125
    %3293 = vmatpush1.msra.mxu0 %v1124
    %3294 = vmatprep.subr.mxu0 %v1131
    %3295 = vmatpush1.msra.mxu0 %v1130
    %3296 = vmatprep.subr.mxu0 %v1137
    %3297 = vmatpush1.msra.mxu0 %v1136
    %3298 = vmatprep.subr.mxu0 %v1143
    %3299 = vmatpush1.msra.mxu0 %v1142
    %3300 = vmatprep.subr.mxu0 %v1149
    %3301 = vmatpush1.msra.mxu0 %v1148
    %3302 = vmatprep.subr.mxu0 %v1155
    %3303 = vmatpush1.msra.mxu0 %v1154
    %3304 = vmatprep.subr.mxu0 %v1161
    %3305 = vmatpush1.msra.mxu0 %v1160
    %3306 = vmatprep.subr.mxu0 %v1167
    %3307 = vmatpush1.msra.mxu0 %v1166
    %3308 = vmatprep.subr.mxu0 %v1173
    %3309 = vmatpush1.msra.mxu0 %v1172
    %3310 = vmatprep.subr.mxu0 %v1179
    %3311 = vmatpush1.msra.mxu0 %v1178
    %3312 = vmatprep.subr.mxu0 %v1185
    %3313 = vmatpush1.msra.mxu0 %v1184
    %3314 = vmatprep.subr.mxu0 %v1191
    %3315 = vmatpush1.msra.mxu0 %v1190
    %3316 = vmatprep.subr.mxu0 %v1197
    %3317 = vmatpush1.msra.mxu0 %v1196
    %3318 = vmatprep.subr.mxu0 %v1203
    %3319 = vmatpush1.msra.mxu0 %v1202
    %3320 = vmatprep.subr.mxu0 %v1209
    %3321 = vmatpush1.msra.mxu0 %v1208
    %3322 = vmatprep.subr.mxu0 %v1215
    %3323 = vmatpush1.msra.mxu0 %v1214
    %3324 = vmatprep.subr.mxu0 %v1221
    %3325 = vmatpush1.msra.mxu0 %v1220
    %3326 = vmatprep.subr.mxu0 %v1227
    %3327 = vmatpush1.msra.mxu0 %v1226
    %3328 = vmatprep.subr.mxu0 %v1233
    %3329 = vmatpush1.msra.mxu0 %v1232
    %3330 = vmatprep.subr.mxu0 %v1239
    %3331 = vmatpush1.msra.mxu0 %v1238
    %3332 = vmatprep.subr.mxu0 %v1245
    %3333 = vmatpush1.msra.mxu0 %v1244
    %3334 = vmatprep.subr.mxu0 %v1251
    %3335 = vmatpush1.msra.mxu0 %v1250
    %3336 = vmatprep.subr.mxu0 %v1257
    %3337 = vmatpush1.msra.mxu0 %v1256
    %3338 = vmatprep.subr.mxu0 %v1263
    %3339 = vmatpush1.msra.mxu0 %v1262
    %3340 = vmatprep.subr.mxu0 %v1269
    %3341 = vmatpush1.msra.mxu0 %v1268
    %3342 = vmatprep.mubr.f32.mxu0 %v3128
    %3343 = vmatmul.mubr.f32.gmra.mrb[0].mxu0 %v3127
    %v3344 = vpop.f32.mrb[0].mxu0
    %v3345 = vadd.f32 0.0, %v3344
    %v3346 = vpop.f32.mrb[0].mxu0
    %v3347 = vadd.f32 0.0, %v3346
    %3348 = vdwg.mxu0
    %v3349 = vadd.f32 %v3130, %v3203
    %v3350 = vadd.f32 %v3131, %v3205
    %v3351 = vxor.u32 %v3349, 2147483648
    %v3352 = vxor.u32 %v3350, 2147483648
    %v3353 = vmul.f32 %v3351, 1.442695
    %v3354 = vpow.pop %v3353
    %v3355 = vmul.f32 %v3352, 1.442695
    %v3356 = vpow.pop %v3355
    %v3357 = vadd.f32 %v3354, 1.0
    %v3358 = vadd.f32 %v3356, 1.0
    %v3359 = vrcp.pop %v3357
    %v3360 = vmul.f32 1.0, %v3359
    %v3361 = vrcp.pop %v3358
    %v3362 = vmul.f32 1.0, %v3361
    %v3363 = vadd.f32 %v3132, %v3274
    %v3364 = vadd.f32 %v3133, %v3276
    %v3365 = vxor.u32 %v3363, 2147483648
    %v3366 = vxor.u32 %v3364, 2147483648
    %v3367 = vmul.f32 %v3365, 1.442695
    %v3368 = vpow.pop %v3367
    %v3369 = vmul.f32 %v3366, 1.442695
    %v3370 = vpow.pop %v3369
    %v3371 = vadd.f32 %v3368, 1.0
    %v3372 = vadd.f32 %v3370, 1.0
    %v3373 = vrcp.pop %v3371
    %v3374 = vmul.f32 1.0, %v3373
    %v3375 = vrcp.pop %v3372
    %v3376 = vmul.f32 1.0, %v3375
    %v3377 = vadd.f32 %v3345, %v1522
    %v3378 = vadd.f32 %v3347, %v1526
    %v3379 = vmul.f32 %v3360, %v3377
    %v3380 = vmul.f32 %v3362, %v3378
    %v3381 = vadd.f32 %v3134, %v3379
    %v3382 = vadd.f32 %v3135, %v3380
    %v3383 = vtanh.pop %v3381
    %v3384 = vtanh.pop %v3382
    %v3385 = vsub.f32 1.0, %v3374
    %v3386 = vsub.f32 1.0, %v3376
    %v3387 = vmul.f32 %v3385, %v3383
    %v3388 = vmul.f32 %v3386, %v3384
    %v3389 = vmul.f32 %v3374, %v3127
    %v3390 = vmul.f32 %v3376, %v3128
    %v3391 = vadd.f32 %v3387, %v3389
    %v3392 = vadd.f32 %v3388, %v3390
    %v3393 = vld [vmem:[%s8] sm:$0xff]
    %v3394 = vld [vmem:[%s8 + $0x8] sm:$0xff]
    %v3395 = vld [vmem:[%s8 + $0x10] sm:$0xff]
    %v3396 = vld [vmem:[%s8 + $0x18] sm:$0xff]
    %v3397 = vld [vmem:[%s8 + $0x20] sm:$0xff]
    %v3398 = vld [vmem:[%s8 + $0x28] sm:$0xff]
    %v3399 = vld [vmem:[%s8 + $0x30] sm:$0xff]
    %v3400 = vld [vmem:[%s8 + $0x38] sm:$0xff]
    %v3401 = vld [vmem:[%s8 + $0x40] sm:$0xff]
    %v3402 = vld [vmem:[%s8 + $0x48] sm:$0xff]
    %v3403 = vld [vmem:[%s8 + $0x50] sm:$0xff]
    %v3404 = vld [vmem:[%s8 + $0x58] sm:$0xff]
    %v3405 = vld [vmem:[%s8 + $0x60] sm:$0xff]
    %v3406 = vld [vmem:[%s8 + $0x68] sm:$0xff]
    %v3407 = vld [vmem:[%s8 + $0x70] sm:$0xff]
    %v3408 = vld [vmem:[%s8 + $0x78] sm:$0xff]
    %v3409 = vld [vmem:[%s8 + $0x80] sm:$0xff]
    %v3410 = vld [vmem:[%s8 + $0x88] sm:$0xff]
    %v3411 = vld [vmem:[%s8 + $0x90] sm:$0xff]
    %v3412 = vld [vmem:[%s8 + $0x98] sm:$0xff]
    %v3413 = vld [vmem:[%s8 + $0xa0] sm:$0xff]
    %v3414 = vld [vmem:[%s8 + $0xa8] sm:$0xff]
    %v3415 = vld [vmem:[%s8 + $0xb0] sm:$0xff]
    %v3416 = vld [vmem:[%s8 + $0xb8] sm:$0xff]
    %v3417 = vld [vmem:[%s8 + $0xc0] sm:$0xff]
    %v3418 = vld [vmem:[%s8 + $0xc8] sm:$0xff]
    %v3419 = vld [vmem:[%s8 + $0xd0] sm:$0xff]
    %v3420 = vld [vmem:[%s8 + $0xd8] sm:$0xff]
    %v3421 = vld [vmem:[%s8 + $0xe0] sm:$0xff]
    %v3422 = vld [vmem:[%s8 + $0xe8] sm:$0xff]
    %v3423 = vld [vmem:[%s8 + $0xf0] sm:$0xff]
    %v3424 = vld [vmem:[%s8 + $0xf8] sm:$0xff]
    %v3425 = vld [vmem:[%s9] sm:$0x1]
    %v3427 = vlaneseq
    %v3428 = vshrl.u32 %v3427, 7
    %v3429 = vsub.s32 0, %v3428
    %v3430 = vrot.slane %v3425, %v3429
    %3432 = vmatprep.subr.mxu0 0.0
    %3433 = vmatpush1.msra.mxu0 %v3393
    %3434 = vmatprep.subr.mxu0 0.0
    %3435 = vmatpush1.msra.mxu0 %v3394
    %3436 = vmatprep.subr.mxu0 0.0
    %3437 = vmatpush1.msra.mxu0 %v3395
    %3438 = vmatprep.subr.mxu0 0.0
    %3439 = vmatpush1.msra.mxu0 %v3396
    %3440 = vmatprep.subr.mxu0 0.0
    %3441 = vmatpush1.msra.mxu0 %v3397
    %3442 = vmatprep.subr.mxu0 0.0
    %3443 = vmatpush1.msra.mxu0 %v3398
    %3444 = vmatprep.subr.mxu0 0.0
    %3445 = vmatpush1.msra.mxu0 %v3399
    %3446 = vmatprep.subr.mxu0 0.0
    %3447 = vmatpush1.msra.mxu0 %v3400
    %3448 = vmatprep.subr.mxu0 0.0
    %3449 = vmatpush1.msra.mxu0 %v3401
    %3450 = vmatprep.subr.mxu0 0.0
    %3451 = vmatpush1.msra.mxu0 %v3402
    %3452 = vmatprep.subr.mxu0 0.0
    %3453 = vmatpush1.msra.mxu0 %v3403
    %3454 = vmatprep.subr.mxu0 0.0
    %3455 = vmatpush1.msra.mxu0 %v3404
    %3456 = vmatprep.subr.mxu0 0.0
    %3457 = vmatpush1.msra.mxu0 %v3405
    %3458 = vmatprep.subr.mxu0 0.0
    %3459 = vmatpush1.msra.mxu0 %v3406
    %3460 = vmatprep.subr.mxu0 0.0
    %3461 = vmatpush1.msra.mxu0 %v3407
    %3462 = vmatprep.subr.mxu0 0.0
    %3463 = vmatpush1.msra.mxu0 %v3408
    %3464 = vmatprep.subr.mxu0 0.0
    %3465 = vmatpush1.msra.mxu0 %v3409
    %3466 = vmatprep.subr.mxu0 0.0
    %3467 = vmatpush1.msra.mxu0 %v3410
    %3468 = vmatprep.subr.mxu0 0.0
    %3469 = vmatpush1.msra.mxu0 %v3411
    %3470 = vmatprep.subr.mxu0 0.0
    %3471 = vmatpush1.msra.mxu0 %v3412
    %3472 = vmatprep.subr.mxu0 0.0
    %3473 = vmatpush1.msra.mxu0 %v3413
    %3474 = vmatprep.subr.mxu0 0.0
    %3475 = vmatpush1.msra.mxu0 %v3414
    %3476 = vmatprep.subr.mxu0 0.0
    %3477 = vmatpush1.msra.mxu0 %v3415
    %3478 = vmatprep.subr.mxu0 0.0
    %3479 = vmatpush1.msra.mxu0 %v3416
    %3480 = vmatprep.subr.mxu0 0.0
    %3481 = vmatpush1.msra.mxu0 %v3417
    %3482 = vmatprep.subr.mxu0 0.0
    %3483 = vmatpush1.msra.mxu0 %v3418
    %3484 = vmatprep.subr.mxu0 0.0
    %3485 = vmatpush1.msra.mxu0 %v3419
    %3486 = vmatprep.subr.mxu0 0.0
    %3487 = vmatpush1.msra.mxu0 %v3420
    %3488 = vmatprep.subr.mxu0 0.0
    %3489 = vmatpush1.msra.mxu0 %v3421
    %3490 = vmatprep.subr.mxu0 0.0
    %3491 = vmatpush1.msra.mxu0 %v3422
    %3492 = vmatprep.subr.mxu0 0.0
    %3493 = vmatpush1.msra.mxu0 %v3423
    %3494 = vmatprep.subr.mxu0 0.0
    %3495 = vmatpush1.msra.mxu0 %v3424
    %3496 = vmatprep.mubr.f32.mxu0 %v3392
    %3497 = vmatmul.mubr.f32.gmra.mrb[0].mxu0 %v3391
    %v3498 = vpop.f32.mrb[0].mxu0
    %v3499 = vadd.f32 %v3430, %v3498
    %v3500 = vpop.f32.mrb[0].mxu0
    %3501 = vdwg.mxu0
    %vm3502 = vcmask 31744
    %3503 = vst.msk [vmem:[%s10] sm:$0xff] %vm3502, %v3499
    // Predicated region
    $region46: #{encoder_mdre_forward.1} parent=1 // pred_check
      _
    $region47: #{encoder_mdre_forward.1} parent=1 // pred_check_branch
      %3505 = sbr.rel (0) target = $region49
    $region48: #{encoder_mdre_forward.1} parent=1 // pred_region
      _
    $region49: #{encoder_mdre_forward.1} parent=1 // pred_fallthru
      _
    // Predicated region
    $region50: #{encoder_mdre_forward.1} parent=1 // pred_check
      _
    $region51: #{encoder_mdre_forward.1} parent=1 // pred_check_branch
      %3507 = sbr.rel (0) target = $region53
    $region52: #{encoder_mdre_forward.1} parent=1 // pred_region
      _
    $region53: #{encoder_mdre_forward.1} parent=1 // pred_fallthru
      _
    %3508 = vsyncpa [#allocation4], 1

</llo_original>
